<compile_context>
chip_gen: v6e
topology: v6e:2x2x1
jax: 0.10.0
libtpu: 0.0.40
codegen_flags: <defaults>
</compile_context>

<pallas_src>
import jax
import jax.numpy as jnp
from jax.experimental import pallas as pl
from jax.experimental.pallas import tpu as pltpu


def _round_up(n, m):
    return int(pl.cdiv(n, m)) * m


def _fa_kernel(x_ref, z_ref, wt_ref, zw_ref, ll_ref):
    """One batch tile of the FA forward pass.

    x_ref  : (TM, D)  int8   observed binary pixels {0, 1}
    z_ref  : (TM, Kp) f32    latent factors (cols >= K multiply zero rows of Wt)
    wt_ref : (Kp, D)  f32    factor loadings, transposed; rows >= K are zero (resident)
    zw_ref : (TM, D)  bf16   sigmoid(Z @ W^T)
    ll_ref : (TM, 1)  f32    per-row Bernoulli log-likelihood
    """
    z = z_ref[...]
    wt = wt_ref[...]

    # logits = Z @ W^T ; W is already laid out as (Kp, D): lane-dense MXU
    # matmul with no in-kernel transpose. Zero-padded Wt rows contribute 0.
    logits = jnp.dot(z, wt, preferred_element_type=jnp.float32)     # (TM, D) f32

    # EUP-lean, numerically stable softplus + sigmoid from one shared exp:
    #   e           = exp(-|t|)
    #   softplus(t) = max(t, 0) + log1p(e)
    #   sigmoid(t)  = 1/(1+e)   if t >= 0
    #               = e/(1+e)   if t <  0
    e = jnp.exp(-jnp.abs(logits))
    sp = jnp.maximum(logits, 0.0) + jnp.log1p(e)                    # softplus(t)
    r = pl.reciprocal(1.0 + e, approx=True)
    zw_ref[...] = jnp.where(logits >= 0.0, r, e * r).astype(zw_ref.dtype)

    # Bernoulli(obs=x) log-prob, stable form: x*t - softplus(t).
    xf = x_ref[...].astype(jnp.float32)                             # {0,1} exact
    logp = xf * logits - sp
    ll_ref[...] = jnp.sum(logp, axis=-1, keepdims=True)             # (TM, 1)


def fa_forward(x, nfactors=50, key=None, block_rows=1024):
    """JAX/Pallas equivalent of FA.forward.

    Returns (Z, W) exactly like the PyTorch module, plus the kernel-computed
    (ZW [bf16], per-sample Bernoulli log-likelihood) as auxiliary outputs.
    """
    if key is None:
        key = jax.random.PRNGKey(0)

    x = x.reshape(-1, 784)
    B, D = x.shape
    K = nfactors

    # Observed pixels travel as int8: binary {0,1} values are exact, and x is
    # the largest input of a bandwidth-bound kernel.
    # TODO(synk): this fast path assumes binarized pixels (standard Bernoulli
    # obs); non-binary grayscale x would be truncated by the int8 cast.
    x_i8 = x.astype(jnp.int8)

    # Deterministic stand-ins for pyro.sample('W'/'Z', Normal(0, 1)).
    # TODO(synk): pyro.sample also registers these draws in the Pyro trace;
    # here they are plain PRNG draws and the observed-Bernoulli log-density is
    # returned explicitly instead of being recorded in a trace.
    kw, kz = jax.random.split(key)
    W = jax.random.normal(kw, (D, K), dtype=jnp.float32)     # module layout (784, K)

    # Contraction dim padded to 64 (head-dim-64 style MXU contraction), not 128.
    # Z is drawn directly at (B, Kp): the extra Kp-K columns multiply the zero
    # rows of Wt and contribute exactly 0, so no wrapper-side padding copy of Z.
    Kp = _round_up(K, 64)
    z_full = jax.random.normal(kz, (B, Kp), dtype=jnp.float32)
    Z = z_full[:, :K]
    Wt = jnp.zeros((Kp, D), jnp.float32).at[:K, :].set(W.T)  # lane-dense RHS, resident

    # Batch tiling: multiples of 128 (covers the int8 (32,128) tile), ragged
    # last block masked by Pallas (no wrapper-side padding of x / Z), and at
    # least two grid steps so the "parallel" axis can split across the two
    # TensorCores of a v7x chip.
    TM = min(_round_up(block_rows, 128), _round_up(B, 128))
    if B > 128 and pl.cdiv(B, TM) < 2:
        TM = _round_up(pl.cdiv(B, 2), 128)
    grid = (pl.cdiv(B, TM),)

    cost = pl.CostEstimate(
        flops=2 * B * D * Kp,
        transcendentals=3 * B * D,  # exp + log1p + approx reciprocal
        bytes_accessed=(B * D * 1      # x int8
                        + B * Kp * 4   # Z
                        + Kp * D * 4   # W^T
                        + B * D * 2    # ZW bf16
                        + B * 4),      # loglik
    )

    zw, loglik = pl.pallas_call(
        _fa_kernel,
        out_shape=(
            jax.ShapeDtypeStruct((B, D), jnp.bfloat16),
            jax.ShapeDtypeStruct((B, 1), jnp.float32),
        ),
        grid_spec=pltpu.PrefetchScalarGridSpec(
            num_scalar_prefetch=0,
            grid=grid,
            in_specs=[
                pl.BlockSpec((TM, D), lambda i: (i, 0)),    # x tile (int8)
                pl.BlockSpec((TM, Kp), lambda i: (i, 0)),   # Z tile
                pl.BlockSpec((Kp, D), lambda i: (0, 0)),    # W^T, resident
            ],
            out_specs=[
                pl.BlockSpec((TM, D), lambda i: (i, 0)),    # ZW tile (bf16)
                pl.BlockSpec((TM, 1), lambda i: (i, 0)),    # per-row log-lik
            ],
        ),
        compiler_params=pltpu.CompilerParams(
            dimension_semantics=("parallel",),
            vmem_limit_bytes=48 * 1024 * 1024,
        ),
        cost_estimate=cost,
    )(x_i8, z_full, Wt)

    # The module returns (Z, W); the observed-Bernoulli term only contributes
    # to the trace log-density, returned here explicitly as `loglik`.
    return (Z, W), (zw, loglik)


if __name__ == "__main__":
    key = jax.random.PRNGKey(0)
    B, NF = 256, 50  # pixel dim is fixed at 784 by the module

    # synthetic binarized "MNIST" pixels in {0, 1}
    kx, kmodel = jax.random.split(key)
    x = (jax.random.uniform(kx, (B, 784)) > 0.5).astype(jnp.float32)

    # block_rows=128 so the small demo batch still exercises a multi-step grid
    (Z, W), (zw, loglik) = fa_forward(x, nfactors=NF, key=kmodel, block_rows=128)
    jax.block_until_ready((Z, W, zw, loglik))

    # plain-JAX reference — stable Bernoulli log-prob form (x*t - softplus(t))
    logits_ref = Z @ W.T
    zw_ref = jax.nn.sigmoid(logits_ref)
    ll_ref = jnp.sum(
        x * logits_ref - jax.nn.softplus(logits_ref), axis=-1, keepdims=True
    )

    assert Z.shape == (B, NF) and W.shape == (784, NF)
    assert zw.shape == (B, 784) and zw.dtype == jnp.bfloat16
    assert loglik.shape == (B, 1)
    zw_f32 = zw.astype(jnp.float32)
    assert bool(jnp.all(jnp.isfinite(zw_f32))) and bool(jnp.all(jnp.isfinite(loglik)))
    # zw is stored in bf16 and uses the approximate EUP reciprocal -> looser tol
    assert jnp.allclose(zw_f32, zw_ref, atol=5e-3, rtol=5e-3)
    # loglik is computed fully in f32 with exact exp/log1p -> tight tol
    assert jnp.allclose(loglik, ll_ref, atol=1e-2, rtol=1e-4)

    print("KERNEL_OK")
</pallas_src>

<mosaic_0001>
module attributes {stable_mosaic.version = 11 : i64} {
  func.func @_fa_kernel(%arg0: i32, %arg1: memref<128x784xi8, #tpu.memory_space<vmem>>, %arg2: memref<128x64xf32, #tpu.memory_space<vmem>>, %arg3: memref<64x784xf32, #tpu.memory_space<vmem>>, %arg4: memref<128x784xbf16, #tpu.memory_space<vmem>>, %arg5: memref<128x1xf32, #tpu.memory_space<vmem>>) attributes {dimension_semantics = [#tpu.dimension_semantics<parallel>], iteration_bounds = array<i64: 2>, scalar_prefetch = 0 : i64, scratch_operands = 0 : i64, tpu.core_type = #tpu.core_type<tc>, window_params = [{transform_indices = @transform_0, window_bounds = array<i64: 128, 784>}, {transform_indices = @transform_1, window_bounds = array<i64: 128, 64>}, {pipeline_mode = #tpu.pipeline_mode<synchronous>, transform_indices = @transform_2, window_bounds = array<i64: 64, 784>}, {transform_indices = @transform_3, window_bounds = array<i64: 128, 784>}, {transform_indices = @transform_4, window_bounds = array<i64: 128, 1>}]} {
    %c0 = arith.constant 0 : index
    %c0_0 = arith.constant 0 : index
    %0 = vector.load %arg2[%c0, %c0_0] : memref<128x64xf32, #tpu.memory_space<vmem>>, vector<128x64xf32>
    %c0_1 = arith.constant 0 : index
    %c0_2 = arith.constant 0 : index
    %1 = vector.load %arg3[%c0_1, %c0_2] : memref<64x784xf32, #tpu.memory_space<vmem>>, vector<64x784xf32>
    %cst = arith.constant dense<0.000000e+00> : vector<128x784xf32>
    %2 = tpu.matmul %0, %1, %cst {dimension_numbers = #tpu.dot_dimension_numbers<[1], [0], [0], [1], [0, 0, 1, 1], [], []>} : vector<128x64xf32>, vector<64x784xf32>, vector<128x784xf32> -> vector<128x784xf32>
    %3 = math.absf %2 : vector<128x784xf32>
    %cst_3 = arith.constant 0.000000e+00 : f32
    %4 = vector.broadcast %cst_3 : f32 to vector<128x784xf32>
    %5 = arith.subf %4, %3 : vector<128x784xf32>
    %6 = math.exp %5 : vector<128x784xf32>
    %cst_4 = arith.constant 0.000000e+00 : f32
    %7 = vector.broadcast %cst_4 : f32 to vector<128x784xf32>
    %8 = arith.maximumf %2, %7 : vector<128x784xf32>
    %9 = math.log1p %6 : vector<128x784xf32>
    %10 = arith.addf %8, %9 : vector<128x784xf32>
    %cst_5 = arith.constant 1.000000e+00 : f32
    %11 = vector.broadcast %cst_5 : f32 to vector<128x784xf32>
    %12 = arith.addf %11, %6 : vector<128x784xf32>
    %13 = tpu.reciprocal %12 {approx = true} : vector<128x784xf32> -> vector<128x784xf32>
    %cst_6 = arith.constant 0.000000e+00 : f32
    %14 = vector.broadcast %cst_6 : f32 to vector<128x784xf32>
    %15 = arith.cmpf oge, %2, %14 : vector<128x784xf32>
    %16 = arith.mulf %6, %13 : vector<128x784xf32>
    %17 = arith.select %15, %13, %16 : vector<128x784xi1>, vector<128x784xf32>
    %18 = arith.truncf %17 : vector<128x784xf32> to vector<128x784xbf16>
    %c0_7 = arith.constant 0 : index
    %c0_8 = arith.constant 0 : index
    %19 = vector.load %arg4[%c0_7, %c0_8] : memref<128x784xbf16, #tpu.memory_space<vmem>>, vector<128x784xbf16>
    tpu.vector_store %arg4[%c0_7, %c0_8], %18 {strides = array<i32>} : memref<128x784xbf16, #tpu.memory_space<vmem>>, vector<128x784xbf16>,
    %c0_9 = arith.constant 0 : index
    %c0_10 = arith.constant 0 : index
    %20 = vector.load %arg1[%c0_9, %c0_10] : memref<128x784xi8, #tpu.memory_space<vmem>>, vector<128x784xi8>
    %21 = arith.sitofp %20 : vector<128x784xi8> to vector<128x784xf32>
    %22 = arith.mulf %21, %2 : vector<128x784xf32>
    %23 = arith.subf %22, %10 : vector<128x784xf32>
    %cst_11 = arith.constant dense<0.000000e+00> : vector<128xf32>
    %24 = vector.multi_reduction <add>, %23, %cst_11 [1] : vector<128x784xf32> to vector<128xf32>
    %25 = vector.shape_cast %24 : vector<128xf32> to vector<128x1xf32>
    %c0_12 = arith.constant 0 : index
    %c0_13 = arith.constant 0 : index
    %26 = vector.load %arg5[%c0_12, %c0_13] : memref<128x1xf32, #tpu.memory_space<vmem>>, vector<128x1xf32>
    tpu.vector_store %arg5[%c0_12, %c0_13], %25 {strides = array<i32>} : memref<128x1xf32, #tpu.memory_space<vmem>>, vector<128x1xf32>,
    return
  }
  func.func @transform_0(%arg0: i32) -> (i32, i32) {
    %c0_i32 = arith.constant 0 : i32
    %c0_i32_0 = arith.constant 0 : i32
    return %arg0, %c0_i32 : i32, i32
  }
  func.func @transform_1(%arg0: i32) -> (i32, i32) {
    %c0_i32 = arith.constant 0 : i32
    %c0_i32_0 = arith.constant 0 : i32
    return %arg0, %c0_i32 : i32, i32
  }
  func.func @transform_2(%arg0: i32) -> (i32, i32) {
    %c0_i32 = arith.constant 0 : i32
    %c0_i32_0 = arith.constant 0 : i32
    %c0_i32_1 = arith.constant 0 : i32
    return %c0_i32, %c0_i32_0 : i32, i32
  }
  func.func @transform_3(%arg0: i32) -> (i32, i32) {
    %c0_i32 = arith.constant 0 : i32
    %c0_i32_0 = arith.constant 0 : i32
    return %arg0, %c0_i32 : i32, i32
  }
  func.func @transform_4(%arg0: i32) -> (i32, i32) {
    %c0_i32 = arith.constant 0 : i32
    %c0_i32_0 = arith.constant 0 : i32
    return %arg0, %c0_i32 : i32, i32
  }
}

</mosaic_0001>

<llo_original>
// kernel: tpu_custom_call.1
$region0: #{tpu_custom_call.1}
  #allocation0 [shape = 'u32[]', space=smem, size = 0x4, offset = 0x4, fixed_abs, tag = 'smem constant byte address 0x4 - core index']
  #allocation1 [shape = 'u32[144,128]{1,0:T(1,128)}', space=vmem, size = 0x12000, scoped, tag = 'internal scratch']
  %s0 = inlined_call_operand.vmem [shape: s8[256,784], index: 0, kind: input, shape index: {}]
  %s1 = inlined_call_operand.vmem [shape: f32[256,64], index: 1, kind: input, shape index: {}]
  %s2 = inlined_call_operand.vmem [shape: f32[64,784], index: 2, kind: input, shape index: {}]
  %s3 = inlined_call_operand.vmem [shape: bf16[256,784], index: 3, kind: output, shape index: {0}]
  %s4 = inlined_call_operand.vmem [shape: f32[256,1], index: 4, kind: output, shape index: {1}]
  %5 = xla_tuple %s3, %s4
  %s6 = sld [smem:[#allocation0]]
  $region53: #{tpu_custom_call.1} parent=0
    _
  %s8 = ssub.s32 1, %s6
  %s9 = scalar_select 0, %s8, %s6
  loop: start=0, step=1, limit=4
  $region2: #{tpu_custom_call.1} parent=0 // loop_pre_header
    _
  $region3: #{tpu_custom_call.1} parent=0 // loop_header
    %s11 = sphi 0, %s15
    %p12 = scmp.ge.s32.totalorder %s11, 4
    %s21 = sphi 0, %s23
    %s24 = sphi 0, %s21
    %s25 = sphi 0, %s24
    %s41 = sphi 0, %s25
    %s47 = sphi 0, %s49
    %s50 = sphi 0, %s47
    %s51 = sphi 0, %s50
    %s67 = sphi 0, %s51
    %s71 = sphi 0, %s71
    %s73 = sphi 0, %s71
    %s74 = sphi 0, %s73
    %s88 = sphi 0, %s74
    %s94 = sphi 0, %s96
    %s97 = sphi 0, %s94
    %s98 = sphi 0, %s97
    %s114 = sphi 0, %s98
    %s120 = sphi 0, %s122
    %s123 = sphi 0, %s120
    %s124 = sphi 0, %s123
    %s140 = sphi 0, %s124
  $region4: #{tpu_custom_call.1} parent=0 // loop_header_branch
    %14 = sbr.rel (%p12) target = $region8
  $region5: #{tpu_custom_call.1} parent=0 // loop_body
    %s16 = ssub.s32 %s11, 1
    %s17 = ssub.s32 %s11, 2
    %s18 = sadd.s32 %s11, 1
    %s19 = ssub.s32 %s11, %s18
    %p20 = scmp.eq.s32.totalorder %s19, 0
    %s22 = sadd.s32 %s21, 1
    %s23 = scalar_select %p20, %s21, %s22
    %p26 = pneg %p20
    %p27 = scmp.eq.s32.totalorder %s11, 1
    %p28 = por %p26, %p27
    %p29 = scmp.ne.s32.totalorder %s21, %s24
    %p30 = scmp.eq.s32.totalorder %s11, 0
    %p31 = por %p29, %p30
    %p32 = scmp.ne.s32.totalorder %s21, %s24
    %p33 = scmp.eq.s32.totalorder %s16, 1
    %p34 = por %p32, %p33
    %p35 = scmp.ne.s32.totalorder %s24, %s25
    %p36 = scmp.eq.s32.totalorder %s16, 0
    %p37 = por %p35, %p36
    %p38 = scmp.ne.s32.totalorder %s24, %s25
    %p39 = scmp.eq.s32.totalorder %s17, 1
    %p40 = por %p38, %p39
    %p42 = scmp.ne.s32.totalorder %s25, %s41
    %p43 = scmp.eq.s32.totalorder %s17, 0
    %p44 = por %p42, %p43
    %s45 = ssub.s32 %s11, %s18
    %p46 = scmp.eq.s32.totalorder %s45, 0
    %s48 = sadd.s32 %s47, 1
    %s49 = scalar_select %p46, %s47, %s48
    %p52 = pneg %p46
    %p53 = scmp.eq.s32.totalorder %s11, 1
    %p54 = por %p52, %p53
    %p55 = scmp.ne.s32.totalorder %s47, %s50
    %p56 = scmp.eq.s32.totalorder %s11, 0
    %p57 = por %p55, %p56
    %p58 = scmp.ne.s32.totalorder %s47, %s50
    %p59 = scmp.eq.s32.totalorder %s16, 1
    %p60 = por %p58, %p59
    %p61 = scmp.ne.s32.totalorder %s50, %s51
    %p62 = scmp.eq.s32.totalorder %s16, 0
    %p63 = por %p61, %p62
    %p64 = scmp.ne.s32.totalorder %s50, %s51
    %p65 = scmp.eq.s32.totalorder %s17, 1
    %p66 = por %p64, %p65
    %p68 = scmp.ne.s32.totalorder %s51, %s67
    %p69 = scmp.eq.s32.totalorder %s17, 0
    %p70 = por %p68, %p69
    %s72 = sadd.s32 %s71, 1
    %p75 = scmp.eq.s32.totalorder %s11, 1
    %p76 = scmp.ne.s32.totalorder %s71, %s73
    %p77 = scmp.eq.s32.totalorder %s11, 0
    %p78 = por %p76, %p77
    %p79 = scmp.ne.s32.totalorder %s71, %s73
    %p80 = scmp.eq.s32.totalorder %s16, 1
    %p81 = por %p79, %p80
    %p82 = scmp.ne.s32.totalorder %s73, %s74
    %p83 = scmp.eq.s32.totalorder %s16, 0
    %p84 = por %p82, %p83
    %p85 = scmp.ne.s32.totalorder %s73, %s74
    %p86 = scmp.eq.s32.totalorder %s17, 1
    %p87 = por %p85, %p86
    %p89 = scmp.ne.s32.totalorder %s74, %s88
    %p90 = scmp.eq.s32.totalorder %s17, 0
    %p91 = por %p89, %p90
    %s92 = ssub.s32 %s11, %s18
    %p93 = scmp.eq.s32.totalorder %s92, 0
    %s95 = sadd.s32 %s94, 1
    %s96 = scalar_select %p93, %s94, %s95
    %p99 = pneg %p93
    %p100 = scmp.eq.s32.totalorder %s11, 1
    %p101 = por %p99, %p100
    %p102 = scmp.ne.s32.totalorder %s94, %s97
    %p103 = scmp.eq.s32.totalorder %s11, 0
    %p104 = por %p102, %p103
    %p105 = scmp.ne.s32.totalorder %s94, %s97
    %p106 = scmp.eq.s32.totalorder %s16, 1
    %p107 = por %p105, %p106
    %p108 = scmp.ne.s32.totalorder %s97, %s98
    %p109 = scmp.eq.s32.totalorder %s16, 0
    %p110 = por %p108, %p109
    %p111 = scmp.ne.s32.totalorder %s97, %s98
    %p112 = scmp.eq.s32.totalorder %s17, 1
    %p113 = por %p111, %p112
    %p115 = scmp.ne.s32.totalorder %s98, %s114
    %p116 = scmp.eq.s32.totalorder %s17, 0
    %p117 = por %p115, %p116
    %s118 = ssub.s32 %s11, %s18
    %p119 = scmp.eq.s32.totalorder %s118, 0
    %s121 = sadd.s32 %s120, 1
    %s122 = scalar_select %p119, %s120, %s121
    %p125 = pneg %p119
    %p126 = scmp.eq.s32.totalorder %s11, 1
    %p127 = por %p125, %p126
    %p128 = scmp.ne.s32.totalorder %s120, %s123
    %p129 = scmp.eq.s32.totalorder %s11, 0
    %p130 = por %p128, %p129
    %p131 = scmp.ne.s32.totalorder %s120, %s123
    %p132 = scmp.eq.s32.totalorder %s16, 1
    %p133 = por %p131, %p132
    %p134 = scmp.ne.s32.totalorder %s123, %s124
    %p135 = scmp.eq.s32.totalorder %s16, 0
    %p136 = por %p134, %p135
    %p137 = scmp.ne.s32.totalorder %s123, %s124
    %p138 = scmp.eq.s32.totalorder %s17, 1
    %p139 = por %p137, %p138
    %p141 = scmp.ne.s32.totalorder %s124, %s140
    %p142 = scmp.eq.s32.totalorder %s17, 0
    %p143 = por %p141, %p142
    %p144 = scmp.le.s32.totalorder 1, %s11
    %p145 = scmp.lt.s32.totalorder %s11, 3
    %p146 = pnand %p144, %p145
    %p147 = pneg %p146
    // Predicated region
    $region9: #{tpu_custom_call.1} parent=5 // pred_check
      _
    $region10: #{tpu_custom_call.1} parent=5 // pred_check_branch
      %149 = sbr.rel (%p146) target = $region12
    $region11: #{tpu_custom_call.1} parent=5 // pred_region
      %s150 = ssub.s32 %s11, 1
      // Predicated region
      $region13: #{tpu_custom_call.1} parent=11 // pred_check
        %p151 = pneg %p84
      $region14: #{tpu_custom_call.1} parent=11 // pred_check_branch
        %153 = sbr.rel (%p151) target = $region16
      $region15: #{tpu_custom_call.1} parent=11 // pred_region
        _
      $region16: #{tpu_custom_call.1} parent=11 // pred_fallthru
        _
    $region12: #{tpu_custom_call.1} parent=5 // pred_fallthru
      _
    %p154 = scmp.lt.s32.totalorder %s11, 2
    // Predicated region
    $region17: #{tpu_custom_call.1} parent=5 // pred_check
      %p155 = pneg %p154
    $region18: #{tpu_custom_call.1} parent=5 // pred_check_branch
      %157 = sbr.rel (%p155) target = $region20
    $region19: #{tpu_custom_call.1} parent=5 // pred_region
      // Predicated region
      $region21: #{tpu_custom_call.1} parent=19 // pred_check
        %p158 = pneg %p31
      $region22: #{tpu_custom_call.1} parent=19 // pred_check_branch
        %160 = sbr.rel (%p158) target = $region24
      $region23: #{tpu_custom_call.1} parent=19 // pred_region
        %s161 = smul.u32 4, %s11
        %p162 = scmp.lt.s32.totalorder %s161, 7
        %s163 = scalar_select %p162, %s161, 7
        %s164 = smul.addr %s163, 7
        %s165 = smul.addr %s164, 8
        %s166 = scalar_lea.vmem %s0, %s165
        %s167 = smul.u32 4, %s11
      $region24: #{tpu_custom_call.1} parent=19 // pred_fallthru
        _
      // Predicated region
      $region25: #{tpu_custom_call.1} parent=19 // pred_check
        %p168 = pneg %p57
      $region26: #{tpu_custom_call.1} parent=19 // pred_check_branch
        %170 = sbr.rel (%p168) target = $region28
      $region27: #{tpu_custom_call.1} parent=19 // pred_region
        %s171 = smul.u32 16, %s11
        %p172 = scmp.lt.s32.totalorder %s171, 31
        %s173 = scalar_select %p172, %s171, 31
        %s174 = smul.addr %s173, 8
        %s175 = scalar_lea.vmem %s1, %s174
        %s176 = smul.u32 16, %s11
      $region28: #{tpu_custom_call.1} parent=19 // pred_fallthru
        _
    $region20: #{tpu_custom_call.1} parent=5 // pred_fallthru
      _
    %p177 = scmp.le.s32.totalorder 1, %s11
    %p178 = scmp.lt.s32.totalorder %s11, 3
    %p179 = pnand %p177, %p178
    %p180 = pneg %p179
    // Predicated region
    $region29: #{tpu_custom_call.1} parent=5 // pred_check
      _
    $region30: #{tpu_custom_call.1} parent=5 // pred_check_branch
      %182 = sbr.rel (%p179) target = $region32
    $region31: #{tpu_custom_call.1} parent=5 // pred_region
      %s183 = ssub.s32 %s11, 1
      %s184 = smul.u32 4, %s16
      %p185 = scmp.lt.s32.totalorder %s184, 7
      %s186 = scalar_select %p185, %s184, 7
      %s187 = smul.addr %s186, 7
      %s188 = smul.addr %s187, 8
      %s189 = scalar_lea.vmem %s0, %s188
      %p190 = pneg %p37
      %p191 = pneg %p34
      %s192 = smul.u32 16, %s16
      %p193 = scmp.lt.s32.totalorder %s192, 31
      %s194 = scalar_select %p193, %s192, 31
      %s195 = smul.addr %s194, 8
      %s196 = scalar_lea.vmem %s1, %s195
      %p197 = pneg %p63
      %p198 = pneg %p60
      %p199 = pneg %p84
      %p200 = pneg %p81
      %p201 = pneg %p110
      %p202 = pneg %p107
      %s203 = smul.u32 16, %s16
      %p204 = scmp.lt.s32.totalorder %s203, 31
      %s205 = scalar_select %p204, %s203, 31
      %s206 = smul.addr %s205, 7
      %s207 = smul.addr %s206, 4
      %s208 = scalar_lea.vmem %s3, %s207
      %p209 = pneg %p136
      %p210 = pneg %p133
      %s211 = smul.u32 16, %s16
      %p212 = scmp.lt.s32.totalorder %s211, 31
      %s213 = scalar_select %p212, %s211, 31
      %s214 = smul.addr %s213, 8
      %s215 = scalar_lea.vmem %s4, %s214
      %s216 = smul.u32 4, %s16
      %p217 = scmp.lt.s32.totalorder %s216, 7
      %s218 = scalar_select %p217, %s216, 7
      %s219 = smul.addr %s218, 7
      %s220 = smul.addr %s219, 8
      %s221 = scalar_lea.vmem %s0, %s220
      %s222 = smul.u32 4, %s16
      %s223 = smul.u32 16, %s16
      %p224 = scmp.lt.s32.totalorder %s223, 31
      %s225 = scalar_select %p224, %s223, 31
      %s226 = smul.addr %s225, 8
      %s227 = scalar_lea.vmem %s1, %s226
      %s228 = smul.u32 16, %s16
      %s229 = smul.u32 16, %s16
      %p230 = scmp.lt.s32.totalorder %s229, 31
      %s231 = scalar_select %p230, %s229, 31
      %s232 = smul.addr %s231, 7
      %s233 = smul.addr %s232, 4
      %s234 = scalar_lea.vmem %s3, %s233
      %s235 = smul.u32 16, %s16
      %s236 = smul.u32 16, %s16
      %p237 = scmp.lt.s32.totalorder %s236, 31
      %s238 = scalar_select %p237, %s236, 31
      %s239 = smul.addr %s238, 8
      %s240 = scalar_lea.vmem %s4, %s239
      %s241 = smul.u32 16, %s16
      %v242 = vld [vmem:[%s227] sm:$0xff]
      %v243 = vld [vmem:[%s227 + $0x8] sm:$0xff]
      %v244 = vld [vmem:[%s227 + $0x10] sm:$0xff]
      %v245 = vld [vmem:[%s227 + $0x18] sm:$0xff]
      %v246 = vld [vmem:[%s227 + $0x20] sm:$0xff]
      %v247 = vld [vmem:[%s227 + $0x28] sm:$0xff]
      %v248 = vld [vmem:[%s227 + $0x30] sm:$0xff]
      %v249 = vld [vmem:[%s227 + $0x38] sm:$0xff]
      %v250 = vld [vmem:[%s227 + $0x40] sm:$0xff]
      %v251 = vld [vmem:[%s227 + $0x48] sm:$0xff]
      %v252 = vld [vmem:[%s227 + $0x50] sm:$0xff]
      %v253 = vld [vmem:[%s227 + $0x58] sm:$0xff]
      %v254 = vld [vmem:[%s227 + $0x60] sm:$0xff]
      %v255 = vld [vmem:[%s227 + $0x68] sm:$0xff]
      %v256 = vld [vmem:[%s227 + $0x70] sm:$0xff]
      %v257 = vld [vmem:[%s227 + $0x78] sm:$0xff]
      %v258 = vld [vmem:[%s2] sm:$0xff]
      %v259 = vld [vmem:[%s2 + $0x8] sm:$0xff]
      %v260 = vld [vmem:[%s2 + $0x10] sm:$0xff]
      %v261 = vld [vmem:[%s2 + $0x18] sm:$0xff]
      %v262 = vld [vmem:[%s2 + $0x20] sm:$0xff]
      %v263 = vld [vmem:[%s2 + $0x28] sm:$0xff]
      %v264 = vld [vmem:[%s2 + $0x30] sm:$0xff]
      %v265 = vld [vmem:[%s2 + $0x38] sm:$0xff]
      %v266 = vld [vmem:[%s2 + $0x40] sm:$0xff]
      %v267 = vld [vmem:[%s2 + $0x48] sm:$0xff]
      %v268 = vld [vmem:[%s2 + $0x50] sm:$0xff]
      %v269 = vld [vmem:[%s2 + $0x58] sm:$0xff]
      %v270 = vld [vmem:[%s2 + $0x60] sm:$0xff]
      %v271 = vld [vmem:[%s2 + $0x68] sm:$0xff]
      %v272 = vld [vmem:[%s2 + $0x70] sm:$0xff]
      %v273 = vld [vmem:[%s2 + $0x78] sm:$0xff]
      %v274 = vld [vmem:[%s2 + $0x80] sm:$0xff]
      %v275 = vld [vmem:[%s2 + $0x88] sm:$0xff]
      %v276 = vld [vmem:[%s2 + $0x90] sm:$0xff]
      %v277 = vld [vmem:[%s2 + $0x98] sm:$0xff]
      %v278 = vld [vmem:[%s2 + $0xa0] sm:$0xff]
      %v279 = vld [vmem:[%s2 + $0xa8] sm:$0xff]
      %v280 = vld [vmem:[%s2 + $0xb0] sm:$0xff]
      %v281 = vld [vmem:[%s2 + $0xb8] sm:$0xff]
      %v282 = vld [vmem:[%s2 + $0xc0] sm:$0xff]
      %v283 = vld [vmem:[%s2 + $0xc8] sm:$0xff]
      %v284 = vld [vmem:[%s2 + $0xd0] sm:$0xff]
      %v285 = vld [vmem:[%s2 + $0xd8] sm:$0xff]
      %v286 = vld [vmem:[%s2 + $0xe0] sm:$0xff]
      %v287 = vld [vmem:[%s2 + $0xe8] sm:$0xff]
      %v288 = vld [vmem:[%s2 + $0xf0] sm:$0xff]
      %v289 = vld [vmem:[%s2 + $0xf8] sm:$0xff]
      %v290 = vld [vmem:[%s2 + $0x100] sm:$0xff]
      %v291 = vld [vmem:[%s2 + $0x108] sm:$0xff]
      %v292 = vld [vmem:[%s2 + $0x110] sm:$0xff]
      %v293 = vld [vmem:[%s2 + $0x118] sm:$0xff]
      %v294 = vld [vmem:[%s2 + $0x120] sm:$0xff]
      %v295 = vld [vmem:[%s2 + $0x128] sm:$0xff]
      %v296 = vld [vmem:[%s2 + $0x130] sm:$0xff]
      %v297 = vld [vmem:[%s2 + $0x138] sm:$0xff]
      %v298 = vld [vmem:[%s2 + $0x140] sm:$0xff]
      %v299 = vld [vmem:[%s2 + $0x148] sm:$0xff]
      %v300 = vld [vmem:[%s2 + $0x150] sm:$0xff]
      %v301 = vld [vmem:[%s2 + $0x158] sm:$0xff]
      %v302 = vld [vmem:[%s2 + $0x160] sm:$0xff]
      %v303 = vld [vmem:[%s2 + $0x168] sm:$0xff]
      %v304 = vld [vmem:[%s2 + $0x170] sm:$0xff]
      %v305 = vld [vmem:[%s2 + $0x178] sm:$0xff]
      %v306 = vld [vmem:[%s2 + $0x180] sm:$0xff]
      %v307 = vld [vmem:[%s2 + $0x188] sm:$0xff]
      %v308 = vld [vmem:[%s2 + $0x190] sm:$0xff]
      %v309 = vld [vmem:[%s2 + $0x198] sm:$0xff]
      %v310 = vld [vmem:[%s2 + $0x1a0] sm:$0xff]
      %v311 = vld [vmem:[%s2 + $0x1a8] sm:$0xff]
      %v312 = vld [vmem:[%s2 + $0x1b0] sm:$0xff]
      %v313 = vld [vmem:[%s2 + $0x1b8] sm:$0xff]
      %vm314 = vcmask 523264
      %v316 = vsel %vm314, %v242, 0
      %v319 = vsel %vm314, %v243, 0
      %v322 = vsel %vm314, %v244, 0
      %v325 = vsel %vm314, %v245, 0
      %v328 = vsel %vm314, %v246, 0
      %v331 = vsel %vm314, %v247, 0
      %v334 = vsel %vm314, %v248, 0
      %v337 = vsel %vm314, %v249, 0
      %v340 = vsel %vm314, %v250, 0
      %v343 = vsel %vm314, %v251, 0
      %v346 = vsel %vm314, %v252, 0
      %v349 = vsel %vm314, %v253, 0
      %v352 = vsel %vm314, %v254, 0
      %v355 = vsel %vm314, %v255, 0
      %v358 = vsel %vm314, %v256, 0
      %v361 = vsel %vm314, %v257, 0
      %363 = vmatprep.subr.mxu0 0.0
      %364 = vmatpush1.msra.mxu0 0.0
      %365 = vmatprep.subr.mxu0 0.0
      %366 = vmatpush1.msra.mxu0 0.0
      %367 = vmatprep.subr.mxu0 0.0
      %368 = vmatpush1.msra.mxu0 0.0
      %369 = vmatprep.subr.mxu0 0.0
      %370 = vmatpush1.msra.mxu0 0.0
      %371 = vmatprep.subr.mxu0 0.0
      %372 = vmatpush1.msra.mxu0 0.0
      %373 = vmatprep.subr.mxu0 0.0
      %374 = vmatpush1.msra.mxu0 0.0
      %375 = vmatprep.subr.mxu0 0.0
      %376 = vmatpush1.msra.mxu0 0.0
      %377 = vmatprep.subr.mxu0 0.0
      %378 = vmatpush1.msra.mxu0 0.0
      %379 = vmatprep.subr.mxu0 %v308
      %380 = vmatpush1.msra.mxu0 %v307
      %381 = vmatprep.subr.mxu0 %v301
      %382 = vmatpush1.msra.mxu0 %v300
      %383 = vmatprep.subr.mxu0 %v294
      %384 = vmatpush1.msra.mxu0 %v293
      %385 = vmatprep.subr.mxu0 %v287
      %386 = vmatpush1.msra.mxu0 %v286
      %387 = vmatprep.subr.mxu0 %v280
      %388 = vmatpush1.msra.mxu0 %v279
      %389 = vmatprep.subr.mxu0 %v273
      %390 = vmatpush1.msra.mxu0 %v272
      %391 = vmatprep.subr.mxu0 %v266
      %392 = vmatpush1.msra.mxu0 %v265
      %393 = vmatprep.subr.mxu0 %v259
      %394 = vmatpush1.msra.mxu0 %v258
      %395 = vmatprep.subr.mxu0 0.0
      %396 = vmatpush2.msra.mxu0 0.0
      %397 = vmatprep.subr.mxu0 0.0
      %398 = vmatpush2.msra.mxu0 0.0
      %399 = vmatprep.subr.mxu0 0.0
      %400 = vmatpush2.msra.mxu0 0.0
      %401 = vmatprep.subr.mxu0 0.0
      %402 = vmatpush2.msra.mxu0 0.0
      %403 = vmatprep.subr.mxu0 0.0
      %404 = vmatpush2.msra.mxu0 0.0
      %405 = vmatprep.subr.mxu0 0.0
      %406 = vmatpush2.msra.mxu0 0.0
      %407 = vmatprep.subr.mxu0 0.0
      %408 = vmatpush2.msra.mxu0 0.0
      %409 = vmatprep.subr.mxu0 0.0
      %410 = vmatpush2.msra.mxu0 0.0
      %411 = vmatprep.subr.mxu0 0.0
      %412 = vmatpush2.msra.mxu0 0.0
      %413 = vmatprep.subr.mxu0 0.0
      %414 = vmatpush2.msra.mxu0 0.0
      %415 = vmatprep.subr.mxu0 0.0
      %416 = vmatpush2.msra.mxu0 0.0
      %417 = vmatprep.subr.mxu0 0.0
      %418 = vmatpush2.msra.mxu0 0.0
      %419 = vmatprep.subr.mxu0 0.0
      %420 = vmatpush2.msra.mxu0 0.0
      %421 = vmatprep.subr.mxu0 0.0
      %422 = vmatpush2.msra.mxu0 0.0
      %423 = vmatprep.subr.mxu0 0.0
      %424 = vmatpush2.msra.mxu0 0.0
      %425 = vmatprep.subr.mxu0 0.0
      %426 = vmatpush2.msra.mxu0 0.0
      %427 = vmatprep.mubr.f32.mxu0 0.0
      %428 = vmatmul.mubr.f32.gmra.mxu0 %v316
      %v429 = vpop.f32.mrf.mxu0
      %v430 = vadd.f32 0.0, %v429
      %v431 = vpop.f32.mrf.mxu0
      %v432 = vadd.f32 0.0, %v431
      %433 = vmatprep.mubr.f32.mxu0 0.0
      %434 = vmatmul.mubr.f32.gmra.mxu0 %v319
      %v435 = vpop.f32.mrf.mxu0
      %v436 = vadd.f32 0.0, %v435
      %v437 = vpop.f32.mrf.mxu0
      %v438 = vadd.f32 0.0, %v437
      %439 = vmatprep.mubr.f32.mxu0 0.0
      %440 = vmatmul.mubr.f32.gmra.mxu0 %v322
      %v441 = vpop.f32.mrf.mxu0
      %v442 = vadd.f32 0.0, %v441
      %v443 = vpop.f32.mrf.mxu0
      %v444 = vadd.f32 0.0, %v443
      %445 = vmatprep.mubr.f32.mxu0 0.0
      %446 = vmatmul.mubr.f32.gmra.mxu0 %v325
      %v447 = vpop.f32.mrf.mxu0
      %v448 = vadd.f32 0.0, %v447
      %v449 = vpop.f32.mrf.mxu0
      %v450 = vadd.f32 0.0, %v449
      %451 = vmatprep.mubr.f32.mxu0 0.0
      %452 = vmatmul.mubr.f32.gmra.mxu0 %v328
      %v453 = vpop.f32.mrf.mxu0
      %v454 = vadd.f32 0.0, %v453
      %v455 = vpop.f32.mrf.mxu0
      %v456 = vadd.f32 0.0, %v455
      %457 = vmatprep.mubr.f32.mxu0 0.0
      %458 = vmatmul.mubr.f32.gmra.mxu0 %v331
      %v459 = vpop.f32.mrf.mxu0
      %v460 = vadd.f32 0.0, %v459
      %v461 = vpop.f32.mrf.mxu0
      %v462 = vadd.f32 0.0, %v461
      %463 = vmatprep.mubr.f32.mxu0 0.0
      %464 = vmatmul.mubr.f32.gmra.mxu0 %v334
      %v465 = vpop.f32.mrf.mxu0
      %v466 = vadd.f32 0.0, %v465
      %v467 = vpop.f32.mrf.mxu0
      %v468 = vadd.f32 0.0, %v467
      %469 = vmatprep.mubr.f32.mxu0 0.0
      %470 = vmatmul.mubr.f32.gmra.mxu0 %v337
      %v471 = vpop.f32.mrf.mxu0
      %v472 = vadd.f32 0.0, %v471
      %v473 = vpop.f32.mrf.mxu0
      %v474 = vadd.f32 0.0, %v473
      %475 = vmatprep.mubr.f32.mxu0 0.0
      %476 = vmatmul.mubr.f32.gmra.mxu0 %v340
      %v477 = vpop.f32.mrf.mxu0
      %v478 = vadd.f32 0.0, %v477
      %v479 = vpop.f32.mrf.mxu0
      %v480 = vadd.f32 0.0, %v479
      %481 = vmatprep.mubr.f32.mxu0 0.0
      %482 = vmatmul.mubr.f32.gmra.mxu0 %v343
      %v483 = vpop.f32.mrf.mxu0
      %v484 = vadd.f32 0.0, %v483
      %v485 = vpop.f32.mrf.mxu0
      %v486 = vadd.f32 0.0, %v485
      %487 = vmatprep.mubr.f32.mxu0 0.0
      %488 = vmatmul.mubr.f32.gmra.mxu0 %v346
      %v489 = vpop.f32.mrf.mxu0
      %v490 = vadd.f32 0.0, %v489
      %v491 = vpop.f32.mrf.mxu0
      %v492 = vadd.f32 0.0, %v491
      %493 = vmatprep.mubr.f32.mxu0 0.0
      %494 = vmatmul.mubr.f32.gmra.mxu0 %v349
      %v495 = vpop.f32.mrf.mxu0
      %v496 = vadd.f32 0.0, %v495
      %v497 = vpop.f32.mrf.mxu0
      %v498 = vadd.f32 0.0, %v497
      %499 = vmatprep.mubr.f32.mxu0 0.0
      %500 = vmatmul.mubr.f32.gmra.mxu0 %v352
      %v501 = vpop.f32.mrf.mxu0
      %v502 = vadd.f32 0.0, %v501
      %v503 = vpop.f32.mrf.mxu0
      %v504 = vadd.f32 0.0, %v503
      %505 = vmatprep.mubr.f32.mxu0 0.0
      %506 = vmatmul.mubr.f32.gmra.mxu0 %v355
      %v507 = vpop.f32.mrf.mxu0
      %v508 = vadd.f32 0.0, %v507
      %v509 = vpop.f32.mrf.mxu0
      %v510 = vadd.f32 0.0, %v509
      %511 = vmatprep.mubr.f32.mxu0 0.0
      %512 = vmatmul.mubr.f32.gmra.mxu0 %v358
      %v513 = vpop.f32.mrf.mxu0
      %v514 = vadd.f32 0.0, %v513
      %v515 = vpop.f32.mrf.mxu0
      %v516 = vadd.f32 0.0, %v515
      %517 = vmatprep.mubr.f32.mxu0 0.0
      %518 = vmatmul.mubr.f32.gmra.mxu0 %v361
      %v519 = vpop.f32.mrf.mxu0
      %v520 = vadd.f32 0.0, %v519
      %v521 = vpop.f32.mrf.mxu0
      %v522 = vadd.f32 0.0, %v521
      %523 = vdwg.mxu0
      %524 = vmatprep.subr.mxu0 0.0
      %525 = vmatpush1.msra.mxu0 0.0
      %526 = vmatprep.subr.mxu0 0.0
      %527 = vmatpush1.msra.mxu0 0.0
      %528 = vmatprep.subr.mxu0 0.0
      %529 = vmatpush1.msra.mxu0 0.0
      %530 = vmatprep.subr.mxu0 0.0
      %531 = vmatpush1.msra.mxu0 0.0
      %532 = vmatprep.subr.mxu0 0.0
      %533 = vmatpush1.msra.mxu0 0.0
      %534 = vmatprep.subr.mxu0 0.0
      %535 = vmatpush1.msra.mxu0 0.0
      %536 = vmatprep.subr.mxu0 0.0
      %537 = vmatpush1.msra.mxu0 0.0
      %538 = vmatprep.subr.mxu0 0.0
      %539 = vmatpush1.msra.mxu0 0.0
      %540 = vmatprep.subr.mxu0 %v310
      %541 = vmatpush1.msra.mxu0 %v309
      %542 = vmatprep.subr.mxu0 %v303
      %543 = vmatpush1.msra.mxu0 %v302
      %544 = vmatprep.subr.mxu0 %v296
      %545 = vmatpush1.msra.mxu0 %v295
      %546 = vmatprep.subr.mxu0 %v289
      %547 = vmatpush1.msra.mxu0 %v288
      %548 = vmatprep.subr.mxu0 %v282
      %549 = vmatpush1.msra.mxu0 %v281
      %550 = vmatprep.subr.mxu0 %v275
      %551 = vmatpush1.msra.mxu0 %v274
      %552 = vmatprep.subr.mxu0 %v268
      %553 = vmatpush1.msra.mxu0 %v267
      %554 = vmatprep.subr.mxu0 %v261
      %555 = vmatpush1.msra.mxu0 %v260
      %556 = vmatprep.subr.mxu0 0.0
      %557 = vmatpush2.msra.mxu0 0.0
      %558 = vmatprep.subr.mxu0 0.0
      %559 = vmatpush2.msra.mxu0 0.0
      %560 = vmatprep.subr.mxu0 0.0
      %561 = vmatpush2.msra.mxu0 0.0
      %562 = vmatprep.subr.mxu0 0.0
      %563 = vmatpush2.msra.mxu0 0.0
      %564 = vmatprep.subr.mxu0 0.0
      %565 = vmatpush2.msra.mxu0 0.0
      %566 = vmatprep.subr.mxu0 0.0
      %567 = vmatpush2.msra.mxu0 0.0
      %568 = vmatprep.subr.mxu0 0.0
      %569 = vmatpush2.msra.mxu0 0.0
      %570 = vmatprep.subr.mxu0 0.0
      %571 = vmatpush2.msra.mxu0 0.0
      %572 = vmatprep.subr.mxu0 0.0
      %573 = vmatpush2.msra.mxu0 0.0
      %574 = vmatprep.subr.mxu0 0.0
      %575 = vmatpush2.msra.mxu0 0.0
      %576 = vmatprep.subr.mxu0 0.0
      %577 = vmatpush2.msra.mxu0 0.0
      %578 = vmatprep.subr.mxu0 0.0
      %579 = vmatpush2.msra.mxu0 0.0
      %580 = vmatprep.subr.mxu0 0.0
      %581 = vmatpush2.msra.mxu0 0.0
      %582 = vmatprep.subr.mxu0 0.0
      %583 = vmatpush2.msra.mxu0 0.0
      %584 = vmatprep.subr.mxu0 0.0
      %585 = vmatpush2.msra.mxu0 0.0
      %586 = vmatprep.subr.mxu0 0.0
      %587 = vmatpush2.msra.mxu0 0.0
      %588 = vmatprep.mubr.f32.mxu0 0.0
      %589 = vmatmul.mubr.f32.gmra.mxu0 %v316
      %v590 = vpop.f32.mrf.mxu0
      %v591 = vadd.f32 0.0, %v590
      %v592 = vpop.f32.mrf.mxu0
      %v593 = vadd.f32 0.0, %v592
      %594 = vmatprep.mubr.f32.mxu0 0.0
      %595 = vmatmul.mubr.f32.gmra.mxu0 %v319
      %v596 = vpop.f32.mrf.mxu0
      %v597 = vadd.f32 0.0, %v596
      %v598 = vpop.f32.mrf.mxu0
      %v599 = vadd.f32 0.0, %v598
      %600 = vmatprep.mubr.f32.mxu0 0.0
      %601 = vmatmul.mubr.f32.gmra.mxu0 %v322
      %v602 = vpop.f32.mrf.mxu0
      %v603 = vadd.f32 0.0, %v602
      %v604 = vpop.f32.mrf.mxu0
      %v605 = vadd.f32 0.0, %v604
      %606 = vmatprep.mubr.f32.mxu0 0.0
      %607 = vmatmul.mubr.f32.gmra.mxu0 %v325
      %v608 = vpop.f32.mrf.mxu0
      %v609 = vadd.f32 0.0, %v608
      %v610 = vpop.f32.mrf.mxu0
      %v611 = vadd.f32 0.0, %v610
      %612 = vmatprep.mubr.f32.mxu0 0.0
      %613 = vmatmul.mubr.f32.gmra.mxu0 %v328
      %v614 = vpop.f32.mrf.mxu0
      %v615 = vadd.f32 0.0, %v614
      %v616 = vpop.f32.mrf.mxu0
      %v617 = vadd.f32 0.0, %v616
      %618 = vmatprep.mubr.f32.mxu0 0.0
      %619 = vmatmul.mubr.f32.gmra.mxu0 %v331
      %v620 = vpop.f32.mrf.mxu0
      %v621 = vadd.f32 0.0, %v620
      %v622 = vpop.f32.mrf.mxu0
      %v623 = vadd.f32 0.0, %v622
      %624 = vmatprep.mubr.f32.mxu0 0.0
      %625 = vmatmul.mubr.f32.gmra.mxu0 %v334
      %v626 = vpop.f32.mrf.mxu0
      %v627 = vadd.f32 0.0, %v626
      %v628 = vpop.f32.mrf.mxu0
      %v629 = vadd.f32 0.0, %v628
      %630 = vmatprep.mubr.f32.mxu0 0.0
      %631 = vmatmul.mubr.f32.gmra.mxu0 %v337
      %v632 = vpop.f32.mrf.mxu0
      %v633 = vadd.f32 0.0, %v632
      %v634 = vpop.f32.mrf.mxu0
      %v635 = vadd.f32 0.0, %v634
      %636 = vmatprep.mubr.f32.mxu0 0.0
      %637 = vmatmul.mubr.f32.gmra.mxu0 %v340
      %v638 = vpop.f32.mrf.mxu0
      %v639 = vadd.f32 0.0, %v638
      %v640 = vpop.f32.mrf.mxu0
      %v641 = vadd.f32 0.0, %v640
      %642 = vmatprep.mubr.f32.mxu0 0.0
      %643 = vmatmul.mubr.f32.gmra.mxu0 %v343
      %v644 = vpop.f32.mrf.mxu0
      %v645 = vadd.f32 0.0, %v644
      %v646 = vpop.f32.mrf.mxu0
      %v647 = vadd.f32 0.0, %v646
      %648 = vmatprep.mubr.f32.mxu0 0.0
      %649 = vmatmul.mubr.f32.gmra.mxu0 %v346
      %v650 = vpop.f32.mrf.mxu0
      %v651 = vadd.f32 0.0, %v650
      %v652 = vpop.f32.mrf.mxu0
      %v653 = vadd.f32 0.0, %v652
      %654 = vmatprep.mubr.f32.mxu0 0.0
      %655 = vmatmul.mubr.f32.gmra.mxu0 %v349
      %v656 = vpop.f32.mrf.mxu0
      %v657 = vadd.f32 0.0, %v656
      %v658 = vpop.f32.mrf.mxu0
      %v659 = vadd.f32 0.0, %v658
      %660 = vmatprep.mubr.f32.mxu0 0.0
      %661 = vmatmul.mubr.f32.gmra.mxu0 %v352
      %v662 = vpop.f32.mrf.mxu0
      %v663 = vadd.f32 0.0, %v662
      %v664 = vpop.f32.mrf.mxu0
      %v665 = vadd.f32 0.0, %v664
      %666 = vmatprep.mubr.f32.mxu0 0.0
      %667 = vmatmul.mubr.f32.gmra.mxu0 %v355
      %v668 = vpop.f32.mrf.mxu0
      %v669 = vadd.f32 0.0, %v668
      %v670 = vpop.f32.mrf.mxu0
      %v671 = vadd.f32 0.0, %v670
      %672 = vmatprep.mubr.f32.mxu0 0.0
      %673 = vmatmul.mubr.f32.gmra.mxu0 %v358
      %v674 = vpop.f32.mrf.mxu0
      %v675 = vadd.f32 0.0, %v674
      %v676 = vpop.f32.mrf.mxu0
      %v677 = vadd.f32 0.0, %v676
      %678 = vmatprep.mubr.f32.mxu0 0.0
      %679 = vmatmul.mubr.f32.gmra.mxu0 %v361
      %v680 = vpop.f32.mrf.mxu0
      %v681 = vadd.f32 0.0, %v680
      %v682 = vpop.f32.mrf.mxu0
      %v683 = vadd.f32 0.0, %v682
      %684 = vdwg.mxu0
      %685 = vmatprep.subr.mxu0 0.0
      %686 = vmatpush1.msra.mxu0 0.0
      %687 = vmatprep.subr.mxu0 0.0
      %688 = vmatpush1.msra.mxu0 0.0
      %689 = vmatprep.subr.mxu0 0.0
      %690 = vmatpush1.msra.mxu0 0.0
      %691 = vmatprep.subr.mxu0 0.0
      %692 = vmatpush1.msra.mxu0 0.0
      %693 = vmatprep.subr.mxu0 0.0
      %694 = vmatpush1.msra.mxu0 0.0
      %695 = vmatprep.subr.mxu0 0.0
      %696 = vmatpush1.msra.mxu0 0.0
      %697 = vmatprep.subr.mxu0 0.0
      %698 = vmatpush1.msra.mxu0 0.0
      %699 = vmatprep.subr.mxu0 0.0
      %700 = vmatpush1.msra.mxu0 0.0
      %701 = vmatprep.subr.mxu0 %v312
      %702 = vmatpush1.msra.mxu0 %v311
      %703 = vmatprep.subr.mxu0 %v305
      %704 = vmatpush1.msra.mxu0 %v304
      %705 = vmatprep.subr.mxu0 %v298
      %706 = vmatpush1.msra.mxu0 %v297
      %707 = vmatprep.subr.mxu0 %v291
      %708 = vmatpush1.msra.mxu0 %v290
      %709 = vmatprep.subr.mxu0 %v284
      %710 = vmatpush1.msra.mxu0 %v283
      %711 = vmatprep.subr.mxu0 %v277
      %712 = vmatpush1.msra.mxu0 %v276
      %713 = vmatprep.subr.mxu0 %v270
      %714 = vmatpush1.msra.mxu0 %v269
      %715 = vmatprep.subr.mxu0 %v263
      %716 = vmatpush1.msra.mxu0 %v262
      %717 = vmatprep.subr.mxu0 0.0
      %718 = vmatpush2.msra.mxu0 0.0
      %719 = vmatprep.subr.mxu0 0.0
      %720 = vmatpush2.msra.mxu0 0.0
      %721 = vmatprep.subr.mxu0 0.0
      %722 = vmatpush2.msra.mxu0 0.0
      %723 = vmatprep.subr.mxu0 0.0
      %724 = vmatpush2.msra.mxu0 0.0
      %725 = vmatprep.subr.mxu0 0.0
      %726 = vmatpush2.msra.mxu0 0.0
      %727 = vmatprep.subr.mxu0 0.0
      %728 = vmatpush2.msra.mxu0 0.0
      %729 = vmatprep.subr.mxu0 0.0
      %730 = vmatpush2.msra.mxu0 0.0
      %731 = vmatprep.subr.mxu0 0.0
      %732 = vmatpush2.msra.mxu0 0.0
      %733 = vmatprep.subr.mxu0 0.0
      %734 = vmatpush2.msra.mxu0 0.0
      %735 = vmatprep.subr.mxu0 0.0
      %736 = vmatpush2.msra.mxu0 0.0
      %737 = vmatprep.subr.mxu0 0.0
      %738 = vmatpush2.msra.mxu0 0.0
      %739 = vmatprep.subr.mxu0 0.0
      %740 = vmatpush2.msra.mxu0 0.0
      %741 = vmatprep.subr.mxu0 0.0
      %742 = vmatpush2.msra.mxu0 0.0
      %743 = vmatprep.subr.mxu0 0.0
      %744 = vmatpush2.msra.mxu0 0.0
      %745 = vmatprep.subr.mxu0 0.0
      %746 = vmatpush2.msra.mxu0 0.0
      %747 = vmatprep.subr.mxu0 0.0
      %748 = vmatpush2.msra.mxu0 0.0
      %749 = vmatprep.mubr.f32.mxu0 0.0
      %750 = vmatmul.mubr.f32.gmra.mxu0 %v316
      %v751 = vpop.f32.mrf.mxu0
      %v752 = vadd.f32 0.0, %v751
      %v753 = vpop.f32.mrf.mxu0
      %v754 = vadd.f32 0.0, %v753
      %755 = vmatprep.mubr.f32.mxu0 0.0
      %756 = vmatmul.mubr.f32.gmra.mxu0 %v319
      %v757 = vpop.f32.mrf.mxu0
      %v758 = vadd.f32 0.0, %v757
      %v759 = vpop.f32.mrf.mxu0
      %v760 = vadd.f32 0.0, %v759
      %761 = vmatprep.mubr.f32.mxu0 0.0
      %762 = vmatmul.mubr.f32.gmra.mxu0 %v322
      %v763 = vpop.f32.mrf.mxu0
      %v764 = vadd.f32 0.0, %v763
      %v765 = vpop.f32.mrf.mxu0
      %v766 = vadd.f32 0.0, %v765
      %767 = vmatprep.mubr.f32.mxu0 0.0
      %768 = vmatmul.mubr.f32.gmra.mxu0 %v325
      %v769 = vpop.f32.mrf.mxu0
      %v770 = vadd.f32 0.0, %v769
      %v771 = vpop.f32.mrf.mxu0
      %v772 = vadd.f32 0.0, %v771
      %773 = vmatprep.mubr.f32.mxu0 0.0
      %774 = vmatmul.mubr.f32.gmra.mxu0 %v328
      %v775 = vpop.f32.mrf.mxu0
      %v776 = vadd.f32 0.0, %v775
      %v777 = vpop.f32.mrf.mxu0
      %v778 = vadd.f32 0.0, %v777
      %779 = vmatprep.mubr.f32.mxu0 0.0
      %780 = vmatmul.mubr.f32.gmra.mxu0 %v331
      %v781 = vpop.f32.mrf.mxu0
      %v782 = vadd.f32 0.0, %v781
      %v783 = vpop.f32.mrf.mxu0
      %v784 = vadd.f32 0.0, %v783
      %785 = vmatprep.mubr.f32.mxu0 0.0
      %786 = vmatmul.mubr.f32.gmra.mxu0 %v334
      %v787 = vpop.f32.mrf.mxu0
      %v788 = vadd.f32 0.0, %v787
      %v789 = vpop.f32.mrf.mxu0
      %v790 = vadd.f32 0.0, %v789
      %791 = vmatprep.mubr.f32.mxu0 0.0
      %792 = vmatmul.mubr.f32.gmra.mxu0 %v337
      %v793 = vpop.f32.mrf.mxu0
      %v794 = vadd.f32 0.0, %v793
      %v795 = vpop.f32.mrf.mxu0
      %v796 = vadd.f32 0.0, %v795
      %797 = vmatprep.mubr.f32.mxu0 0.0
      %798 = vmatmul.mubr.f32.gmra.mxu0 %v340
      %v799 = vpop.f32.mrf.mxu0
      %v800 = vadd.f32 0.0, %v799
      %v801 = vpop.f32.mrf.mxu0
      %v802 = vadd.f32 0.0, %v801
      %803 = vmatprep.mubr.f32.mxu0 0.0
      %804 = vmatmul.mubr.f32.gmra.mxu0 %v343
      %v805 = vpop.f32.mrf.mxu0
      %v806 = vadd.f32 0.0, %v805
      %v807 = vpop.f32.mrf.mxu0
      %v808 = vadd.f32 0.0, %v807
      %809 = vmatprep.mubr.f32.mxu0 0.0
      %810 = vmatmul.mubr.f32.gmra.mxu0 %v346
      %v811 = vpop.f32.mrf.mxu0
      %v812 = vadd.f32 0.0, %v811
      %v813 = vpop.f32.mrf.mxu0
      %v814 = vadd.f32 0.0, %v813
      %815 = vmatprep.mubr.f32.mxu0 0.0
      %816 = vmatmul.mubr.f32.gmra.mxu0 %v349
      %v817 = vpop.f32.mrf.mxu0
      %v818 = vadd.f32 0.0, %v817
      %v819 = vpop.f32.mrf.mxu0
      %v820 = vadd.f32 0.0, %v819
      %821 = vmatprep.mubr.f32.mxu0 0.0
      %822 = vmatmul.mubr.f32.gmra.mxu0 %v352
      %v823 = vpop.f32.mrf.mxu0
      %v824 = vadd.f32 0.0, %v823
      %v825 = vpop.f32.mrf.mxu0
      %v826 = vadd.f32 0.0, %v825
      %827 = vmatprep.mubr.f32.mxu0 0.0
      %828 = vmatmul.mubr.f32.gmra.mxu0 %v355
      %v829 = vpop.f32.mrf.mxu0
      %v830 = vadd.f32 0.0, %v829
      %v831 = vpop.f32.mrf.mxu0
      %v832 = vadd.f32 0.0, %v831
      %833 = vmatprep.mubr.f32.mxu0 0.0
      %834 = vmatmul.mubr.f32.gmra.mxu0 %v358
      %v835 = vpop.f32.mrf.mxu0
      %v836 = vadd.f32 0.0, %v835
      %v837 = vpop.f32.mrf.mxu0
      %v838 = vadd.f32 0.0, %v837
      %839 = vmatprep.mubr.f32.mxu0 0.0
      %840 = vmatmul.mubr.f32.gmra.mxu0 %v361
      %v841 = vpop.f32.mrf.mxu0
      %v842 = vadd.f32 0.0, %v841
      %v843 = vpop.f32.mrf.mxu0
      %v844 = vadd.f32 0.0, %v843
      %845 = vdwg.mxu0
      %846 = vmatprep.subr.mxu0 0.0
      %847 = vmatpush1.msra.mxu0 0.0
      %848 = vmatprep.subr.mxu0 0.0
      %849 = vmatpush1.msra.mxu0 0.0
      %850 = vmatprep.subr.mxu0 0.0
      %851 = vmatpush1.msra.mxu0 0.0
      %852 = vmatprep.subr.mxu0 0.0
      %853 = vmatpush1.msra.mxu0 0.0
      %854 = vmatprep.subr.mxu0 0.0
      %855 = vmatpush1.msra.mxu0 0.0
      %856 = vmatprep.subr.mxu0 0.0
      %857 = vmatpush1.msra.mxu0 0.0
      %858 = vmatprep.subr.mxu0 0.0
      %859 = vmatpush1.msra.mxu0 0.0
      %860 = vmatprep.subr.mxu0 0.0
      %861 = vmatpush1.msra.mxu0 0.0
      %862 = vmatprep.subr.mxu0 0.0
      %863 = vmatpush1.msra.mxu0 %v313
      %864 = vmatprep.subr.mxu0 0.0
      %865 = vmatpush1.msra.mxu0 %v306
      %866 = vmatprep.subr.mxu0 0.0
      %867 = vmatpush1.msra.mxu0 %v299
      %868 = vmatprep.subr.mxu0 0.0
      %869 = vmatpush1.msra.mxu0 %v292
      %870 = vmatprep.subr.mxu0 0.0
      %871 = vmatpush1.msra.mxu0 %v285
      %872 = vmatprep.subr.mxu0 0.0
      %873 = vmatpush1.msra.mxu0 %v278
      %874 = vmatprep.subr.mxu0 0.0
      %875 = vmatpush1.msra.mxu0 %v271
      %876 = vmatprep.subr.mxu0 0.0
      %877 = vmatpush1.msra.mxu0 %v264
      %878 = vmatprep.subr.mxu0 0.0
      %879 = vmatpush2.msra.mxu0 0.0
      %880 = vmatprep.subr.mxu0 0.0
      %881 = vmatpush2.msra.mxu0 0.0
      %882 = vmatprep.subr.mxu0 0.0
      %883 = vmatpush2.msra.mxu0 0.0
      %884 = vmatprep.subr.mxu0 0.0
      %885 = vmatpush2.msra.mxu0 0.0
      %886 = vmatprep.subr.mxu0 0.0
      %887 = vmatpush2.msra.mxu0 0.0
      %888 = vmatprep.subr.mxu0 0.0
      %889 = vmatpush2.msra.mxu0 0.0
      %890 = vmatprep.subr.mxu0 0.0
      %891 = vmatpush2.msra.mxu0 0.0
      %892 = vmatprep.subr.mxu0 0.0
      %893 = vmatpush2.msra.mxu0 0.0
      %894 = vmatprep.subr.mxu0 0.0
      %895 = vmatpush2.msra.mxu0 0.0
      %896 = vmatprep.subr.mxu0 0.0
      %897 = vmatpush2.msra.mxu0 0.0
      %898 = vmatprep.subr.mxu0 0.0
      %899 = vmatpush2.msra.mxu0 0.0
      %900 = vmatprep.subr.mxu0 0.0
      %901 = vmatpush2.msra.mxu0 0.0
      %902 = vmatprep.subr.mxu0 0.0
      %903 = vmatpush2.msra.mxu0 0.0
      %904 = vmatprep.subr.mxu0 0.0
      %905 = vmatpush2.msra.mxu0 0.0
      %906 = vmatprep.subr.mxu0 0.0
      %907 = vmatpush2.msra.mxu0 0.0
      %908 = vmatprep.subr.mxu0 0.0
      %909 = vmatpush2.msra.mxu0 0.0
      %910 = vmatprep.mubr.f32.mxu0 0.0
      %911 = vmatmul.mubr.f32.gmra.mxu0 %v316
      %v912 = vpop.f32.mrf.mxu0
      %v913 = vadd.f32 0.0, %v912
      %v914 = vpop.f32.mrf.mxu0
      %915 = vmatprep.mubr.f32.mxu0 0.0
      %916 = vmatmul.mubr.f32.gmra.mxu0 %v319
      %v917 = vpop.f32.mrf.mxu0
      %v918 = vadd.f32 0.0, %v917
      %v919 = vpop.f32.mrf.mxu0
      %920 = vmatprep.mubr.f32.mxu0 0.0
      %921 = vmatmul.mubr.f32.gmra.mxu0 %v322
      %v922 = vpop.f32.mrf.mxu0
      %v923 = vadd.f32 0.0, %v922
      %v924 = vpop.f32.mrf.mxu0
      %925 = vmatprep.mubr.f32.mxu0 0.0
      %926 = vmatmul.mubr.f32.gmra.mxu0 %v325
      %v927 = vpop.f32.mrf.mxu0
      %v928 = vadd.f32 0.0, %v927
      %v929 = vpop.f32.mrf.mxu0
      %930 = vmatprep.mubr.f32.mxu0 0.0
      %931 = vmatmul.mubr.f32.gmra.mxu0 %v328
      %v932 = vpop.f32.mrf.mxu0
      %v933 = vadd.f32 0.0, %v932
      %v934 = vpop.f32.mrf.mxu0
      %935 = vmatprep.mubr.f32.mxu0 0.0
      %936 = vmatmul.mubr.f32.gmra.mxu0 %v331
      %v937 = vpop.f32.mrf.mxu0
      %v938 = vadd.f32 0.0, %v937
      %v939 = vpop.f32.mrf.mxu0
      %940 = vmatprep.mubr.f32.mxu0 0.0
      %941 = vmatmul.mubr.f32.gmra.mxu0 %v334
      %v942 = vpop.f32.mrf.mxu0
      %v943 = vadd.f32 0.0, %v942
      %v944 = vpop.f32.mrf.mxu0
      %945 = vmatprep.mubr.f32.mxu0 0.0
      %946 = vmatmul.mubr.f32.gmra.mxu0 %v337
      %v947 = vpop.f32.mrf.mxu0
      %v948 = vadd.f32 0.0, %v947
      %v949 = vpop.f32.mrf.mxu0
      %950 = vmatprep.mubr.f32.mxu0 0.0
      %951 = vmatmul.mubr.f32.gmra.mxu0 %v340
      %v952 = vpop.f32.mrf.mxu0
      %v953 = vadd.f32 0.0, %v952
      %v954 = vpop.f32.mrf.mxu0
      %955 = vmatprep.mubr.f32.mxu0 0.0
      %956 = vmatmul.mubr.f32.gmra.mxu0 %v343
      %v957 = vpop.f32.mrf.mxu0
      %v958 = vadd.f32 0.0, %v957
      %v959 = vpop.f32.mrf.mxu0
      %960 = vmatprep.mubr.f32.mxu0 0.0
      %961 = vmatmul.mubr.f32.gmra.mxu0 %v346
      %v962 = vpop.f32.mrf.mxu0
      %v963 = vadd.f32 0.0, %v962
      %v964 = vpop.f32.mrf.mxu0
      %965 = vmatprep.mubr.f32.mxu0 0.0
      %966 = vmatmul.mubr.f32.gmra.mxu0 %v349
      %v967 = vpop.f32.mrf.mxu0
      %v968 = vadd.f32 0.0, %v967
      %v969 = vpop.f32.mrf.mxu0
      %970 = vmatprep.mubr.f32.mxu0 0.0
      %971 = vmatmul.mubr.f32.gmra.mxu0 %v352
      %v972 = vpop.f32.mrf.mxu0
      %v973 = vadd.f32 0.0, %v972
      %v974 = vpop.f32.mrf.mxu0
      %975 = vmatprep.mubr.f32.mxu0 0.0
      %976 = vmatmul.mubr.f32.gmra.mxu0 %v355
      %v977 = vpop.f32.mrf.mxu0
      %v978 = vadd.f32 0.0, %v977
      %v979 = vpop.f32.mrf.mxu0
      %980 = vmatprep.mubr.f32.mxu0 0.0
      %981 = vmatmul.mubr.f32.gmra.mxu0 %v358
      %v982 = vpop.f32.mrf.mxu0
      %v983 = vadd.f32 0.0, %v982
      %v984 = vpop.f32.mrf.mxu0
      %985 = vmatprep.mubr.f32.mxu0 0.0
      %986 = vmatmul.mubr.f32.gmra.mxu0 %v361
      %v987 = vpop.f32.mrf.mxu0
      %v988 = vadd.f32 0.0, %v987
      %v989 = vpop.f32.mrf.mxu0
      %990 = vdwg.mxu0
      %v991 = vand.u32 2147483647, %v430
      %v992 = vand.u32 2147483647, %v432
      %v993 = vand.u32 2147483647, %v591
      %v994 = vand.u32 2147483647, %v593
      %v995 = vand.u32 2147483647, %v752
      %v996 = vand.u32 2147483647, %v754
      %v997 = vand.u32 2147483647, %v913
      %v998 = vand.u32 2147483647, %v436
      %v999 = vand.u32 2147483647, %v438
      %v1000 = vand.u32 2147483647, %v597
      %v1001 = vand.u32 2147483647, %v599
      %v1002 = vand.u32 2147483647, %v758
      %v1003 = vand.u32 2147483647, %v760
      %v1004 = vand.u32 2147483647, %v918
      %v1005 = vand.u32 2147483647, %v442
      %v1006 = vand.u32 2147483647, %v444
      %v1007 = vand.u32 2147483647, %v603
      %v1008 = vand.u32 2147483647, %v605
      %v1009 = vand.u32 2147483647, %v764
      %v1010 = vand.u32 2147483647, %v766
      %v1011 = vand.u32 2147483647, %v923
      %v1012 = vand.u32 2147483647, %v448
      %v1013 = vand.u32 2147483647, %v450
      %v1014 = vand.u32 2147483647, %v609
      %v1015 = vand.u32 2147483647, %v611
      %v1016 = vand.u32 2147483647, %v770
      %v1017 = vand.u32 2147483647, %v772
      %v1018 = vand.u32 2147483647, %v928
      %v1019 = vand.u32 2147483647, %v454
      %v1020 = vand.u32 2147483647, %v456
      %v1021 = vand.u32 2147483647, %v615
      %v1022 = vand.u32 2147483647, %v617
      %v1023 = vand.u32 2147483647, %v776
      %v1024 = vand.u32 2147483647, %v778
      %v1025 = vand.u32 2147483647, %v933
      %v1026 = vand.u32 2147483647, %v460
      %v1027 = vand.u32 2147483647, %v462
      %v1028 = vand.u32 2147483647, %v621
      %v1029 = vand.u32 2147483647, %v623
      %v1030 = vand.u32 2147483647, %v782
      %v1031 = vand.u32 2147483647, %v784
      %v1032 = vand.u32 2147483647, %v938
      %v1033 = vand.u32 2147483647, %v466
      %v1034 = vand.u32 2147483647, %v468
      %v1035 = vand.u32 2147483647, %v627
      %v1036 = vand.u32 2147483647, %v629
      %v1037 = vand.u32 2147483647, %v788
      %v1038 = vand.u32 2147483647, %v790
      %v1039 = vand.u32 2147483647, %v943
      %v1040 = vand.u32 2147483647, %v472
      %v1041 = vand.u32 2147483647, %v474
      %v1042 = vand.u32 2147483647, %v633
      %v1043 = vand.u32 2147483647, %v635
      %v1044 = vand.u32 2147483647, %v794
      %v1045 = vand.u32 2147483647, %v796
      %v1046 = vand.u32 2147483647, %v948
      %v1047 = vand.u32 2147483647, %v478
      %v1048 = vand.u32 2147483647, %v480
      %v1049 = vand.u32 2147483647, %v639
      %v1050 = vand.u32 2147483647, %v641
      %v1051 = vand.u32 2147483647, %v800
      %v1052 = vand.u32 2147483647, %v802
      %v1053 = vand.u32 2147483647, %v953
      %v1054 = vand.u32 2147483647, %v484
      %v1055 = vand.u32 2147483647, %v486
      %v1056 = vand.u32 2147483647, %v645
      %v1057 = vand.u32 2147483647, %v647
      %v1058 = vand.u32 2147483647, %v806
      %v1059 = vand.u32 2147483647, %v808
      %v1060 = vand.u32 2147483647, %v958
      %v1061 = vand.u32 2147483647, %v490
      %v1062 = vand.u32 2147483647, %v492
      %v1063 = vand.u32 2147483647, %v651
      %v1064 = vand.u32 2147483647, %v653
      %v1065 = vand.u32 2147483647, %v812
      %v1066 = vand.u32 2147483647, %v814
      %v1067 = vand.u32 2147483647, %v963
      %v1068 = vand.u32 2147483647, %v496
      %v1069 = vand.u32 2147483647, %v498
      %v1070 = vand.u32 2147483647, %v657
      %v1071 = vand.u32 2147483647, %v659
      %v1072 = vand.u32 2147483647, %v818
      %v1073 = vand.u32 2147483647, %v820
      %v1074 = vand.u32 2147483647, %v968
      %v1075 = vand.u32 2147483647, %v502
      %v1076 = vand.u32 2147483647, %v504
      %v1077 = vand.u32 2147483647, %v663
      %v1078 = vand.u32 2147483647, %v665
      %v1079 = vand.u32 2147483647, %v824
      %v1080 = vand.u32 2147483647, %v826
      %v1081 = vand.u32 2147483647, %v973
      %v1082 = vand.u32 2147483647, %v508
      %v1083 = vand.u32 2147483647, %v510
      %v1084 = vand.u32 2147483647, %v669
      %v1085 = vand.u32 2147483647, %v671
      %v1086 = vand.u32 2147483647, %v830
      %v1087 = vand.u32 2147483647, %v832
      %v1088 = vand.u32 2147483647, %v978
      %v1089 = vand.u32 2147483647, %v514
      %v1090 = vand.u32 2147483647, %v516
      %v1091 = vand.u32 2147483647, %v675
      %v1092 = vand.u32 2147483647, %v677
      %v1093 = vand.u32 2147483647, %v836
      %v1094 = vand.u32 2147483647, %v838
      %v1095 = vand.u32 2147483647, %v983
      %v1096 = vand.u32 2147483647, %v520
      %v1097 = vand.u32 2147483647, %v522
      %v1098 = vand.u32 2147483647, %v681
      %v1099 = vand.u32 2147483647, %v683
      %v1100 = vand.u32 2147483647, %v842
      %v1101 = vand.u32 2147483647, %v844
      %v1102 = vand.u32 2147483647, %v988
      %v1103 = vsub.f32 0.0, %v991
      %v1104 = vsub.f32 0.0, %v992
      %v1105 = vsub.f32 0.0, %v993
      %v1106 = vsub.f32 0.0, %v994
      %v1107 = vsub.f32 0.0, %v995
      %v1108 = vsub.f32 0.0, %v996
      %v1109 = vsub.f32 0.0, %v997
      %v1110 = vsub.f32 0.0, %v998
      %v1111 = vsub.f32 0.0, %v999
      %v1112 = vsub.f32 0.0, %v1000
      %v1113 = vsub.f32 0.0, %v1001
      %v1114 = vsub.f32 0.0, %v1002
      %v1115 = vsub.f32 0.0, %v1003
      %v1116 = vsub.f32 0.0, %v1004
      %v1117 = vsub.f32 0.0, %v1005
      %v1118 = vsub.f32 0.0, %v1006
      %v1119 = vsub.f32 0.0, %v1007
      %v1120 = vsub.f32 0.0, %v1008
      %v1121 = vsub.f32 0.0, %v1009
      %v1122 = vsub.f32 0.0, %v1010
      %v1123 = vsub.f32 0.0, %v1011
      %v1124 = vsub.f32 0.0, %v1012
      %v1125 = vsub.f32 0.0, %v1013
      %v1126 = vsub.f32 0.0, %v1014
      %v1127 = vsub.f32 0.0, %v1015
      %v1128 = vsub.f32 0.0, %v1016
      %v1129 = vsub.f32 0.0, %v1017
      %v1130 = vsub.f32 0.0, %v1018
      %v1131 = vsub.f32 0.0, %v1019
      %v1132 = vsub.f32 0.0, %v1020
      %v1133 = vsub.f32 0.0, %v1021
      %v1134 = vsub.f32 0.0, %v1022
      %v1135 = vsub.f32 0.0, %v1023
      %v1136 = vsub.f32 0.0, %v1024
      %v1137 = vsub.f32 0.0, %v1025
      %v1138 = vsub.f32 0.0, %v1026
      %v1139 = vsub.f32 0.0, %v1027
      %v1140 = vsub.f32 0.0, %v1028
      %v1141 = vsub.f32 0.0, %v1029
      %v1142 = vsub.f32 0.0, %v1030
      %v1143 = vsub.f32 0.0, %v1031
      %v1144 = vsub.f32 0.0, %v1032
      %v1145 = vsub.f32 0.0, %v1033
      %v1146 = vsub.f32 0.0, %v1034
      %v1147 = vsub.f32 0.0, %v1035
      %v1148 = vsub.f32 0.0, %v1036
      %v1149 = vsub.f32 0.0, %v1037
      %v1150 = vsub.f32 0.0, %v1038
      %v1151 = vsub.f32 0.0, %v1039
      %v1152 = vsub.f32 0.0, %v1040
      %v1153 = vsub.f32 0.0, %v1041
      %v1154 = vsub.f32 0.0, %v1042
      %v1155 = vsub.f32 0.0, %v1043
      %v1156 = vsub.f32 0.0, %v1044
      %v1157 = vsub.f32 0.0, %v1045
      %v1158 = vsub.f32 0.0, %v1046
      %v1159 = vsub.f32 0.0, %v1047
      %v1160 = vsub.f32 0.0, %v1048
      %v1161 = vsub.f32 0.0, %v1049
      %v1162 = vsub.f32 0.0, %v1050
      %v1163 = vsub.f32 0.0, %v1051
      %v1164 = vsub.f32 0.0, %v1052
      %v1165 = vsub.f32 0.0, %v1053
      %v1166 = vsub.f32 0.0, %v1054
      %v1167 = vsub.f32 0.0, %v1055
      %v1168 = vsub.f32 0.0, %v1056
      %v1169 = vsub.f32 0.0, %v1057
      %v1170 = vsub.f32 0.0, %v1058
      %v1171 = vsub.f32 0.0, %v1059
      %v1172 = vsub.f32 0.0, %v1060
      %v1173 = vsub.f32 0.0, %v1061
      %v1174 = vsub.f32 0.0, %v1062
      %v1175 = vsub.f32 0.0, %v1063
      %v1176 = vsub.f32 0.0, %v1064
      %v1177 = vsub.f32 0.0, %v1065
      %v1178 = vsub.f32 0.0, %v1066
      %v1179 = vsub.f32 0.0, %v1067
      %v1180 = vsub.f32 0.0, %v1068
      %v1181 = vsub.f32 0.0, %v1069
      %v1182 = vsub.f32 0.0, %v1070
      %v1183 = vsub.f32 0.0, %v1071
      %v1184 = vsub.f32 0.0, %v1072
      %v1185 = vsub.f32 0.0, %v1073
      %v1186 = vsub.f32 0.0, %v1074
      %v1187 = vsub.f32 0.0, %v1075
      %v1188 = vsub.f32 0.0, %v1076
      %v1189 = vsub.f32 0.0, %v1077
      %v1190 = vsub.f32 0.0, %v1078
      %v1191 = vsub.f32 0.0, %v1079
      %v1192 = vsub.f32 0.0, %v1080
      %v1193 = vsub.f32 0.0, %v1081
      %v1194 = vsub.f32 0.0, %v1082
      %v1195 = vsub.f32 0.0, %v1083
      %v1196 = vsub.f32 0.0, %v1084
      %v1197 = vsub.f32 0.0, %v1085
      %v1198 = vsub.f32 0.0, %v1086
      %v1199 = vsub.f32 0.0, %v1087
      %v1200 = vsub.f32 0.0, %v1088
      %v1201 = vsub.f32 0.0, %v1089
      %v1202 = vsub.f32 0.0, %v1090
      %v1203 = vsub.f32 0.0, %v1091
      %v1204 = vsub.f32 0.0, %v1092
      %v1205 = vsub.f32 0.0, %v1093
      %v1206 = vsub.f32 0.0, %v1094
      %v1207 = vsub.f32 0.0, %v1095
      %v1208 = vsub.f32 0.0, %v1096
      %v1209 = vsub.f32 0.0, %v1097
      %v1210 = vsub.f32 0.0, %v1098
      %v1211 = vsub.f32 0.0, %v1099
      %v1212 = vsub.f32 0.0, %v1100
      %v1213 = vsub.f32 0.0, %v1101
      %v1214 = vsub.f32 0.0, %v1102
      %v1215 = vmul.f32 %v1103, 1.442695
      %v1216 = vpow.pop %v1215
      %v1217 = vmul.f32 %v1104, 1.442695
      %v1218 = vpow.pop %v1217
      %v1219 = vmul.f32 %v1105, 1.442695
      %v1220 = vpow.pop %v1219
      %v1221 = vmul.f32 %v1106, 1.442695
      %v1222 = vpow.pop %v1221
      %v1223 = vmul.f32 %v1107, 1.442695
      %v1224 = vpow.pop %v1223
      %v1225 = vmul.f32 %v1108, 1.442695
      %v1226 = vpow.pop %v1225
      %v1227 = vmul.f32 %v1109, 1.442695
      %v1228 = vpow.pop %v1227
      %v1229 = vmul.f32 %v1110, 1.442695
      %v1230 = vpow.pop %v1229
      %v1231 = vmul.f32 %v1111, 1.442695
      %v1232 = vpow.pop %v1231
      %v1233 = vmul.f32 %v1112, 1.442695
      %v1234 = vpow.pop %v1233
      %v1235 = vmul.f32 %v1113, 1.442695
      %v1236 = vpow.pop %v1235
      %v1237 = vmul.f32 %v1114, 1.442695
      %v1238 = vpow.pop %v1237
      %v1239 = vmul.f32 %v1115, 1.442695
      %v1240 = vpow.pop %v1239
      %v1241 = vmul.f32 %v1116, 1.442695
      %v1242 = vpow.pop %v1241
      %v1243 = vmul.f32 %v1117, 1.442695
      %v1244 = vpow.pop %v1243
      %v1245 = vmul.f32 %v1118, 1.442695
      %v1246 = vpow.pop %v1245
      %v1247 = vmul.f32 %v1119, 1.442695
      %v1248 = vpow.pop %v1247
      %v1249 = vmul.f32 %v1120, 1.442695
      %v1250 = vpow.pop %v1249
      %v1251 = vmul.f32 %v1121, 1.442695
      %v1252 = vpow.pop %v1251
      %v1253 = vmul.f32 %v1122, 1.442695
      %v1254 = vpow.pop %v1253
      %v1255 = vmul.f32 %v1123, 1.442695
      %v1256 = vpow.pop %v1255
      %v1257 = vmul.f32 %v1124, 1.442695
      %v1258 = vpow.pop %v1257
      %v1259 = vmul.f32 %v1125, 1.442695
      %v1260 = vpow.pop %v1259
      %v1261 = vmul.f32 %v1126, 1.442695
      %v1262 = vpow.pop %v1261
      %v1263 = vmul.f32 %v1127, 1.442695
      %v1264 = vpow.pop %v1263
      %v1265 = vmul.f32 %v1128, 1.442695
      %v1266 = vpow.pop %v1265
      %v1267 = vmul.f32 %v1129, 1.442695
      %v1268 = vpow.pop %v1267
      %v1269 = vmul.f32 %v1130, 1.442695
      %v1270 = vpow.pop %v1269
      %v1271 = vmul.f32 %v1131, 1.442695
      %v1272 = vpow.pop %v1271
      %v1273 = vmul.f32 %v1132, 1.442695
      %v1274 = vpow.pop %v1273
      %v1275 = vmul.f32 %v1133, 1.442695
      %v1276 = vpow.pop %v1275
      %v1277 = vmul.f32 %v1134, 1.442695
      %v1278 = vpow.pop %v1277
      %v1279 = vmul.f32 %v1135, 1.442695
      %v1280 = vpow.pop %v1279
      %v1281 = vmul.f32 %v1136, 1.442695
      %v1282 = vpow.pop %v1281
      %v1283 = vmul.f32 %v1137, 1.442695
      %v1284 = vpow.pop %v1283
      %v1285 = vmul.f32 %v1138, 1.442695
      %v1286 = vpow.pop %v1285
      %v1287 = vmul.f32 %v1139, 1.442695
      %v1288 = vpow.pop %v1287
      %v1289 = vmul.f32 %v1140, 1.442695
      %v1290 = vpow.pop %v1289
      %v1291 = vmul.f32 %v1141, 1.442695
      %v1292 = vpow.pop %v1291
      %v1293 = vmul.f32 %v1142, 1.442695
      %v1294 = vpow.pop %v1293
      %v1295 = vmul.f32 %v1143, 1.442695
      %v1296 = vpow.pop %v1295
      %v1297 = vmul.f32 %v1144, 1.442695
      %v1298 = vpow.pop %v1297
      %v1299 = vmul.f32 %v1145, 1.442695
      %v1300 = vpow.pop %v1299
      %v1301 = vmul.f32 %v1146, 1.442695
      %v1302 = vpow.pop %v1301
      %v1303 = vmul.f32 %v1147, 1.442695
      %v1304 = vpow.pop %v1303
      %v1305 = vmul.f32 %v1148, 1.442695
      %v1306 = vpow.pop %v1305
      %v1307 = vmul.f32 %v1149, 1.442695
      %v1308 = vpow.pop %v1307
      %v1309 = vmul.f32 %v1150, 1.442695
      %v1310 = vpow.pop %v1309
      %v1311 = vmul.f32 %v1151, 1.442695
      %v1312 = vpow.pop %v1311
      %v1313 = vmul.f32 %v1152, 1.442695
      %v1314 = vpow.pop %v1313
      %v1315 = vmul.f32 %v1153, 1.442695
      %v1316 = vpow.pop %v1315
      %v1317 = vmul.f32 %v1154, 1.442695
      %v1318 = vpow.pop %v1317
      %v1319 = vmul.f32 %v1155, 1.442695
      %v1320 = vpow.pop %v1319
      %v1321 = vmul.f32 %v1156, 1.442695
      %v1322 = vpow.pop %v1321
      %v1323 = vmul.f32 %v1157, 1.442695
      %v1324 = vpow.pop %v1323
      %v1325 = vmul.f32 %v1158, 1.442695
      %v1326 = vpow.pop %v1325
      %v1327 = vmul.f32 %v1159, 1.442695
      %v1328 = vpow.pop %v1327
      %v1329 = vmul.f32 %v1160, 1.442695
      %v1330 = vpow.pop %v1329
      %v1331 = vmul.f32 %v1161, 1.442695
      %v1332 = vpow.pop %v1331
      %v1333 = vmul.f32 %v1162, 1.442695
      %v1334 = vpow.pop %v1333
      %v1335 = vmul.f32 %v1163, 1.442695
      %v1336 = vpow.pop %v1335
      %v1337 = vmul.f32 %v1164, 1.442695
      %v1338 = vpow.pop %v1337
      %v1339 = vmul.f32 %v1165, 1.442695
      %v1340 = vpow.pop %v1339
      %v1341 = vmul.f32 %v1166, 1.442695
      %v1342 = vpow.pop %v1341
      %v1343 = vmul.f32 %v1167, 1.442695
      %v1344 = vpow.pop %v1343
      %v1345 = vmul.f32 %v1168, 1.442695
      %v1346 = vpow.pop %v1345
      %v1347 = vmul.f32 %v1169, 1.442695
      %v1348 = vpow.pop %v1347
      %v1349 = vmul.f32 %v1170, 1.442695
      %v1350 = vpow.pop %v1349
      %v1351 = vmul.f32 %v1171, 1.442695
      %v1352 = vpow.pop %v1351
      %v1353 = vmul.f32 %v1172, 1.442695
      %v1354 = vpow.pop %v1353
      %v1355 = vmul.f32 %v1173, 1.442695
      %v1356 = vpow.pop %v1355
      %v1357 = vmul.f32 %v1174, 1.442695
      %v1358 = vpow.pop %v1357
      %v1359 = vmul.f32 %v1175, 1.442695
      %v1360 = vpow.pop %v1359
      %v1361 = vmul.f32 %v1176, 1.442695
      %v1362 = vpow.pop %v1361
      %v1363 = vmul.f32 %v1177, 1.442695
      %v1364 = vpow.pop %v1363
      %v1365 = vmul.f32 %v1178, 1.442695
      %v1366 = vpow.pop %v1365
      %v1367 = vmul.f32 %v1179, 1.442695
      %v1368 = vpow.pop %v1367
      %v1369 = vmul.f32 %v1180, 1.442695
      %v1370 = vpow.pop %v1369
      %v1371 = vmul.f32 %v1181, 1.442695
      %v1372 = vpow.pop %v1371
      %v1373 = vmul.f32 %v1182, 1.442695
      %v1374 = vpow.pop %v1373
      %v1375 = vmul.f32 %v1183, 1.442695
      %v1376 = vpow.pop %v1375
      %v1377 = vmul.f32 %v1184, 1.442695
      %v1378 = vpow.pop %v1377
      %v1379 = vmul.f32 %v1185, 1.442695
      %v1380 = vpow.pop %v1379
      %v1381 = vmul.f32 %v1186, 1.442695
      %v1382 = vpow.pop %v1381
      %v1383 = vmul.f32 %v1187, 1.442695
      %v1384 = vpow.pop %v1383
      %v1385 = vmul.f32 %v1188, 1.442695
      %v1386 = vpow.pop %v1385
      %v1387 = vmul.f32 %v1189, 1.442695
      %v1388 = vpow.pop %v1387
      %v1389 = vmul.f32 %v1190, 1.442695
      %v1390 = vpow.pop %v1389
      %v1391 = vmul.f32 %v1191, 1.442695
      %v1392 = vpow.pop %v1391
      %v1393 = vmul.f32 %v1192, 1.442695
      %v1394 = vpow.pop %v1393
      %v1395 = vmul.f32 %v1193, 1.442695
      %v1396 = vpow.pop %v1395
      %v1397 = vmul.f32 %v1194, 1.442695
      %v1398 = vpow.pop %v1397
      %v1399 = vmul.f32 %v1195, 1.442695
      %v1400 = vpow.pop %v1399
      %v1401 = vmul.f32 %v1196, 1.442695
      %v1402 = vpow.pop %v1401
      %v1403 = vmul.f32 %v1197, 1.442695
      %v1404 = vpow.pop %v1403
      %v1405 = vmul.f32 %v1198, 1.442695
      %v1406 = vpow.pop %v1405
      %v1407 = vmul.f32 %v1199, 1.442695
      %v1408 = vpow.pop %v1407
      %v1409 = vmul.f32 %v1200, 1.442695
      %v1410 = vpow.pop %v1409
      %v1411 = vmul.f32 %v1201, 1.442695
      %v1412 = vpow.pop %v1411
      %v1413 = vmul.f32 %v1202, 1.442695
      %v1414 = vpow.pop %v1413
      %v1415 = vmul.f32 %v1203, 1.442695
      %v1416 = vpow.pop %v1415
      %v1417 = vmul.f32 %v1204, 1.442695
      %v1418 = vpow.pop %v1417
      %v1419 = vmul.f32 %v1205, 1.442695
      %v1420 = vpow.pop %v1419
      %v1421 = vmul.f32 %v1206, 1.442695
      %v1422 = vpow.pop %v1421
      %v1423 = vmul.f32 %v1207, 1.442695
      %v1424 = vpow.pop %v1423
      %v1425 = vmul.f32 %v1208, 1.442695
      %v1426 = vpow.pop %v1425
      %v1427 = vmul.f32 %v1209, 1.442695
      %v1428 = vpow.pop %v1427
      %v1429 = vmul.f32 %v1210, 1.442695
      %v1430 = vpow.pop %v1429
      %v1431 = vmul.f32 %v1211, 1.442695
      %v1432 = vpow.pop %v1431
      %v1433 = vmul.f32 %v1212, 1.442695
      %v1434 = vpow.pop %v1433
      %v1435 = vmul.f32 %v1213, 1.442695
      %v1436 = vpow.pop %v1435
      %v1437 = vmul.f32 %v1214, 1.442695
      %v1438 = vpow.pop %v1437
      %v1439 = vmax.f32 %v430, 0.0
      %v1440 = vmax.f32 %v432, 0.0
      %v1441 = vmax.f32 %v591, 0.0
      %v1442 = vmax.f32 %v593, 0.0
      %v1443 = vmax.f32 %v752, 0.0
      %v1444 = vmax.f32 %v754, 0.0
      %v1445 = vmax.f32 %v913, 0.0
      %v1446 = vmax.f32 %v436, 0.0
      %v1447 = vmax.f32 %v438, 0.0
      %v1448 = vmax.f32 %v597, 0.0
      %v1449 = vmax.f32 %v599, 0.0
      %v1450 = vmax.f32 %v758, 0.0
      %v1451 = vmax.f32 %v760, 0.0
      %v1452 = vmax.f32 %v918, 0.0
      %v1453 = vmax.f32 %v442, 0.0
      %v1454 = vmax.f32 %v444, 0.0
      %v1455 = vmax.f32 %v603, 0.0
      %v1456 = vmax.f32 %v605, 0.0
      %v1457 = vmax.f32 %v764, 0.0
      %v1458 = vmax.f32 %v766, 0.0
      %v1459 = vmax.f32 %v923, 0.0
      %v1460 = vmax.f32 %v448, 0.0
      %v1461 = vmax.f32 %v450, 0.0
      %v1462 = vmax.f32 %v609, 0.0
      %v1463 = vmax.f32 %v611, 0.0
      %v1464 = vmax.f32 %v770, 0.0
      %v1465 = vmax.f32 %v772, 0.0
      %v1466 = vmax.f32 %v928, 0.0
      %v1467 = vmax.f32 %v454, 0.0
      %v1468 = vmax.f32 %v456, 0.0
      %v1469 = vmax.f32 %v615, 0.0
      %v1470 = vmax.f32 %v617, 0.0
      %v1471 = vmax.f32 %v776, 0.0
      %v1472 = vmax.f32 %v778, 0.0
      %v1473 = vmax.f32 %v933, 0.0
      %v1474 = vmax.f32 %v460, 0.0
      %v1475 = vmax.f32 %v462, 0.0
      %v1476 = vmax.f32 %v621, 0.0
      %v1477 = vmax.f32 %v623, 0.0
      %v1478 = vmax.f32 %v782, 0.0
      %v1479 = vmax.f32 %v784, 0.0
      %v1480 = vmax.f32 %v938, 0.0
      %v1481 = vmax.f32 %v466, 0.0
      %v1482 = vmax.f32 %v468, 0.0
      %v1483 = vmax.f32 %v627, 0.0
      %v1484 = vmax.f32 %v629, 0.0
      %v1485 = vmax.f32 %v788, 0.0
      %v1486 = vmax.f32 %v790, 0.0
      %v1487 = vmax.f32 %v943, 0.0
      %v1488 = vmax.f32 %v472, 0.0
      %v1489 = vmax.f32 %v474, 0.0
      %v1490 = vmax.f32 %v633, 0.0
      %v1491 = vmax.f32 %v635, 0.0
      %v1492 = vmax.f32 %v794, 0.0
      %v1493 = vmax.f32 %v796, 0.0
      %v1494 = vmax.f32 %v948, 0.0
      %v1495 = vmax.f32 %v478, 0.0
      %v1496 = vmax.f32 %v480, 0.0
      %v1497 = vmax.f32 %v639, 0.0
      %v1498 = vmax.f32 %v641, 0.0
      %v1499 = vmax.f32 %v800, 0.0
      %v1500 = vmax.f32 %v802, 0.0
      %v1501 = vmax.f32 %v953, 0.0
      %v1502 = vmax.f32 %v484, 0.0
      %v1503 = vmax.f32 %v486, 0.0
      %v1504 = vmax.f32 %v645, 0.0
      %v1505 = vmax.f32 %v647, 0.0
      %v1506 = vmax.f32 %v806, 0.0
      %v1507 = vmax.f32 %v808, 0.0
      %v1508 = vmax.f32 %v958, 0.0
      %v1509 = vmax.f32 %v490, 0.0
      %v1510 = vmax.f32 %v492, 0.0
      %v1511 = vmax.f32 %v651, 0.0
      %v1512 = vmax.f32 %v653, 0.0
      %v1513 = vmax.f32 %v812, 0.0
      %v1514 = vmax.f32 %v814, 0.0
      %v1515 = vmax.f32 %v963, 0.0
      %v1516 = vmax.f32 %v496, 0.0
      %v1517 = vmax.f32 %v498, 0.0
      %v1518 = vmax.f32 %v657, 0.0
      %v1519 = vmax.f32 %v659, 0.0
      %v1520 = vmax.f32 %v818, 0.0
      %v1521 = vmax.f32 %v820, 0.0
      %v1522 = vmax.f32 %v968, 0.0
      %v1523 = vmax.f32 %v502, 0.0
      %v1524 = vmax.f32 %v504, 0.0
      %v1525 = vmax.f32 %v663, 0.0
      %v1526 = vmax.f32 %v665, 0.0
      %v1527 = vmax.f32 %v824, 0.0
      %v1528 = vmax.f32 %v826, 0.0
      %v1529 = vmax.f32 %v973, 0.0
      %v1530 = vmax.f32 %v508, 0.0
      %v1531 = vmax.f32 %v510, 0.0
      %v1532 = vmax.f32 %v669, 0.0
      %v1533 = vmax.f32 %v671, 0.0
      %v1534 = vmax.f32 %v830, 0.0
      %v1535 = vmax.f32 %v832, 0.0
      %v1536 = vmax.f32 %v978, 0.0
      %v1537 = vmax.f32 %v514, 0.0
      %v1538 = vmax.f32 %v516, 0.0
      %v1539 = vmax.f32 %v675, 0.0
      %v1540 = vmax.f32 %v677, 0.0
      %v1541 = vmax.f32 %v836, 0.0
      %v1542 = vmax.f32 %v838, 0.0
      %v1543 = vmax.f32 %v983, 0.0
      %v1544 = vmax.f32 %v520, 0.0
      %v1545 = vmax.f32 %v522, 0.0
      %v1546 = vmax.f32 %v681, 0.0
      %v1547 = vmax.f32 %v683, 0.0
      %v1548 = vmax.f32 %v842, 0.0
      %v1549 = vmax.f32 %v844, 0.0
      %v1550 = vmax.f32 %v988, 0.0
      %v1551 = vadd.f32 %v1216, 1.0
      %v1552 = vlog2.pop %v1551
      %v1553 = vmul.f32 %v1552, 0.6931472
      %v1554 = vmul.f32 -0.5, %v1216
      %v1555 = vadd.f32 %v1554, 1.0
      %v1556 = vmul.f32 %v1555, %v1216
      %v1557 = vand.u32 2147483647, %v1216
      %vm1558 = vcmp.lt.f32.partialorder %v1557, 0.0004427343
      %v1559 = vsel %vm1558, %v1556, %v1553
      %v1560 = vadd.f32 %v1218, 1.0
      %v1561 = vlog2.pop %v1560
      %v1562 = vmul.f32 %v1561, 0.6931472
      %v1563 = vmul.f32 -0.5, %v1218
      %v1564 = vadd.f32 %v1563, 1.0
      %v1565 = vmul.f32 %v1564, %v1218
      %v1566 = vand.u32 2147483647, %v1218
      %vm1567 = vcmp.lt.f32.partialorder %v1566, 0.0004427343
      %v1568 = vsel %vm1567, %v1565, %v1562
      %v1569 = vadd.f32 %v1220, 1.0
      %v1570 = vlog2.pop %v1569
      %v1571 = vmul.f32 %v1570, 0.6931472
      %v1572 = vmul.f32 -0.5, %v1220
      %v1573 = vadd.f32 %v1572, 1.0
      %v1574 = vmul.f32 %v1573, %v1220
      %v1575 = vand.u32 2147483647, %v1220
      %vm1576 = vcmp.lt.f32.partialorder %v1575, 0.0004427343
      %v1577 = vsel %vm1576, %v1574, %v1571
      %v1578 = vadd.f32 %v1222, 1.0
      %v1579 = vlog2.pop %v1578
      %v1580 = vmul.f32 %v1579, 0.6931472
      %v1581 = vmul.f32 -0.5, %v1222
      %v1582 = vadd.f32 %v1581, 1.0
      %v1583 = vmul.f32 %v1582, %v1222
      %v1584 = vand.u32 2147483647, %v1222
      %vm1585 = vcmp.lt.f32.partialorder %v1584, 0.0004427343
      %v1586 = vsel %vm1585, %v1583, %v1580
      %v1587 = vadd.f32 %v1224, 1.0
      %v1588 = vlog2.pop %v1587
      %v1589 = vmul.f32 %v1588, 0.6931472
      %v1590 = vmul.f32 -0.5, %v1224
      %v1591 = vadd.f32 %v1590, 1.0
      %v1592 = vmul.f32 %v1591, %v1224
      %v1593 = vand.u32 2147483647, %v1224
      %vm1594 = vcmp.lt.f32.partialorder %v1593, 0.0004427343
      %v1595 = vsel %vm1594, %v1592, %v1589
      %v1596 = vadd.f32 %v1226, 1.0
      %v1597 = vlog2.pop %v1596
      %v1598 = vmul.f32 %v1597, 0.6931472
      %v1599 = vmul.f32 -0.5, %v1226
      %v1600 = vadd.f32 %v1599, 1.0
      %v1601 = vmul.f32 %v1600, %v1226
      %v1602 = vand.u32 2147483647, %v1226
      %vm1603 = vcmp.lt.f32.partialorder %v1602, 0.0004427343
      %v1604 = vsel %vm1603, %v1601, %v1598
      %v1605 = vadd.f32 %v1228, 1.0
      %v1606 = vlog2.pop %v1605
      %v1607 = vmul.f32 %v1606, 0.6931472
      %v1608 = vmul.f32 -0.5, %v1228
      %v1609 = vadd.f32 %v1608, 1.0
      %v1610 = vmul.f32 %v1609, %v1228
      %v1611 = vand.u32 2147483647, %v1228
      %vm1612 = vcmp.lt.f32.partialorder %v1611, 0.0004427343
      %v1613 = vsel %vm1612, %v1610, %v1607
      %v1614 = vadd.f32 %v1230, 1.0
      %v1615 = vlog2.pop %v1614
      %v1616 = vmul.f32 %v1615, 0.6931472
      %v1617 = vmul.f32 -0.5, %v1230
      %v1618 = vadd.f32 %v1617, 1.0
      %v1619 = vmul.f32 %v1618, %v1230
      %v1620 = vand.u32 2147483647, %v1230
      %vm1621 = vcmp.lt.f32.partialorder %v1620, 0.0004427343
      %v1622 = vsel %vm1621, %v1619, %v1616
      %v1623 = vadd.f32 %v1232, 1.0
      %v1624 = vlog2.pop %v1623
      %v1625 = vmul.f32 %v1624, 0.6931472
      %v1626 = vmul.f32 -0.5, %v1232
      %v1627 = vadd.f32 %v1626, 1.0
      %v1628 = vmul.f32 %v1627, %v1232
      %v1629 = vand.u32 2147483647, %v1232
      %vm1630 = vcmp.lt.f32.partialorder %v1629, 0.0004427343
      %v1631 = vsel %vm1630, %v1628, %v1625
      %v1632 = vadd.f32 %v1234, 1.0
      %v1633 = vlog2.pop %v1632
      %v1634 = vmul.f32 %v1633, 0.6931472
      %v1635 = vmul.f32 -0.5, %v1234
      %v1636 = vadd.f32 %v1635, 1.0
      %v1637 = vmul.f32 %v1636, %v1234
      %v1638 = vand.u32 2147483647, %v1234
      %vm1639 = vcmp.lt.f32.partialorder %v1638, 0.0004427343
      %v1640 = vsel %vm1639, %v1637, %v1634
      %v1641 = vadd.f32 %v1236, 1.0
      %v1642 = vlog2.pop %v1641
      %v1643 = vmul.f32 %v1642, 0.6931472
      %v1644 = vmul.f32 -0.5, %v1236
      %v1645 = vadd.f32 %v1644, 1.0
      %v1646 = vmul.f32 %v1645, %v1236
      %v1647 = vand.u32 2147483647, %v1236
      %vm1648 = vcmp.lt.f32.partialorder %v1647, 0.0004427343
      %v1649 = vsel %vm1648, %v1646, %v1643
      %v1650 = vadd.f32 %v1238, 1.0
      %v1651 = vlog2.pop %v1650
      %v1652 = vmul.f32 %v1651, 0.6931472
      %v1653 = vmul.f32 -0.5, %v1238
      %v1654 = vadd.f32 %v1653, 1.0
      %v1655 = vmul.f32 %v1654, %v1238
      %v1656 = vand.u32 2147483647, %v1238
      %vm1657 = vcmp.lt.f32.partialorder %v1656, 0.0004427343
      %v1658 = vsel %vm1657, %v1655, %v1652
      %v1659 = vadd.f32 %v1240, 1.0
      %v1660 = vlog2.pop %v1659
      %v1661 = vmul.f32 %v1660, 0.6931472
      %v1662 = vmul.f32 -0.5, %v1240
      %v1663 = vadd.f32 %v1662, 1.0
      %v1664 = vmul.f32 %v1663, %v1240
      %v1665 = vand.u32 2147483647, %v1240
      %vm1666 = vcmp.lt.f32.partialorder %v1665, 0.0004427343
      %v1667 = vsel %vm1666, %v1664, %v1661
      %v1668 = vadd.f32 %v1242, 1.0
      %v1669 = vlog2.pop %v1668
      %v1670 = vmul.f32 %v1669, 0.6931472
      %v1671 = vmul.f32 -0.5, %v1242
      %v1672 = vadd.f32 %v1671, 1.0
      %v1673 = vmul.f32 %v1672, %v1242
      %v1674 = vand.u32 2147483647, %v1242
      %vm1675 = vcmp.lt.f32.partialorder %v1674, 0.0004427343
      %v1676 = vsel %vm1675, %v1673, %v1670
      %v1677 = vadd.f32 %v1244, 1.0
      %v1678 = vlog2.pop %v1677
      %v1679 = vmul.f32 %v1678, 0.6931472
      %v1680 = vmul.f32 -0.5, %v1244
      %v1681 = vadd.f32 %v1680, 1.0
      %v1682 = vmul.f32 %v1681, %v1244
      %v1683 = vand.u32 2147483647, %v1244
      %vm1684 = vcmp.lt.f32.partialorder %v1683, 0.0004427343
      %v1685 = vsel %vm1684, %v1682, %v1679
      %v1686 = vadd.f32 %v1246, 1.0
      %v1687 = vlog2.pop %v1686
      %v1688 = vmul.f32 %v1687, 0.6931472
      %v1689 = vmul.f32 -0.5, %v1246
      %v1690 = vadd.f32 %v1689, 1.0
      %v1691 = vmul.f32 %v1690, %v1246
      %v1692 = vand.u32 2147483647, %v1246
      %vm1693 = vcmp.lt.f32.partialorder %v1692, 0.0004427343
      %v1694 = vsel %vm1693, %v1691, %v1688
      %v1695 = vadd.f32 %v1248, 1.0
      %v1696 = vlog2.pop %v1695
      %v1697 = vmul.f32 %v1696, 0.6931472
      %v1698 = vmul.f32 -0.5, %v1248
      %v1699 = vadd.f32 %v1698, 1.0
      %v1700 = vmul.f32 %v1699, %v1248
      %v1701 = vand.u32 2147483647, %v1248
      %vm1702 = vcmp.lt.f32.partialorder %v1701, 0.0004427343
      %v1703 = vsel %vm1702, %v1700, %v1697
      %v1704 = vadd.f32 %v1250, 1.0
      %v1705 = vlog2.pop %v1704
      %v1706 = vmul.f32 %v1705, 0.6931472
      %v1707 = vmul.f32 -0.5, %v1250
      %v1708 = vadd.f32 %v1707, 1.0
      %v1709 = vmul.f32 %v1708, %v1250
      %v1710 = vand.u32 2147483647, %v1250
      %vm1711 = vcmp.lt.f32.partialorder %v1710, 0.0004427343
      %v1712 = vsel %vm1711, %v1709, %v1706
      %v1713 = vadd.f32 %v1252, 1.0
      %v1714 = vlog2.pop %v1713
      %v1715 = vmul.f32 %v1714, 0.6931472
      %v1716 = vmul.f32 -0.5, %v1252
      %v1717 = vadd.f32 %v1716, 1.0
      %v1718 = vmul.f32 %v1717, %v1252
      %v1719 = vand.u32 2147483647, %v1252
      %vm1720 = vcmp.lt.f32.partialorder %v1719, 0.0004427343
      %v1721 = vsel %vm1720, %v1718, %v1715
      %v1722 = vadd.f32 %v1254, 1.0
      %v1723 = vlog2.pop %v1722
      %v1724 = vmul.f32 %v1723, 0.6931472
      %v1725 = vmul.f32 -0.5, %v1254
      %v1726 = vadd.f32 %v1725, 1.0
      %v1727 = vmul.f32 %v1726, %v1254
      %v1728 = vand.u32 2147483647, %v1254
      %vm1729 = vcmp.lt.f32.partialorder %v1728, 0.0004427343
      %v1730 = vsel %vm1729, %v1727, %v1724
      %v1731 = vadd.f32 %v1256, 1.0
      %v1732 = vlog2.pop %v1731
      %v1733 = vmul.f32 %v1732, 0.6931472
      %v1734 = vmul.f32 -0.5, %v1256
      %v1735 = vadd.f32 %v1734, 1.0
      %v1736 = vmul.f32 %v1735, %v1256
      %v1737 = vand.u32 2147483647, %v1256
      %vm1738 = vcmp.lt.f32.partialorder %v1737, 0.0004427343
      %v1739 = vsel %vm1738, %v1736, %v1733
      %v1740 = vadd.f32 %v1258, 1.0
      %v1741 = vlog2.pop %v1740
      %v1742 = vmul.f32 %v1741, 0.6931472
      %v1743 = vmul.f32 -0.5, %v1258
      %v1744 = vadd.f32 %v1743, 1.0
      %v1745 = vmul.f32 %v1744, %v1258
      %v1746 = vand.u32 2147483647, %v1258
      %vm1747 = vcmp.lt.f32.partialorder %v1746, 0.0004427343
      %v1748 = vsel %vm1747, %v1745, %v1742
      %v1749 = vadd.f32 %v1260, 1.0
      %v1750 = vlog2.pop %v1749
      %v1751 = vmul.f32 %v1750, 0.6931472
      %v1752 = vmul.f32 -0.5, %v1260
      %v1753 = vadd.f32 %v1752, 1.0
      %v1754 = vmul.f32 %v1753, %v1260
      %v1755 = vand.u32 2147483647, %v1260
      %vm1756 = vcmp.lt.f32.partialorder %v1755, 0.0004427343
      %v1757 = vsel %vm1756, %v1754, %v1751
      %v1758 = vadd.f32 %v1262, 1.0
      %v1759 = vlog2.pop %v1758
      %v1760 = vmul.f32 %v1759, 0.6931472
      %v1761 = vmul.f32 -0.5, %v1262
      %v1762 = vadd.f32 %v1761, 1.0
      %v1763 = vmul.f32 %v1762, %v1262
      %v1764 = vand.u32 2147483647, %v1262
      %vm1765 = vcmp.lt.f32.partialorder %v1764, 0.0004427343
      %v1766 = vsel %vm1765, %v1763, %v1760
      %v1767 = vadd.f32 %v1264, 1.0
      %v1768 = vlog2.pop %v1767
      %v1769 = vmul.f32 %v1768, 0.6931472
      %v1770 = vmul.f32 -0.5, %v1264
      %v1771 = vadd.f32 %v1770, 1.0
      %v1772 = vmul.f32 %v1771, %v1264
      %v1773 = vand.u32 2147483647, %v1264
      %vm1774 = vcmp.lt.f32.partialorder %v1773, 0.0004427343
      %v1775 = vsel %vm1774, %v1772, %v1769
      %v1776 = vadd.f32 %v1266, 1.0
      %v1777 = vlog2.pop %v1776
      %v1778 = vmul.f32 %v1777, 0.6931472
      %v1779 = vmul.f32 -0.5, %v1266
      %v1780 = vadd.f32 %v1779, 1.0
      %v1781 = vmul.f32 %v1780, %v1266
      %v1782 = vand.u32 2147483647, %v1266
      %vm1783 = vcmp.lt.f32.partialorder %v1782, 0.0004427343
      %v1784 = vsel %vm1783, %v1781, %v1778
      %v1785 = vadd.f32 %v1268, 1.0
      %v1786 = vlog2.pop %v1785
      %v1787 = vmul.f32 %v1786, 0.6931472
      %v1788 = vmul.f32 -0.5, %v1268
      %v1789 = vadd.f32 %v1788, 1.0
      %v1790 = vmul.f32 %v1789, %v1268
      %v1791 = vand.u32 2147483647, %v1268
      %vm1792 = vcmp.lt.f32.partialorder %v1791, 0.0004427343
      %v1793 = vsel %vm1792, %v1790, %v1787
      %v1794 = vadd.f32 %v1270, 1.0
      %v1795 = vlog2.pop %v1794
      %v1796 = vmul.f32 %v1795, 0.6931472
      %v1797 = vmul.f32 -0.5, %v1270
      %v1798 = vadd.f32 %v1797, 1.0
      %v1799 = vmul.f32 %v1798, %v1270
      %v1800 = vand.u32 2147483647, %v1270
      %vm1801 = vcmp.lt.f32.partialorder %v1800, 0.0004427343
      %v1802 = vsel %vm1801, %v1799, %v1796
      %v1803 = vadd.f32 %v1272, 1.0
      %v1804 = vlog2.pop %v1803
      %v1805 = vmul.f32 %v1804, 0.6931472
      %v1806 = vmul.f32 -0.5, %v1272
      %v1807 = vadd.f32 %v1806, 1.0
      %v1808 = vmul.f32 %v1807, %v1272
      %v1809 = vand.u32 2147483647, %v1272
      %vm1810 = vcmp.lt.f32.partialorder %v1809, 0.0004427343
      %v1811 = vsel %vm1810, %v1808, %v1805
      %v1812 = vadd.f32 %v1274, 1.0
      %v1813 = vlog2.pop %v1812
      %v1814 = vmul.f32 %v1813, 0.6931472
      %v1815 = vmul.f32 -0.5, %v1274
      %v1816 = vadd.f32 %v1815, 1.0
      %v1817 = vmul.f32 %v1816, %v1274
      %v1818 = vand.u32 2147483647, %v1274
      %vm1819 = vcmp.lt.f32.partialorder %v1818, 0.0004427343
      %v1820 = vsel %vm1819, %v1817, %v1814
      %v1821 = vadd.f32 %v1276, 1.0
      %v1822 = vlog2.pop %v1821
      %v1823 = vmul.f32 %v1822, 0.6931472
      %v1824 = vmul.f32 -0.5, %v1276
      %v1825 = vadd.f32 %v1824, 1.0
      %v1826 = vmul.f32 %v1825, %v1276
      %v1827 = vand.u32 2147483647, %v1276
      %vm1828 = vcmp.lt.f32.partialorder %v1827, 0.0004427343
      %v1829 = vsel %vm1828, %v1826, %v1823
      %v1830 = vadd.f32 %v1278, 1.0
      %v1831 = vlog2.pop %v1830
      %v1832 = vmul.f32 %v1831, 0.6931472
      %v1833 = vmul.f32 -0.5, %v1278
      %v1834 = vadd.f32 %v1833, 1.0
      %v1835 = vmul.f32 %v1834, %v1278
      %v1836 = vand.u32 2147483647, %v1278
      %vm1837 = vcmp.lt.f32.partialorder %v1836, 0.0004427343
      %v1838 = vsel %vm1837, %v1835, %v1832
      %v1839 = vadd.f32 %v1280, 1.0
      %v1840 = vlog2.pop %v1839
      %v1841 = vmul.f32 %v1840, 0.6931472
      %v1842 = vmul.f32 -0.5, %v1280
      %v1843 = vadd.f32 %v1842, 1.0
      %v1844 = vmul.f32 %v1843, %v1280
      %v1845 = vand.u32 2147483647, %v1280
      %vm1846 = vcmp.lt.f32.partialorder %v1845, 0.0004427343
      %v1847 = vsel %vm1846, %v1844, %v1841
      %v1848 = vadd.f32 %v1282, 1.0
      %v1849 = vlog2.pop %v1848
      %v1850 = vmul.f32 %v1849, 0.6931472
      %v1851 = vmul.f32 -0.5, %v1282
      %v1852 = vadd.f32 %v1851, 1.0
      %v1853 = vmul.f32 %v1852, %v1282
      %v1854 = vand.u32 2147483647, %v1282
      %vm1855 = vcmp.lt.f32.partialorder %v1854, 0.0004427343
      %v1856 = vsel %vm1855, %v1853, %v1850
      %v1857 = vadd.f32 %v1284, 1.0
      %v1858 = vlog2.pop %v1857
      %v1859 = vmul.f32 %v1858, 0.6931472
      %v1860 = vmul.f32 -0.5, %v1284
      %v1861 = vadd.f32 %v1860, 1.0
      %v1862 = vmul.f32 %v1861, %v1284
      %v1863 = vand.u32 2147483647, %v1284
      %vm1864 = vcmp.lt.f32.partialorder %v1863, 0.0004427343
      %v1865 = vsel %vm1864, %v1862, %v1859
      %v1866 = vadd.f32 %v1286, 1.0
      %v1867 = vlog2.pop %v1866
      %v1868 = vmul.f32 %v1867, 0.6931472
      %v1869 = vmul.f32 -0.5, %v1286
      %v1870 = vadd.f32 %v1869, 1.0
      %v1871 = vmul.f32 %v1870, %v1286
      %v1872 = vand.u32 2147483647, %v1286
      %vm1873 = vcmp.lt.f32.partialorder %v1872, 0.0004427343
      %v1874 = vsel %vm1873, %v1871, %v1868
      %v1875 = vadd.f32 %v1288, 1.0
      %v1876 = vlog2.pop %v1875
      %v1877 = vmul.f32 %v1876, 0.6931472
      %v1878 = vmul.f32 -0.5, %v1288
      %v1879 = vadd.f32 %v1878, 1.0
      %v1880 = vmul.f32 %v1879, %v1288
      %v1881 = vand.u32 2147483647, %v1288
      %vm1882 = vcmp.lt.f32.partialorder %v1881, 0.0004427343
      %v1883 = vsel %vm1882, %v1880, %v1877
      %v1884 = vadd.f32 %v1290, 1.0
      %v1885 = vlog2.pop %v1884
      %v1886 = vmul.f32 %v1885, 0.6931472
      %v1887 = vmul.f32 -0.5, %v1290
      %v1888 = vadd.f32 %v1887, 1.0
      %v1889 = vmul.f32 %v1888, %v1290
      %v1890 = vand.u32 2147483647, %v1290
      %vm1891 = vcmp.lt.f32.partialorder %v1890, 0.0004427343
      %v1892 = vsel %vm1891, %v1889, %v1886
      %v1893 = vadd.f32 %v1292, 1.0
      %v1894 = vlog2.pop %v1893
      %v1895 = vmul.f32 %v1894, 0.6931472
      %v1896 = vmul.f32 -0.5, %v1292
      %v1897 = vadd.f32 %v1896, 1.0
      %v1898 = vmul.f32 %v1897, %v1292
      %v1899 = vand.u32 2147483647, %v1292
      %vm1900 = vcmp.lt.f32.partialorder %v1899, 0.0004427343
      %v1901 = vsel %vm1900, %v1898, %v1895
      %v1902 = vadd.f32 %v1294, 1.0
      %v1903 = vlog2.pop %v1902
      %v1904 = vmul.f32 %v1903, 0.6931472
      %v1905 = vmul.f32 -0.5, %v1294
      %v1906 = vadd.f32 %v1905, 1.0
      %v1907 = vmul.f32 %v1906, %v1294
      %v1908 = vand.u32 2147483647, %v1294
      %vm1909 = vcmp.lt.f32.partialorder %v1908, 0.0004427343
      %v1910 = vsel %vm1909, %v1907, %v1904
      %v1911 = vadd.f32 %v1296, 1.0
      %v1912 = vlog2.pop %v1911
      %v1913 = vmul.f32 %v1912, 0.6931472
      %v1914 = vmul.f32 -0.5, %v1296
      %v1915 = vadd.f32 %v1914, 1.0
      %v1916 = vmul.f32 %v1915, %v1296
      %v1917 = vand.u32 2147483647, %v1296
      %vm1918 = vcmp.lt.f32.partialorder %v1917, 0.0004427343
      %v1919 = vsel %vm1918, %v1916, %v1913
      %v1920 = vadd.f32 %v1298, 1.0
      %v1921 = vlog2.pop %v1920
      %v1922 = vmul.f32 %v1921, 0.6931472
      %v1923 = vmul.f32 -0.5, %v1298
      %v1924 = vadd.f32 %v1923, 1.0
      %v1925 = vmul.f32 %v1924, %v1298
      %v1926 = vand.u32 2147483647, %v1298
      %vm1927 = vcmp.lt.f32.partialorder %v1926, 0.0004427343
      %v1928 = vsel %vm1927, %v1925, %v1922
      %v1929 = vadd.f32 %v1300, 1.0
      %v1930 = vlog2.pop %v1929
      %v1931 = vmul.f32 %v1930, 0.6931472
      %v1932 = vmul.f32 -0.5, %v1300
      %v1933 = vadd.f32 %v1932, 1.0
      %v1934 = vmul.f32 %v1933, %v1300
      %v1935 = vand.u32 2147483647, %v1300
      %vm1936 = vcmp.lt.f32.partialorder %v1935, 0.0004427343
      %v1937 = vsel %vm1936, %v1934, %v1931
      %v1938 = vadd.f32 %v1302, 1.0
      %v1939 = vlog2.pop %v1938
      %v1940 = vmul.f32 %v1939, 0.6931472
      %v1941 = vmul.f32 -0.5, %v1302
      %v1942 = vadd.f32 %v1941, 1.0
      %v1943 = vmul.f32 %v1942, %v1302
      %v1944 = vand.u32 2147483647, %v1302
      %vm1945 = vcmp.lt.f32.partialorder %v1944, 0.0004427343
      %v1946 = vsel %vm1945, %v1943, %v1940
      %v1947 = vadd.f32 %v1304, 1.0
      %v1948 = vlog2.pop %v1947
      %v1949 = vmul.f32 %v1948, 0.6931472
      %v1950 = vmul.f32 -0.5, %v1304
      %v1951 = vadd.f32 %v1950, 1.0
      %v1952 = vmul.f32 %v1951, %v1304
      %v1953 = vand.u32 2147483647, %v1304
      %vm1954 = vcmp.lt.f32.partialorder %v1953, 0.0004427343
      %v1955 = vsel %vm1954, %v1952, %v1949
      %v1956 = vadd.f32 %v1306, 1.0
      %v1957 = vlog2.pop %v1956
      %v1958 = vmul.f32 %v1957, 0.6931472
      %v1959 = vmul.f32 -0.5, %v1306
      %v1960 = vadd.f32 %v1959, 1.0
      %v1961 = vmul.f32 %v1960, %v1306
      %v1962 = vand.u32 2147483647, %v1306
      %vm1963 = vcmp.lt.f32.partialorder %v1962, 0.0004427343
      %v1964 = vsel %vm1963, %v1961, %v1958
      %v1965 = vadd.f32 %v1308, 1.0
      %v1966 = vlog2.pop %v1965
      %v1967 = vmul.f32 %v1966, 0.6931472
      %v1968 = vmul.f32 -0.5, %v1308
      %v1969 = vadd.f32 %v1968, 1.0
      %v1970 = vmul.f32 %v1969, %v1308
      %v1971 = vand.u32 2147483647, %v1308
      %vm1972 = vcmp.lt.f32.partialorder %v1971, 0.0004427343
      %v1973 = vsel %vm1972, %v1970, %v1967
      %v1974 = vadd.f32 %v1310, 1.0
      %v1975 = vlog2.pop %v1974
      %v1976 = vmul.f32 %v1975, 0.6931472
      %v1977 = vmul.f32 -0.5, %v1310
      %v1978 = vadd.f32 %v1977, 1.0
      %v1979 = vmul.f32 %v1978, %v1310
      %v1980 = vand.u32 2147483647, %v1310
      %vm1981 = vcmp.lt.f32.partialorder %v1980, 0.0004427343
      %v1982 = vsel %vm1981, %v1979, %v1976
      %v1983 = vadd.f32 %v1312, 1.0
      %v1984 = vlog2.pop %v1983
      %v1985 = vmul.f32 %v1984, 0.6931472
      %v1986 = vmul.f32 -0.5, %v1312
      %v1987 = vadd.f32 %v1986, 1.0
      %v1988 = vmul.f32 %v1987, %v1312
      %v1989 = vand.u32 2147483647, %v1312
      %vm1990 = vcmp.lt.f32.partialorder %v1989, 0.0004427343
      %v1991 = vsel %vm1990, %v1988, %v1985
      %v1992 = vadd.f32 %v1314, 1.0
      %v1993 = vlog2.pop %v1992
      %v1994 = vmul.f32 %v1993, 0.6931472
      %v1995 = vmul.f32 -0.5, %v1314
      %v1996 = vadd.f32 %v1995, 1.0
      %v1997 = vmul.f32 %v1996, %v1314
      %v1998 = vand.u32 2147483647, %v1314
      %vm1999 = vcmp.lt.f32.partialorder %v1998, 0.0004427343
      %v2000 = vsel %vm1999, %v1997, %v1994
      %v2001 = vadd.f32 %v1316, 1.0
      %v2002 = vlog2.pop %v2001
      %v2003 = vmul.f32 %v2002, 0.6931472
      %v2004 = vmul.f32 -0.5, %v1316
      %v2005 = vadd.f32 %v2004, 1.0
      %v2006 = vmul.f32 %v2005, %v1316
      %v2007 = vand.u32 2147483647, %v1316
      %vm2008 = vcmp.lt.f32.partialorder %v2007, 0.0004427343
      %v2009 = vsel %vm2008, %v2006, %v2003
      %v2010 = vadd.f32 %v1318, 1.0
      %v2011 = vlog2.pop %v2010
      %v2012 = vmul.f32 %v2011, 0.6931472
      %v2013 = vmul.f32 -0.5, %v1318
      %v2014 = vadd.f32 %v2013, 1.0
      %v2015 = vmul.f32 %v2014, %v1318
      %v2016 = vand.u32 2147483647, %v1318
      %vm2017 = vcmp.lt.f32.partialorder %v2016, 0.0004427343
      %v2018 = vsel %vm2017, %v2015, %v2012
      %v2019 = vadd.f32 %v1320, 1.0
      %v2020 = vlog2.pop %v2019
      %v2021 = vmul.f32 %v2020, 0.6931472
      %v2022 = vmul.f32 -0.5, %v1320
      %v2023 = vadd.f32 %v2022, 1.0
      %v2024 = vmul.f32 %v2023, %v1320
      %v2025 = vand.u32 2147483647, %v1320
      %vm2026 = vcmp.lt.f32.partialorder %v2025, 0.0004427343
      %v2027 = vsel %vm2026, %v2024, %v2021
      %v2028 = vadd.f32 %v1322, 1.0
      %v2029 = vlog2.pop %v2028
      %v2030 = vmul.f32 %v2029, 0.6931472
      %v2031 = vmul.f32 -0.5, %v1322
      %v2032 = vadd.f32 %v2031, 1.0
      %v2033 = vmul.f32 %v2032, %v1322
      %v2034 = vand.u32 2147483647, %v1322
      %vm2035 = vcmp.lt.f32.partialorder %v2034, 0.0004427343
      %v2036 = vsel %vm2035, %v2033, %v2030
      %v2037 = vadd.f32 %v1324, 1.0
      %v2038 = vlog2.pop %v2037
      %v2039 = vmul.f32 %v2038, 0.6931472
      %v2040 = vmul.f32 -0.5, %v1324
      %v2041 = vadd.f32 %v2040, 1.0
      %v2042 = vmul.f32 %v2041, %v1324
      %v2043 = vand.u32 2147483647, %v1324
      %vm2044 = vcmp.lt.f32.partialorder %v2043, 0.0004427343
      %v2045 = vsel %vm2044, %v2042, %v2039
      %v2046 = vadd.f32 %v1326, 1.0
      %v2047 = vlog2.pop %v2046
      %v2048 = vmul.f32 %v2047, 0.6931472
      %v2049 = vmul.f32 -0.5, %v1326
      %v2050 = vadd.f32 %v2049, 1.0
      %v2051 = vmul.f32 %v2050, %v1326
      %v2052 = vand.u32 2147483647, %v1326
      %vm2053 = vcmp.lt.f32.partialorder %v2052, 0.0004427343
      %v2054 = vsel %vm2053, %v2051, %v2048
      %v2055 = vadd.f32 %v1328, 1.0
      %v2056 = vlog2.pop %v2055
      %v2057 = vmul.f32 %v2056, 0.6931472
      %v2058 = vmul.f32 -0.5, %v1328
      %v2059 = vadd.f32 %v2058, 1.0
      %v2060 = vmul.f32 %v2059, %v1328
      %v2061 = vand.u32 2147483647, %v1328
      %vm2062 = vcmp.lt.f32.partialorder %v2061, 0.0004427343
      %v2063 = vsel %vm2062, %v2060, %v2057
      %v2064 = vadd.f32 %v1330, 1.0
      %v2065 = vlog2.pop %v2064
      %v2066 = vmul.f32 %v2065, 0.6931472
      %v2067 = vmul.f32 -0.5, %v1330
      %v2068 = vadd.f32 %v2067, 1.0
      %v2069 = vmul.f32 %v2068, %v1330
      %v2070 = vand.u32 2147483647, %v1330
      %vm2071 = vcmp.lt.f32.partialorder %v2070, 0.0004427343
      %v2072 = vsel %vm2071, %v2069, %v2066
      %v2073 = vadd.f32 %v1332, 1.0
      %v2074 = vlog2.pop %v2073
      %v2075 = vmul.f32 %v2074, 0.6931472
      %v2076 = vmul.f32 -0.5, %v1332
      %v2077 = vadd.f32 %v2076, 1.0
      %v2078 = vmul.f32 %v2077, %v1332
      %v2079 = vand.u32 2147483647, %v1332
      %vm2080 = vcmp.lt.f32.partialorder %v2079, 0.0004427343
      %v2081 = vsel %vm2080, %v2078, %v2075
      %v2082 = vadd.f32 %v1334, 1.0
      %v2083 = vlog2.pop %v2082
      %v2084 = vmul.f32 %v2083, 0.6931472
      %v2085 = vmul.f32 -0.5, %v1334
      %v2086 = vadd.f32 %v2085, 1.0
      %v2087 = vmul.f32 %v2086, %v1334
      %v2088 = vand.u32 2147483647, %v1334
      %vm2089 = vcmp.lt.f32.partialorder %v2088, 0.0004427343
      %v2090 = vsel %vm2089, %v2087, %v2084
      %v2091 = vadd.f32 %v1336, 1.0
      %v2092 = vlog2.pop %v2091
      %v2093 = vmul.f32 %v2092, 0.6931472
      %v2094 = vmul.f32 -0.5, %v1336
      %v2095 = vadd.f32 %v2094, 1.0
      %v2096 = vmul.f32 %v2095, %v1336
      %v2097 = vand.u32 2147483647, %v1336
      %vm2098 = vcmp.lt.f32.partialorder %v2097, 0.0004427343
      %v2099 = vsel %vm2098, %v2096, %v2093
      %v2100 = vadd.f32 %v1338, 1.0
      %v2101 = vlog2.pop %v2100
      %v2102 = vmul.f32 %v2101, 0.6931472
      %v2103 = vmul.f32 -0.5, %v1338
      %v2104 = vadd.f32 %v2103, 1.0
      %v2105 = vmul.f32 %v2104, %v1338
      %v2106 = vand.u32 2147483647, %v1338
      %vm2107 = vcmp.lt.f32.partialorder %v2106, 0.0004427343
      %v2108 = vsel %vm2107, %v2105, %v2102
      %v2109 = vadd.f32 %v1340, 1.0
      %v2110 = vlog2.pop %v2109
      %v2111 = vmul.f32 %v2110, 0.6931472
      %v2112 = vmul.f32 -0.5, %v1340
      %v2113 = vadd.f32 %v2112, 1.0
      %v2114 = vmul.f32 %v2113, %v1340
      %v2115 = vand.u32 2147483647, %v1340
      %vm2116 = vcmp.lt.f32.partialorder %v2115, 0.0004427343
      %v2117 = vsel %vm2116, %v2114, %v2111
      %v2118 = vadd.f32 %v1342, 1.0
      %v2119 = vlog2.pop %v2118
      %v2120 = vmul.f32 %v2119, 0.6931472
      %v2121 = vmul.f32 -0.5, %v1342
      %v2122 = vadd.f32 %v2121, 1.0
      %v2123 = vmul.f32 %v2122, %v1342
      %v2124 = vand.u32 2147483647, %v1342
      %vm2125 = vcmp.lt.f32.partialorder %v2124, 0.0004427343
      %v2126 = vsel %vm2125, %v2123, %v2120
      %v2127 = vadd.f32 %v1344, 1.0
      %v2128 = vlog2.pop %v2127
      %v2129 = vmul.f32 %v2128, 0.6931472
      %v2130 = vmul.f32 -0.5, %v1344
      %v2131 = vadd.f32 %v2130, 1.0
      %v2132 = vmul.f32 %v2131, %v1344
      %v2133 = vand.u32 2147483647, %v1344
      %vm2134 = vcmp.lt.f32.partialorder %v2133, 0.0004427343
      %v2135 = vsel %vm2134, %v2132, %v2129
      %v2136 = vadd.f32 %v1346, 1.0
      %v2137 = vlog2.pop %v2136
      %v2138 = vmul.f32 %v2137, 0.6931472
      %v2139 = vmul.f32 -0.5, %v1346
      %v2140 = vadd.f32 %v2139, 1.0
      %v2141 = vmul.f32 %v2140, %v1346
      %v2142 = vand.u32 2147483647, %v1346
      %vm2143 = vcmp.lt.f32.partialorder %v2142, 0.0004427343
      %v2144 = vsel %vm2143, %v2141, %v2138
      %v2145 = vadd.f32 %v1348, 1.0
      %v2146 = vlog2.pop %v2145
      %v2147 = vmul.f32 %v2146, 0.6931472
      %v2148 = vmul.f32 -0.5, %v1348
      %v2149 = vadd.f32 %v2148, 1.0
      %v2150 = vmul.f32 %v2149, %v1348
      %v2151 = vand.u32 2147483647, %v1348
      %vm2152 = vcmp.lt.f32.partialorder %v2151, 0.0004427343
      %v2153 = vsel %vm2152, %v2150, %v2147
      %v2154 = vadd.f32 %v1350, 1.0
      %v2155 = vlog2.pop %v2154
      %v2156 = vmul.f32 %v2155, 0.6931472
      %v2157 = vmul.f32 -0.5, %v1350
      %v2158 = vadd.f32 %v2157, 1.0
      %v2159 = vmul.f32 %v2158, %v1350
      %v2160 = vand.u32 2147483647, %v1350
      %vm2161 = vcmp.lt.f32.partialorder %v2160, 0.0004427343
      %v2162 = vsel %vm2161, %v2159, %v2156
      %v2163 = vadd.f32 %v1352, 1.0
      %v2164 = vlog2.pop %v2163
      %v2165 = vmul.f32 %v2164, 0.6931472
      %v2166 = vmul.f32 -0.5, %v1352
      %v2167 = vadd.f32 %v2166, 1.0
      %v2168 = vmul.f32 %v2167, %v1352
      %v2169 = vand.u32 2147483647, %v1352
      %vm2170 = vcmp.lt.f32.partialorder %v2169, 0.0004427343
      %v2171 = vsel %vm2170, %v2168, %v2165
      %v2172 = vadd.f32 %v1354, 1.0
      %v2173 = vlog2.pop %v2172
      %v2174 = vmul.f32 %v2173, 0.6931472
      %v2175 = vmul.f32 -0.5, %v1354
      %v2176 = vadd.f32 %v2175, 1.0
      %v2177 = vmul.f32 %v2176, %v1354
      %v2178 = vand.u32 2147483647, %v1354
      %vm2179 = vcmp.lt.f32.partialorder %v2178, 0.0004427343
      %v2180 = vsel %vm2179, %v2177, %v2174
      %v2181 = vadd.f32 %v1356, 1.0
      %v2182 = vlog2.pop %v2181
      %v2183 = vmul.f32 %v2182, 0.6931472
      %v2184 = vmul.f32 -0.5, %v1356
      %v2185 = vadd.f32 %v2184, 1.0
      %v2186 = vmul.f32 %v2185, %v1356
      %v2187 = vand.u32 2147483647, %v1356
      %vm2188 = vcmp.lt.f32.partialorder %v2187, 0.0004427343
      %v2189 = vsel %vm2188, %v2186, %v2183
      %v2190 = vadd.f32 %v1358, 1.0
      %v2191 = vlog2.pop %v2190
      %v2192 = vmul.f32 %v2191, 0.6931472
      %v2193 = vmul.f32 -0.5, %v1358
      %v2194 = vadd.f32 %v2193, 1.0
      %v2195 = vmul.f32 %v2194, %v1358
      %v2196 = vand.u32 2147483647, %v1358
      %vm2197 = vcmp.lt.f32.partialorder %v2196, 0.0004427343
      %v2198 = vsel %vm2197, %v2195, %v2192
      %v2199 = vadd.f32 %v1360, 1.0
      %v2200 = vlog2.pop %v2199
      %v2201 = vmul.f32 %v2200, 0.6931472
      %v2202 = vmul.f32 -0.5, %v1360
      %v2203 = vadd.f32 %v2202, 1.0
      %v2204 = vmul.f32 %v2203, %v1360
      %v2205 = vand.u32 2147483647, %v1360
      %vm2206 = vcmp.lt.f32.partialorder %v2205, 0.0004427343
      %v2207 = vsel %vm2206, %v2204, %v2201
      %v2208 = vadd.f32 %v1362, 1.0
      %v2209 = vlog2.pop %v2208
      %v2210 = vmul.f32 %v2209, 0.6931472
      %v2211 = vmul.f32 -0.5, %v1362
      %v2212 = vadd.f32 %v2211, 1.0
      %v2213 = vmul.f32 %v2212, %v1362
      %v2214 = vand.u32 2147483647, %v1362
      %vm2215 = vcmp.lt.f32.partialorder %v2214, 0.0004427343
      %v2216 = vsel %vm2215, %v2213, %v2210
      %v2217 = vadd.f32 %v1364, 1.0
      %v2218 = vlog2.pop %v2217
      %v2219 = vmul.f32 %v2218, 0.6931472
      %v2220 = vmul.f32 -0.5, %v1364
      %v2221 = vadd.f32 %v2220, 1.0
      %v2222 = vmul.f32 %v2221, %v1364
      %v2223 = vand.u32 2147483647, %v1364
      %vm2224 = vcmp.lt.f32.partialorder %v2223, 0.0004427343
      %v2225 = vsel %vm2224, %v2222, %v2219
      %v2226 = vadd.f32 %v1366, 1.0
      %v2227 = vlog2.pop %v2226
      %v2228 = vmul.f32 %v2227, 0.6931472
      %v2229 = vmul.f32 -0.5, %v1366
      %v2230 = vadd.f32 %v2229, 1.0
      %v2231 = vmul.f32 %v2230, %v1366
      %v2232 = vand.u32 2147483647, %v1366
      %vm2233 = vcmp.lt.f32.partialorder %v2232, 0.0004427343
      %v2234 = vsel %vm2233, %v2231, %v2228
      %v2235 = vadd.f32 %v1368, 1.0
      %v2236 = vlog2.pop %v2235
      %v2237 = vmul.f32 %v2236, 0.6931472
      %v2238 = vmul.f32 -0.5, %v1368
      %v2239 = vadd.f32 %v2238, 1.0
      %v2240 = vmul.f32 %v2239, %v1368
      %v2241 = vand.u32 2147483647, %v1368
      %vm2242 = vcmp.lt.f32.partialorder %v2241, 0.0004427343
      %v2243 = vsel %vm2242, %v2240, %v2237
      %v2244 = vadd.f32 %v1370, 1.0
      %v2245 = vlog2.pop %v2244
      %v2246 = vmul.f32 %v2245, 0.6931472
      %v2247 = vmul.f32 -0.5, %v1370
      %v2248 = vadd.f32 %v2247, 1.0
      %v2249 = vmul.f32 %v2248, %v1370
      %v2250 = vand.u32 2147483647, %v1370
      %vm2251 = vcmp.lt.f32.partialorder %v2250, 0.0004427343
      %v2252 = vsel %vm2251, %v2249, %v2246
      %v2253 = vadd.f32 %v1372, 1.0
      %v2254 = vlog2.pop %v2253
      %v2255 = vmul.f32 %v2254, 0.6931472
      %v2256 = vmul.f32 -0.5, %v1372
      %v2257 = vadd.f32 %v2256, 1.0
      %v2258 = vmul.f32 %v2257, %v1372
      %v2259 = vand.u32 2147483647, %v1372
      %vm2260 = vcmp.lt.f32.partialorder %v2259, 0.0004427343
      %v2261 = vsel %vm2260, %v2258, %v2255
      %v2262 = vadd.f32 %v1374, 1.0
      %v2263 = vlog2.pop %v2262
      %v2264 = vmul.f32 %v2263, 0.6931472
      %v2265 = vmul.f32 -0.5, %v1374
      %v2266 = vadd.f32 %v2265, 1.0
      %v2267 = vmul.f32 %v2266, %v1374
      %v2268 = vand.u32 2147483647, %v1374
      %vm2269 = vcmp.lt.f32.partialorder %v2268, 0.0004427343
      %v2270 = vsel %vm2269, %v2267, %v2264
      %v2271 = vadd.f32 %v1376, 1.0
      %v2272 = vlog2.pop %v2271
      %v2273 = vmul.f32 %v2272, 0.6931472
      %v2274 = vmul.f32 -0.5, %v1376
      %v2275 = vadd.f32 %v2274, 1.0
      %v2276 = vmul.f32 %v2275, %v1376
      %v2277 = vand.u32 2147483647, %v1376
      %vm2278 = vcmp.lt.f32.partialorder %v2277, 0.0004427343
      %v2279 = vsel %vm2278, %v2276, %v2273
      %v2280 = vadd.f32 %v1378, 1.0
      %v2281 = vlog2.pop %v2280
      %v2282 = vmul.f32 %v2281, 0.6931472
      %v2283 = vmul.f32 -0.5, %v1378
      %v2284 = vadd.f32 %v2283, 1.0
      %v2285 = vmul.f32 %v2284, %v1378
      %v2286 = vand.u32 2147483647, %v1378
      %vm2287 = vcmp.lt.f32.partialorder %v2286, 0.0004427343
      %v2288 = vsel %vm2287, %v2285, %v2282
      %v2289 = vadd.f32 %v1380, 1.0
      %v2290 = vlog2.pop %v2289
      %v2291 = vmul.f32 %v2290, 0.6931472
      %v2292 = vmul.f32 -0.5, %v1380
      %v2293 = vadd.f32 %v2292, 1.0
      %v2294 = vmul.f32 %v2293, %v1380
      %v2295 = vand.u32 2147483647, %v1380
      %vm2296 = vcmp.lt.f32.partialorder %v2295, 0.0004427343
      %v2297 = vsel %vm2296, %v2294, %v2291
      %v2298 = vadd.f32 %v1382, 1.0
      %v2299 = vlog2.pop %v2298
      %v2300 = vmul.f32 %v2299, 0.6931472
      %v2301 = vmul.f32 -0.5, %v1382
      %v2302 = vadd.f32 %v2301, 1.0
      %v2303 = vmul.f32 %v2302, %v1382
      %v2304 = vand.u32 2147483647, %v1382
      %vm2305 = vcmp.lt.f32.partialorder %v2304, 0.0004427343
      %v2306 = vsel %vm2305, %v2303, %v2300
      %v2307 = vadd.f32 %v1384, 1.0
      %v2308 = vlog2.pop %v2307
      %v2309 = vmul.f32 %v2308, 0.6931472
      %v2310 = vmul.f32 -0.5, %v1384
      %v2311 = vadd.f32 %v2310, 1.0
      %v2312 = vmul.f32 %v2311, %v1384
      %v2313 = vand.u32 2147483647, %v1384
      %vm2314 = vcmp.lt.f32.partialorder %v2313, 0.0004427343
      %v2315 = vsel %vm2314, %v2312, %v2309
      %v2316 = vadd.f32 %v1386, 1.0
      %v2317 = vlog2.pop %v2316
      %v2318 = vmul.f32 %v2317, 0.6931472
      %v2319 = vmul.f32 -0.5, %v1386
      %v2320 = vadd.f32 %v2319, 1.0
      %v2321 = vmul.f32 %v2320, %v1386
      %v2322 = vand.u32 2147483647, %v1386
      %vm2323 = vcmp.lt.f32.partialorder %v2322, 0.0004427343
      %v2324 = vsel %vm2323, %v2321, %v2318
      %v2325 = vadd.f32 %v1388, 1.0
      %v2326 = vlog2.pop %v2325
      %v2327 = vmul.f32 %v2326, 0.6931472
      %v2328 = vmul.f32 -0.5, %v1388
      %v2329 = vadd.f32 %v2328, 1.0
      %v2330 = vmul.f32 %v2329, %v1388
      %v2331 = vand.u32 2147483647, %v1388
      %vm2332 = vcmp.lt.f32.partialorder %v2331, 0.0004427343
      %v2333 = vsel %vm2332, %v2330, %v2327
      %v2334 = vadd.f32 %v1390, 1.0
      %v2335 = vlog2.pop %v2334
      %v2336 = vmul.f32 %v2335, 0.6931472
      %v2337 = vmul.f32 -0.5, %v1390
      %v2338 = vadd.f32 %v2337, 1.0
      %v2339 = vmul.f32 %v2338, %v1390
      %v2340 = vand.u32 2147483647, %v1390
      %vm2341 = vcmp.lt.f32.partialorder %v2340, 0.0004427343
      %v2342 = vsel %vm2341, %v2339, %v2336
      %v2343 = vadd.f32 %v1392, 1.0
      %v2344 = vlog2.pop %v2343
      %v2345 = vmul.f32 %v2344, 0.6931472
      %v2346 = vmul.f32 -0.5, %v1392
      %v2347 = vadd.f32 %v2346, 1.0
      %v2348 = vmul.f32 %v2347, %v1392
      %v2349 = vand.u32 2147483647, %v1392
      %vm2350 = vcmp.lt.f32.partialorder %v2349, 0.0004427343
      %v2351 = vsel %vm2350, %v2348, %v2345
      %v2352 = vadd.f32 %v1394, 1.0
      %v2353 = vlog2.pop %v2352
      %v2354 = vmul.f32 %v2353, 0.6931472
      %v2355 = vmul.f32 -0.5, %v1394
      %v2356 = vadd.f32 %v2355, 1.0
      %v2357 = vmul.f32 %v2356, %v1394
      %v2358 = vand.u32 2147483647, %v1394
      %vm2359 = vcmp.lt.f32.partialorder %v2358, 0.0004427343
      %v2360 = vsel %vm2359, %v2357, %v2354
      %v2361 = vadd.f32 %v1396, 1.0
      %v2362 = vlog2.pop %v2361
      %v2363 = vmul.f32 %v2362, 0.6931472
      %v2364 = vmul.f32 -0.5, %v1396
      %v2365 = vadd.f32 %v2364, 1.0
      %v2366 = vmul.f32 %v2365, %v1396
      %v2367 = vand.u32 2147483647, %v1396
      %vm2368 = vcmp.lt.f32.partialorder %v2367, 0.0004427343
      %v2369 = vsel %vm2368, %v2366, %v2363
      %v2370 = vadd.f32 %v1398, 1.0
      %v2371 = vlog2.pop %v2370
      %v2372 = vmul.f32 %v2371, 0.6931472
      %v2373 = vmul.f32 -0.5, %v1398
      %v2374 = vadd.f32 %v2373, 1.0
      %v2375 = vmul.f32 %v2374, %v1398
      %v2376 = vand.u32 2147483647, %v1398
      %vm2377 = vcmp.lt.f32.partialorder %v2376, 0.0004427343
      %v2378 = vsel %vm2377, %v2375, %v2372
      %v2379 = vadd.f32 %v1400, 1.0
      %v2380 = vlog2.pop %v2379
      %v2381 = vmul.f32 %v2380, 0.6931472
      %v2382 = vmul.f32 -0.5, %v1400
      %v2383 = vadd.f32 %v2382, 1.0
      %v2384 = vmul.f32 %v2383, %v1400
      %v2385 = vand.u32 2147483647, %v1400
      %vm2386 = vcmp.lt.f32.partialorder %v2385, 0.0004427343
      %v2387 = vsel %vm2386, %v2384, %v2381
      %v2388 = vadd.f32 %v1402, 1.0
      %v2389 = vlog2.pop %v2388
      %v2390 = vmul.f32 %v2389, 0.6931472
      %v2391 = vmul.f32 -0.5, %v1402
      %v2392 = vadd.f32 %v2391, 1.0
      %v2393 = vmul.f32 %v2392, %v1402
      %v2394 = vand.u32 2147483647, %v1402
      %vm2395 = vcmp.lt.f32.partialorder %v2394, 0.0004427343
      %v2396 = vsel %vm2395, %v2393, %v2390
      %v2397 = vadd.f32 %v1404, 1.0
      %v2398 = vlog2.pop %v2397
      %v2399 = vmul.f32 %v2398, 0.6931472
      %v2400 = vmul.f32 -0.5, %v1404
      %v2401 = vadd.f32 %v2400, 1.0
      %v2402 = vmul.f32 %v2401, %v1404
      %v2403 = vand.u32 2147483647, %v1404
      %vm2404 = vcmp.lt.f32.partialorder %v2403, 0.0004427343
      %v2405 = vsel %vm2404, %v2402, %v2399
      %v2406 = vadd.f32 %v1406, 1.0
      %v2407 = vlog2.pop %v2406
      %v2408 = vmul.f32 %v2407, 0.6931472
      %v2409 = vmul.f32 -0.5, %v1406
      %v2410 = vadd.f32 %v2409, 1.0
      %v2411 = vmul.f32 %v2410, %v1406
      %v2412 = vand.u32 2147483647, %v1406
      %vm2413 = vcmp.lt.f32.partialorder %v2412, 0.0004427343
      %v2414 = vsel %vm2413, %v2411, %v2408
      %v2415 = vadd.f32 %v1408, 1.0
      %v2416 = vlog2.pop %v2415
      %v2417 = vmul.f32 %v2416, 0.6931472
      %v2418 = vmul.f32 -0.5, %v1408
      %v2419 = vadd.f32 %v2418, 1.0
      %v2420 = vmul.f32 %v2419, %v1408
      %v2421 = vand.u32 2147483647, %v1408
      %vm2422 = vcmp.lt.f32.partialorder %v2421, 0.0004427343
      %v2423 = vsel %vm2422, %v2420, %v2417
      %v2424 = vadd.f32 %v1410, 1.0
      %v2425 = vlog2.pop %v2424
      %v2426 = vmul.f32 %v2425, 0.6931472
      %v2427 = vmul.f32 -0.5, %v1410
      %v2428 = vadd.f32 %v2427, 1.0
      %v2429 = vmul.f32 %v2428, %v1410
      %v2430 = vand.u32 2147483647, %v1410
      %vm2431 = vcmp.lt.f32.partialorder %v2430, 0.0004427343
      %v2432 = vsel %vm2431, %v2429, %v2426
      %v2433 = vadd.f32 %v1412, 1.0
      %v2434 = vlog2.pop %v2433
      %v2435 = vmul.f32 %v2434, 0.6931472
      %v2436 = vmul.f32 -0.5, %v1412
      %v2437 = vadd.f32 %v2436, 1.0
      %v2438 = vmul.f32 %v2437, %v1412
      %v2439 = vand.u32 2147483647, %v1412
      %vm2440 = vcmp.lt.f32.partialorder %v2439, 0.0004427343
      %v2441 = vsel %vm2440, %v2438, %v2435
      %v2442 = vadd.f32 %v1414, 1.0
      %v2443 = vlog2.pop %v2442
      %v2444 = vmul.f32 %v2443, 0.6931472
      %v2445 = vmul.f32 -0.5, %v1414
      %v2446 = vadd.f32 %v2445, 1.0
      %v2447 = vmul.f32 %v2446, %v1414
      %v2448 = vand.u32 2147483647, %v1414
      %vm2449 = vcmp.lt.f32.partialorder %v2448, 0.0004427343
      %v2450 = vsel %vm2449, %v2447, %v2444
      %v2451 = vadd.f32 %v1416, 1.0
      %v2452 = vlog2.pop %v2451
      %v2453 = vmul.f32 %v2452, 0.6931472
      %v2454 = vmul.f32 -0.5, %v1416
      %v2455 = vadd.f32 %v2454, 1.0
      %v2456 = vmul.f32 %v2455, %v1416
      %v2457 = vand.u32 2147483647, %v1416
      %vm2458 = vcmp.lt.f32.partialorder %v2457, 0.0004427343
      %v2459 = vsel %vm2458, %v2456, %v2453
      %v2460 = vadd.f32 %v1418, 1.0
      %v2461 = vlog2.pop %v2460
      %v2462 = vmul.f32 %v2461, 0.6931472
      %v2463 = vmul.f32 -0.5, %v1418
      %v2464 = vadd.f32 %v2463, 1.0
      %v2465 = vmul.f32 %v2464, %v1418
      %v2466 = vand.u32 2147483647, %v1418
      %vm2467 = vcmp.lt.f32.partialorder %v2466, 0.0004427343
      %v2468 = vsel %vm2467, %v2465, %v2462
      %v2469 = vadd.f32 %v1420, 1.0
      %v2470 = vlog2.pop %v2469
      %v2471 = vmul.f32 %v2470, 0.6931472
      %v2472 = vmul.f32 -0.5, %v1420
      %v2473 = vadd.f32 %v2472, 1.0
      %v2474 = vmul.f32 %v2473, %v1420
      %v2475 = vand.u32 2147483647, %v1420
      %vm2476 = vcmp.lt.f32.partialorder %v2475, 0.0004427343
      %v2477 = vsel %vm2476, %v2474, %v2471
      %v2478 = vadd.f32 %v1422, 1.0
      %v2479 = vlog2.pop %v2478
      %v2480 = vmul.f32 %v2479, 0.6931472
      %v2481 = vmul.f32 -0.5, %v1422
      %v2482 = vadd.f32 %v2481, 1.0
      %v2483 = vmul.f32 %v2482, %v1422
      %v2484 = vand.u32 2147483647, %v1422
      %vm2485 = vcmp.lt.f32.partialorder %v2484, 0.0004427343
      %v2486 = vsel %vm2485, %v2483, %v2480
      %v2487 = vadd.f32 %v1424, 1.0
      %v2488 = vlog2.pop %v2487
      %v2489 = vmul.f32 %v2488, 0.6931472
      %v2490 = vmul.f32 -0.5, %v1424
      %v2491 = vadd.f32 %v2490, 1.0
      %v2492 = vmul.f32 %v2491, %v1424
      %v2493 = vand.u32 2147483647, %v1424
      %vm2494 = vcmp.lt.f32.partialorder %v2493, 0.0004427343
      %v2495 = vsel %vm2494, %v2492, %v2489
      %v2496 = vadd.f32 %v1426, 1.0
      %v2497 = vlog2.pop %v2496
      %v2498 = vmul.f32 %v2497, 0.6931472
      %v2499 = vmul.f32 -0.5, %v1426
      %v2500 = vadd.f32 %v2499, 1.0
      %v2501 = vmul.f32 %v2500, %v1426
      %v2502 = vand.u32 2147483647, %v1426
      %vm2503 = vcmp.lt.f32.partialorder %v2502, 0.0004427343
      %v2504 = vsel %vm2503, %v2501, %v2498
      %v2505 = vadd.f32 %v1428, 1.0
      %v2506 = vlog2.pop %v2505
      %v2507 = vmul.f32 %v2506, 0.6931472
      %v2508 = vmul.f32 -0.5, %v1428
      %v2509 = vadd.f32 %v2508, 1.0
      %v2510 = vmul.f32 %v2509, %v1428
      %v2511 = vand.u32 2147483647, %v1428
      %vm2512 = vcmp.lt.f32.partialorder %v2511, 0.0004427343
      %v2513 = vsel %vm2512, %v2510, %v2507
      %v2514 = vadd.f32 %v1430, 1.0
      %v2515 = vlog2.pop %v2514
      %v2516 = vmul.f32 %v2515, 0.6931472
      %v2517 = vmul.f32 -0.5, %v1430
      %v2518 = vadd.f32 %v2517, 1.0
      %v2519 = vmul.f32 %v2518, %v1430
      %v2520 = vand.u32 2147483647, %v1430
      %vm2521 = vcmp.lt.f32.partialorder %v2520, 0.0004427343
      %v2522 = vsel %vm2521, %v2519, %v2516
      %v2523 = vadd.f32 %v1432, 1.0
      %v2524 = vlog2.pop %v2523
      %v2525 = vmul.f32 %v2524, 0.6931472
      %v2526 = vmul.f32 -0.5, %v1432
      %v2527 = vadd.f32 %v2526, 1.0
      %v2528 = vmul.f32 %v2527, %v1432
      %v2529 = vand.u32 2147483647, %v1432
      %vm2530 = vcmp.lt.f32.partialorder %v2529, 0.0004427343
      %v2531 = vsel %vm2530, %v2528, %v2525
      %v2532 = vadd.f32 %v1434, 1.0
      %v2533 = vlog2.pop %v2532
      %v2534 = vmul.f32 %v2533, 0.6931472
      %v2535 = vmul.f32 -0.5, %v1434
      %v2536 = vadd.f32 %v2535, 1.0
      %v2537 = vmul.f32 %v2536, %v1434
      %v2538 = vand.u32 2147483647, %v1434
      %vm2539 = vcmp.lt.f32.partialorder %v2538, 0.0004427343
      %v2540 = vsel %vm2539, %v2537, %v2534
      %v2541 = vadd.f32 %v1436, 1.0
      %v2542 = vlog2.pop %v2541
      %v2543 = vmul.f32 %v2542, 0.6931472
      %v2544 = vmul.f32 -0.5, %v1436
      %v2545 = vadd.f32 %v2544, 1.0
      %v2546 = vmul.f32 %v2545, %v1436
      %v2547 = vand.u32 2147483647, %v1436
      %vm2548 = vcmp.lt.f32.partialorder %v2547, 0.0004427343
      %v2549 = vsel %vm2548, %v2546, %v2543
      %v2550 = vadd.f32 %v1438, 1.0
      %v2551 = vlog2.pop %v2550
      %v2552 = vmul.f32 %v2551, 0.6931472
      %v2553 = vmul.f32 -0.5, %v1438
      %v2554 = vadd.f32 %v2553, 1.0
      %v2555 = vmul.f32 %v2554, %v1438
      %v2556 = vand.u32 2147483647, %v1438
      %vm2557 = vcmp.lt.f32.partialorder %v2556, 0.0004427343
      %v2558 = vsel %vm2557, %v2555, %v2552
      %v2559 = vadd.f32 %v1439, %v1559
      %v2560 = vadd.f32 %v1440, %v1568
      %v2561 = vadd.f32 %v1441, %v1577
      %v2562 = vadd.f32 %v1442, %v1586
      %v2563 = vadd.f32 %v1443, %v1595
      %v2564 = vadd.f32 %v1444, %v1604
      %v2565 = vadd.f32 %v1445, %v1613
      %v2566 = vadd.f32 %v1446, %v1622
      %v2567 = vadd.f32 %v1447, %v1631
      %v2568 = vadd.f32 %v1448, %v1640
      %v2569 = vadd.f32 %v1449, %v1649
      %v2570 = vadd.f32 %v1450, %v1658
      %v2571 = vadd.f32 %v1451, %v1667
      %v2572 = vadd.f32 %v1452, %v1676
      %v2573 = vadd.f32 %v1453, %v1685
      %v2574 = vadd.f32 %v1454, %v1694
      %v2575 = vadd.f32 %v1455, %v1703
      %v2576 = vadd.f32 %v1456, %v1712
      %v2577 = vadd.f32 %v1457, %v1721
      %v2578 = vadd.f32 %v1458, %v1730
      %v2579 = vadd.f32 %v1459, %v1739
      %v2580 = vadd.f32 %v1460, %v1748
      %v2581 = vadd.f32 %v1461, %v1757
      %v2582 = vadd.f32 %v1462, %v1766
      %v2583 = vadd.f32 %v1463, %v1775
      %v2584 = vadd.f32 %v1464, %v1784
      %v2585 = vadd.f32 %v1465, %v1793
      %v2586 = vadd.f32 %v1466, %v1802
      %v2587 = vadd.f32 %v1467, %v1811
      %v2588 = vadd.f32 %v1468, %v1820
      %v2589 = vadd.f32 %v1469, %v1829
      %v2590 = vadd.f32 %v1470, %v1838
      %v2591 = vadd.f32 %v1471, %v1847
      %v2592 = vadd.f32 %v1472, %v1856
      %v2593 = vadd.f32 %v1473, %v1865
      %v2594 = vadd.f32 %v1474, %v1874
      %v2595 = vadd.f32 %v1475, %v1883
      %v2596 = vadd.f32 %v1476, %v1892
      %v2597 = vadd.f32 %v1477, %v1901
      %v2598 = vadd.f32 %v1478, %v1910
      %v2599 = vadd.f32 %v1479, %v1919
      %v2600 = vadd.f32 %v1480, %v1928
      %v2601 = vadd.f32 %v1481, %v1937
      %v2602 = vadd.f32 %v1482, %v1946
      %v2603 = vadd.f32 %v1483, %v1955
      %v2604 = vadd.f32 %v1484, %v1964
      %v2605 = vadd.f32 %v1485, %v1973
      %v2606 = vadd.f32 %v1486, %v1982
      %v2607 = vadd.f32 %v1487, %v1991
      %v2608 = vadd.f32 %v1488, %v2000
      %v2609 = vadd.f32 %v1489, %v2009
      %v2610 = vadd.f32 %v1490, %v2018
      %v2611 = vadd.f32 %v1491, %v2027
      %v2612 = vadd.f32 %v1492, %v2036
      %v2613 = vadd.f32 %v1493, %v2045
      %v2614 = vadd.f32 %v1494, %v2054
      %v2615 = vadd.f32 %v1495, %v2063
      %v2616 = vadd.f32 %v1496, %v2072
      %v2617 = vadd.f32 %v1497, %v2081
      %v2618 = vadd.f32 %v1498, %v2090
      %v2619 = vadd.f32 %v1499, %v2099
      %v2620 = vadd.f32 %v1500, %v2108
      %v2621 = vadd.f32 %v1501, %v2117
      %v2622 = vadd.f32 %v1502, %v2126
      %v2623 = vadd.f32 %v1503, %v2135
      %v2624 = vadd.f32 %v1504, %v2144
      %v2625 = vadd.f32 %v1505, %v2153
      %v2626 = vadd.f32 %v1506, %v2162
      %v2627 = vadd.f32 %v1507, %v2171
      %v2628 = vadd.f32 %v1508, %v2180
      %v2629 = vadd.f32 %v1509, %v2189
      %v2630 = vadd.f32 %v1510, %v2198
      %v2631 = vadd.f32 %v1511, %v2207
      %v2632 = vadd.f32 %v1512, %v2216
      %v2633 = vadd.f32 %v1513, %v2225
      %v2634 = vadd.f32 %v1514, %v2234
      %v2635 = vadd.f32 %v1515, %v2243
      %v2636 = vadd.f32 %v1516, %v2252
      %v2637 = vadd.f32 %v1517, %v2261
      %v2638 = vadd.f32 %v1518, %v2270
      %v2639 = vadd.f32 %v1519, %v2279
      %v2640 = vadd.f32 %v1520, %v2288
      %v2641 = vadd.f32 %v1521, %v2297
      %v2642 = vadd.f32 %v1522, %v2306
      %v2643 = vadd.f32 %v1523, %v2315
      %v2644 = vadd.f32 %v1524, %v2324
      %v2645 = vadd.f32 %v1525, %v2333
      %v2646 = vadd.f32 %v1526, %v2342
      %v2647 = vadd.f32 %v1527, %v2351
      %v2648 = vadd.f32 %v1528, %v2360
      %v2649 = vadd.f32 %v1529, %v2369
      %v2650 = vadd.f32 %v1530, %v2378
      %v2651 = vadd.f32 %v1531, %v2387
      %v2652 = vadd.f32 %v1532, %v2396
      %v2653 = vadd.f32 %v1533, %v2405
      %v2654 = vadd.f32 %v1534, %v2414
      %v2655 = vadd.f32 %v1535, %v2423
      %v2656 = vadd.f32 %v1536, %v2432
      %v2657 = vadd.f32 %v1537, %v2441
      %v2658 = vadd.f32 %v1538, %v2450
      %v2659 = vadd.f32 %v1539, %v2459
      %v2660 = vadd.f32 %v1540, %v2468
      %v2661 = vadd.f32 %v1541, %v2477
      %v2662 = vadd.f32 %v1542, %v2486
      %v2663 = vadd.f32 %v1543, %v2495
      %v2664 = vadd.f32 %v1544, %v2504
      %v2665 = vadd.f32 %v1545, %v2513
      %v2666 = vadd.f32 %v1546, %v2522
      %v2667 = vadd.f32 %v1547, %v2531
      %v2668 = vadd.f32 %v1548, %v2540
      %v2669 = vadd.f32 %v1549, %v2549
      %v2670 = vadd.f32 %v1550, %v2558
      %v2671 = vadd.f32 %v1216, 1.0
      %v2672 = vadd.f32 %v1218, 1.0
      %v2673 = vadd.f32 %v1220, 1.0
      %v2674 = vadd.f32 %v1222, 1.0
      %v2675 = vadd.f32 %v1224, 1.0
      %v2676 = vadd.f32 %v1226, 1.0
      %v2677 = vadd.f32 %v1228, 1.0
      %v2678 = vadd.f32 %v1230, 1.0
      %v2679 = vadd.f32 %v1232, 1.0
      %v2680 = vadd.f32 %v1234, 1.0
      %v2681 = vadd.f32 %v1236, 1.0
      %v2682 = vadd.f32 %v1238, 1.0
      %v2683 = vadd.f32 %v1240, 1.0
      %v2684 = vadd.f32 %v1242, 1.0
      %v2685 = vadd.f32 %v1244, 1.0
      %v2686 = vadd.f32 %v1246, 1.0
      %v2687 = vadd.f32 %v1248, 1.0
      %v2688 = vadd.f32 %v1250, 1.0
      %v2689 = vadd.f32 %v1252, 1.0
      %v2690 = vadd.f32 %v1254, 1.0
      %v2691 = vadd.f32 %v1256, 1.0
      %v2692 = vadd.f32 %v1258, 1.0
      %v2693 = vadd.f32 %v1260, 1.0
      %v2694 = vadd.f32 %v1262, 1.0
      %v2695 = vadd.f32 %v1264, 1.0
      %v2696 = vadd.f32 %v1266, 1.0
      %v2697 = vadd.f32 %v1268, 1.0
      %v2698 = vadd.f32 %v1270, 1.0
      %v2699 = vadd.f32 %v1272, 1.0
      %v2700 = vadd.f32 %v1274, 1.0
      %v2701 = vadd.f32 %v1276, 1.0
      %v2702 = vadd.f32 %v1278, 1.0
      %v2703 = vadd.f32 %v1280, 1.0
      %v2704 = vadd.f32 %v1282, 1.0
      %v2705 = vadd.f32 %v1284, 1.0
      %v2706 = vadd.f32 %v1286, 1.0
      %v2707 = vadd.f32 %v1288, 1.0
      %v2708 = vadd.f32 %v1290, 1.0
      %v2709 = vadd.f32 %v1292, 1.0
      %v2710 = vadd.f32 %v1294, 1.0
      %v2711 = vadd.f32 %v1296, 1.0
      %v2712 = vadd.f32 %v1298, 1.0
      %v2713 = vadd.f32 %v1300, 1.0
      %v2714 = vadd.f32 %v1302, 1.0
      %v2715 = vadd.f32 %v1304, 1.0
      %v2716 = vadd.f32 %v1306, 1.0
      %v2717 = vadd.f32 %v1308, 1.0
      %v2718 = vadd.f32 %v1310, 1.0
      %v2719 = vadd.f32 %v1312, 1.0
      %v2720 = vadd.f32 %v1314, 1.0
      %v2721 = vadd.f32 %v1316, 1.0
      %v2722 = vadd.f32 %v1318, 1.0
      %v2723 = vadd.f32 %v1320, 1.0
      %v2724 = vadd.f32 %v1322, 1.0
      %v2725 = vadd.f32 %v1324, 1.0
      %v2726 = vadd.f32 %v1326, 1.0
      %v2727 = vadd.f32 %v1328, 1.0
      %v2728 = vadd.f32 %v1330, 1.0
      %v2729 = vadd.f32 %v1332, 1.0
      %v2730 = vadd.f32 %v1334, 1.0
      %v2731 = vadd.f32 %v1336, 1.0
      %v2732 = vadd.f32 %v1338, 1.0
      %v2733 = vadd.f32 %v1340, 1.0
      %v2734 = vadd.f32 %v1342, 1.0
      %v2735 = vadd.f32 %v1344, 1.0
      %v2736 = vadd.f32 %v1346, 1.0
      %v2737 = vadd.f32 %v1348, 1.0
      %v2738 = vadd.f32 %v1350, 1.0
      %v2739 = vadd.f32 %v1352, 1.0
      %v2740 = vadd.f32 %v1354, 1.0
      %v2741 = vadd.f32 %v1356, 1.0
      %v2742 = vadd.f32 %v1358, 1.0
      %v2743 = vadd.f32 %v1360, 1.0
      %v2744 = vadd.f32 %v1362, 1.0
      %v2745 = vadd.f32 %v1364, 1.0
      %v2746 = vadd.f32 %v1366, 1.0
      %v2747 = vadd.f32 %v1368, 1.0
      %v2748 = vadd.f32 %v1370, 1.0
      %v2749 = vadd.f32 %v1372, 1.0
      %v2750 = vadd.f32 %v1374, 1.0
      %v2751 = vadd.f32 %v1376, 1.0
      %v2752 = vadd.f32 %v1378, 1.0
      %v2753 = vadd.f32 %v1380, 1.0
      %v2754 = vadd.f32 %v1382, 1.0
      %v2755 = vadd.f32 %v1384, 1.0
      %v2756 = vadd.f32 %v1386, 1.0
      %v2757 = vadd.f32 %v1388, 1.0
      %v2758 = vadd.f32 %v1390, 1.0
      %v2759 = vadd.f32 %v1392, 1.0
      %v2760 = vadd.f32 %v1394, 1.0
      %v2761 = vadd.f32 %v1396, 1.0
      %v2762 = vadd.f32 %v1398, 1.0
      %v2763 = vadd.f32 %v1400, 1.0
      %v2764 = vadd.f32 %v1402, 1.0
      %v2765 = vadd.f32 %v1404, 1.0
      %v2766 = vadd.f32 %v1406, 1.0
      %v2767 = vadd.f32 %v1408, 1.0
      %v2768 = vadd.f32 %v1410, 1.0
      %v2769 = vadd.f32 %v1412, 1.0
      %v2770 = vadd.f32 %v1414, 1.0
      %v2771 = vadd.f32 %v1416, 1.0
      %v2772 = vadd.f32 %v1418, 1.0
      %v2773 = vadd.f32 %v1420, 1.0
      %v2774 = vadd.f32 %v1422, 1.0
      %v2775 = vadd.f32 %v1424, 1.0
      %v2776 = vadd.f32 %v1426, 1.0
      %v2777 = vadd.f32 %v1428, 1.0
      %v2778 = vadd.f32 %v1430, 1.0
      %v2779 = vadd.f32 %v1432, 1.0
      %v2780 = vadd.f32 %v1434, 1.0
      %v2781 = vadd.f32 %v1436, 1.0
      %v2782 = vadd.f32 %v1438, 1.0
      %v2783 = vrcp.pop %v2671
      %v2784 = vrcp.pop %v2672
      %v2785 = vrcp.pop %v2673
      %v2786 = vrcp.pop %v2674
      %v2787 = vrcp.pop %v2675
      %v2788 = vrcp.pop %v2676
      %v2789 = vrcp.pop %v2677
      %v2790 = vrcp.pop %v2678
      %v2791 = vrcp.pop %v2679
      %v2792 = vrcp.pop %v2680
      %v2793 = vrcp.pop %v2681
      %v2794 = vrcp.pop %v2682
      %v2795 = vrcp.pop %v2683
      %v2796 = vrcp.pop %v2684
      %v2797 = vrcp.pop %v2685
      %v2798 = vrcp.pop %v2686
      %v2799 = vrcp.pop %v2687
      %v2800 = vrcp.pop %v2688
      %v2801 = vrcp.pop %v2689
      %v2802 = vrcp.pop %v2690
      %v2803 = vrcp.pop %v2691
      %v2804 = vrcp.pop %v2692
      %v2805 = vrcp.pop %v2693
      %v2806 = vrcp.pop %v2694
      %v2807 = vrcp.pop %v2695
      %v2808 = vrcp.pop %v2696
      %v2809 = vrcp.pop %v2697
      %v2810 = vrcp.pop %v2698
      %v2811 = vrcp.pop %v2699
      %v2812 = vrcp.pop %v2700
      %v2813 = vrcp.pop %v2701
      %v2814 = vrcp.pop %v2702
      %v2815 = vrcp.pop %v2703
      %v2816 = vrcp.pop %v2704
      %v2817 = vrcp.pop %v2705
      %v2818 = vrcp.pop %v2706
      %v2819 = vrcp.pop %v2707
      %v2820 = vrcp.pop %v2708
      %v2821 = vrcp.pop %v2709
      %v2822 = vrcp.pop %v2710
      %v2823 = vrcp.pop %v2711
      %v2824 = vrcp.pop %v2712
      %v2825 = vrcp.pop %v2713
      %v2826 = vrcp.pop %v2714
      %v2827 = vrcp.pop %v2715
      %v2828 = vrcp.pop %v2716
      %v2829 = vrcp.pop %v2717
      %v2830 = vrcp.pop %v2718
      %v2831 = vrcp.pop %v2719
      %v2832 = vrcp.pop %v2720
      %v2833 = vrcp.pop %v2721
      %v2834 = vrcp.pop %v2722
      %v2835 = vrcp.pop %v2723
      %v2836 = vrcp.pop %v2724
      %v2837 = vrcp.pop %v2725
      %v2838 = vrcp.pop %v2726
      %v2839 = vrcp.pop %v2727
      %v2840 = vrcp.pop %v2728
      %v2841 = vrcp.pop %v2729
      %v2842 = vrcp.pop %v2730
      %v2843 = vrcp.pop %v2731
      %v2844 = vrcp.pop %v2732
      %v2845 = vrcp.pop %v2733
      %v2846 = vrcp.pop %v2734
      %v2847 = vrcp.pop %v2735
      %v2848 = vrcp.pop %v2736
      %v2849 = vrcp.pop %v2737
      %v2850 = vrcp.pop %v2738
      %v2851 = vrcp.pop %v2739
      %v2852 = vrcp.pop %v2740
      %v2853 = vrcp.pop %v2741
      %v2854 = vrcp.pop %v2742
      %v2855 = vrcp.pop %v2743
      %v2856 = vrcp.pop %v2744
      %v2857 = vrcp.pop %v2745
      %v2858 = vrcp.pop %v2746
      %v2859 = vrcp.pop %v2747
      %v2860 = vrcp.pop %v2748
      %v2861 = vrcp.pop %v2749
      %v2862 = vrcp.pop %v2750
      %v2863 = vrcp.pop %v2751
      %v2864 = vrcp.pop %v2752
      %v2865 = vrcp.pop %v2753
      %v2866 = vrcp.pop %v2754
      %v2867 = vrcp.pop %v2755
      %v2868 = vrcp.pop %v2756
      %v2869 = vrcp.pop %v2757
      %v2870 = vrcp.pop %v2758
      %v2871 = vrcp.pop %v2759
      %v2872 = vrcp.pop %v2760
      %v2873 = vrcp.pop %v2761
      %v2874 = vrcp.pop %v2762
      %v2875 = vrcp.pop %v2763
      %v2876 = vrcp.pop %v2764
      %v2877 = vrcp.pop %v2765
      %v2878 = vrcp.pop %v2766
      %v2879 = vrcp.pop %v2767
      %v2880 = vrcp.pop %v2768
      %v2881 = vrcp.pop %v2769
      %v2882 = vrcp.pop %v2770
      %v2883 = vrcp.pop %v2771
      %v2884 = vrcp.pop %v2772
      %v2885 = vrcp.pop %v2773
      %v2886 = vrcp.pop %v2774
      %v2887 = vrcp.pop %v2775
      %v2888 = vrcp.pop %v2776
      %v2889 = vrcp.pop %v2777
      %v2890 = vrcp.pop %v2778
      %v2891 = vrcp.pop %v2779
      %v2892 = vrcp.pop %v2780
      %v2893 = vrcp.pop %v2781
      %v2894 = vrcp.pop %v2782
      %vm2895 = vcmp.ge.f32.partialorder %v430, 0.0
      %vm2896 = vcmp.ge.f32.partialorder %v432, 0.0
      %vm2897 = vcmp.ge.f32.partialorder %v591, 0.0
      %vm2898 = vcmp.ge.f32.partialorder %v593, 0.0
      %vm2899 = vcmp.ge.f32.partialorder %v752, 0.0
      %vm2900 = vcmp.ge.f32.partialorder %v754, 0.0
      %vm2901 = vcmp.ge.f32.partialorder %v913, 0.0
      %vm2902 = vcmp.ge.f32.partialorder %v436, 0.0
      %vm2903 = vcmp.ge.f32.partialorder %v438, 0.0
      %vm2904 = vcmp.ge.f32.partialorder %v597, 0.0
      %vm2905 = vcmp.ge.f32.partialorder %v599, 0.0
      %vm2906 = vcmp.ge.f32.partialorder %v758, 0.0
      %vm2907 = vcmp.ge.f32.partialorder %v760, 0.0
      %vm2908 = vcmp.ge.f32.partialorder %v918, 0.0
      %vm2909 = vcmp.ge.f32.partialorder %v442, 0.0
      %vm2910 = vcmp.ge.f32.partialorder %v444, 0.0
      %vm2911 = vcmp.ge.f32.partialorder %v603, 0.0
      %vm2912 = vcmp.ge.f32.partialorder %v605, 0.0
      %vm2913 = vcmp.ge.f32.partialorder %v764, 0.0
      %vm2914 = vcmp.ge.f32.partialorder %v766, 0.0
      %vm2915 = vcmp.ge.f32.partialorder %v923, 0.0
      %vm2916 = vcmp.ge.f32.partialorder %v448, 0.0
      %vm2917 = vcmp.ge.f32.partialorder %v450, 0.0
      %vm2918 = vcmp.ge.f32.partialorder %v609, 0.0
      %vm2919 = vcmp.ge.f32.partialorder %v611, 0.0
      %vm2920 = vcmp.ge.f32.partialorder %v770, 0.0
      %vm2921 = vcmp.ge.f32.partialorder %v772, 0.0
      %vm2922 = vcmp.ge.f32.partialorder %v928, 0.0
      %vm2923 = vcmp.ge.f32.partialorder %v454, 0.0
      %vm2924 = vcmp.ge.f32.partialorder %v456, 0.0
      %vm2925 = vcmp.ge.f32.partialorder %v615, 0.0
      %vm2926 = vcmp.ge.f32.partialorder %v617, 0.0
      %vm2927 = vcmp.ge.f32.partialorder %v776, 0.0
      %vm2928 = vcmp.ge.f32.partialorder %v778, 0.0
      %vm2929 = vcmp.ge.f32.partialorder %v933, 0.0
      %vm2930 = vcmp.ge.f32.partialorder %v460, 0.0
      %vm2931 = vcmp.ge.f32.partialorder %v462, 0.0
      %vm2932 = vcmp.ge.f32.partialorder %v621, 0.0
      %vm2933 = vcmp.ge.f32.partialorder %v623, 0.0
      %vm2934 = vcmp.ge.f32.partialorder %v782, 0.0
      %vm2935 = vcmp.ge.f32.partialorder %v784, 0.0
      %vm2936 = vcmp.ge.f32.partialorder %v938, 0.0
      %vm2937 = vcmp.ge.f32.partialorder %v466, 0.0
      %vm2938 = vcmp.ge.f32.partialorder %v468, 0.0
      %vm2939 = vcmp.ge.f32.partialorder %v627, 0.0
      %vm2940 = vcmp.ge.f32.partialorder %v629, 0.0
      %vm2941 = vcmp.ge.f32.partialorder %v788, 0.0
      %vm2942 = vcmp.ge.f32.partialorder %v790, 0.0
      %vm2943 = vcmp.ge.f32.partialorder %v943, 0.0
      %vm2944 = vcmp.ge.f32.partialorder %v472, 0.0
      %vm2945 = vcmp.ge.f32.partialorder %v474, 0.0
      %vm2946 = vcmp.ge.f32.partialorder %v633, 0.0
      %vm2947 = vcmp.ge.f32.partialorder %v635, 0.0
      %vm2948 = vcmp.ge.f32.partialorder %v794, 0.0
      %vm2949 = vcmp.ge.f32.partialorder %v796, 0.0
      %vm2950 = vcmp.ge.f32.partialorder %v948, 0.0
      %vm2951 = vcmp.ge.f32.partialorder %v478, 0.0
      %vm2952 = vcmp.ge.f32.partialorder %v480, 0.0
      %vm2953 = vcmp.ge.f32.partialorder %v639, 0.0
      %vm2954 = vcmp.ge.f32.partialorder %v641, 0.0
      %vm2955 = vcmp.ge.f32.partialorder %v800, 0.0
      %vm2956 = vcmp.ge.f32.partialorder %v802, 0.0
      %vm2957 = vcmp.ge.f32.partialorder %v953, 0.0
      %vm2958 = vcmp.ge.f32.partialorder %v484, 0.0
      %vm2959 = vcmp.ge.f32.partialorder %v486, 0.0
      %vm2960 = vcmp.ge.f32.partialorder %v645, 0.0
      %vm2961 = vcmp.ge.f32.partialorder %v647, 0.0
      %vm2962 = vcmp.ge.f32.partialorder %v806, 0.0
      %vm2963 = vcmp.ge.f32.partialorder %v808, 0.0
      %vm2964 = vcmp.ge.f32.partialorder %v958, 0.0
      %vm2965 = vcmp.ge.f32.partialorder %v490, 0.0
      %vm2966 = vcmp.ge.f32.partialorder %v492, 0.0
      %vm2967 = vcmp.ge.f32.partialorder %v651, 0.0
      %vm2968 = vcmp.ge.f32.partialorder %v653, 0.0
      %vm2969 = vcmp.ge.f32.partialorder %v812, 0.0
      %vm2970 = vcmp.ge.f32.partialorder %v814, 0.0
      %vm2971 = vcmp.ge.f32.partialorder %v963, 0.0
      %vm2972 = vcmp.ge.f32.partialorder %v496, 0.0
      %vm2973 = vcmp.ge.f32.partialorder %v498, 0.0
      %vm2974 = vcmp.ge.f32.partialorder %v657, 0.0
      %vm2975 = vcmp.ge.f32.partialorder %v659, 0.0
      %vm2976 = vcmp.ge.f32.partialorder %v818, 0.0
      %vm2977 = vcmp.ge.f32.partialorder %v820, 0.0
      %vm2978 = vcmp.ge.f32.partialorder %v968, 0.0
      %vm2979 = vcmp.ge.f32.partialorder %v502, 0.0
      %vm2980 = vcmp.ge.f32.partialorder %v504, 0.0
      %vm2981 = vcmp.ge.f32.partialorder %v663, 0.0
      %vm2982 = vcmp.ge.f32.partialorder %v665, 0.0
      %vm2983 = vcmp.ge.f32.partialorder %v824, 0.0
      %vm2984 = vcmp.ge.f32.partialorder %v826, 0.0
      %vm2985 = vcmp.ge.f32.partialorder %v973, 0.0
      %vm2986 = vcmp.ge.f32.partialorder %v508, 0.0
      %vm2987 = vcmp.ge.f32.partialorder %v510, 0.0
      %vm2988 = vcmp.ge.f32.partialorder %v669, 0.0
      %vm2989 = vcmp.ge.f32.partialorder %v671, 0.0
      %vm2990 = vcmp.ge.f32.partialorder %v830, 0.0
      %vm2991 = vcmp.ge.f32.partialorder %v832, 0.0
      %vm2992 = vcmp.ge.f32.partialorder %v978, 0.0
      %vm2993 = vcmp.ge.f32.partialorder %v514, 0.0
      %vm2994 = vcmp.ge.f32.partialorder %v516, 0.0
      %vm2995 = vcmp.ge.f32.partialorder %v675, 0.0
      %vm2996 = vcmp.ge.f32.partialorder %v677, 0.0
      %vm2997 = vcmp.ge.f32.partialorder %v836, 0.0
      %vm2998 = vcmp.ge.f32.partialorder %v838, 0.0
      %vm2999 = vcmp.ge.f32.partialorder %v983, 0.0
      %vm3000 = vcmp.ge.f32.partialorder %v520, 0.0
      %vm3001 = vcmp.ge.f32.partialorder %v522, 0.0
      %vm3002 = vcmp.ge.f32.partialorder %v681, 0.0
      %vm3003 = vcmp.ge.f32.partialorder %v683, 0.0
      %vm3004 = vcmp.ge.f32.partialorder %v842, 0.0
      %vm3005 = vcmp.ge.f32.partialorder %v844, 0.0
      %vm3006 = vcmp.ge.f32.partialorder %v988, 0.0
      %v3007 = vmul.f32 %v1216, %v2783
      %v3008 = vmul.f32 %v1218, %v2784
      %v3009 = vmul.f32 %v1220, %v2785
      %v3010 = vmul.f32 %v1222, %v2786
      %v3011 = vmul.f32 %v1224, %v2787
      %v3012 = vmul.f32 %v1226, %v2788
      %v3013 = vmul.f32 %v1228, %v2789
      %v3014 = vmul.f32 %v1230, %v2790
      %v3015 = vmul.f32 %v1232, %v2791
      %v3016 = vmul.f32 %v1234, %v2792
      %v3017 = vmul.f32 %v1236, %v2793
      %v3018 = vmul.f32 %v1238, %v2794
      %v3019 = vmul.f32 %v1240, %v2795
      %v3020 = vmul.f32 %v1242, %v2796
      %v3021 = vmul.f32 %v1244, %v2797
      %v3022 = vmul.f32 %v1246, %v2798
      %v3023 = vmul.f32 %v1248, %v2799
      %v3024 = vmul.f32 %v1250, %v2800
      %v3025 = vmul.f32 %v1252, %v2801
      %v3026 = vmul.f32 %v1254, %v2802
      %v3027 = vmul.f32 %v1256, %v2803
      %v3028 = vmul.f32 %v1258, %v2804
      %v3029 = vmul.f32 %v1260, %v2805
      %v3030 = vmul.f32 %v1262, %v2806
      %v3031 = vmul.f32 %v1264, %v2807
      %v3032 = vmul.f32 %v1266, %v2808
      %v3033 = vmul.f32 %v1268, %v2809
      %v3034 = vmul.f32 %v1270, %v2810
      %v3035 = vmul.f32 %v1272, %v2811
      %v3036 = vmul.f32 %v1274, %v2812
      %v3037 = vmul.f32 %v1276, %v2813
      %v3038 = vmul.f32 %v1278, %v2814
      %v3039 = vmul.f32 %v1280, %v2815
      %v3040 = vmul.f32 %v1282, %v2816
      %v3041 = vmul.f32 %v1284, %v2817
      %v3042 = vmul.f32 %v1286, %v2818
      %v3043 = vmul.f32 %v1288, %v2819
      %v3044 = vmul.f32 %v1290, %v2820
      %v3045 = vmul.f32 %v1292, %v2821
      %v3046 = vmul.f32 %v1294, %v2822
      %v3047 = vmul.f32 %v1296, %v2823
      %v3048 = vmul.f32 %v1298, %v2824
      %v3049 = vmul.f32 %v1300, %v2825
      %v3050 = vmul.f32 %v1302, %v2826
      %v3051 = vmul.f32 %v1304, %v2827
      %v3052 = vmul.f32 %v1306, %v2828
      %v3053 = vmul.f32 %v1308, %v2829
      %v3054 = vmul.f32 %v1310, %v2830
      %v3055 = vmul.f32 %v1312, %v2831
      %v3056 = vmul.f32 %v1314, %v2832
      %v3057 = vmul.f32 %v1316, %v2833
      %v3058 = vmul.f32 %v1318, %v2834
      %v3059 = vmul.f32 %v1320, %v2835
      %v3060 = vmul.f32 %v1322, %v2836
      %v3061 = vmul.f32 %v1324, %v2837
      %v3062 = vmul.f32 %v1326, %v2838
      %v3063 = vmul.f32 %v1328, %v2839
      %v3064 = vmul.f32 %v1330, %v2840
      %v3065 = vmul.f32 %v1332, %v2841
      %v3066 = vmul.f32 %v1334, %v2842
      %v3067 = vmul.f32 %v1336, %v2843
      %v3068 = vmul.f32 %v1338, %v2844
      %v3069 = vmul.f32 %v1340, %v2845
      %v3070 = vmul.f32 %v1342, %v2846
      %v3071 = vmul.f32 %v1344, %v2847
      %v3072 = vmul.f32 %v1346, %v2848
      %v3073 = vmul.f32 %v1348, %v2849
      %v3074 = vmul.f32 %v1350, %v2850
      %v3075 = vmul.f32 %v1352, %v2851
      %v3076 = vmul.f32 %v1354, %v2852
      %v3077 = vmul.f32 %v1356, %v2853
      %v3078 = vmul.f32 %v1358, %v2854
      %v3079 = vmul.f32 %v1360, %v2855
      %v3080 = vmul.f32 %v1362, %v2856
      %v3081 = vmul.f32 %v1364, %v2857
      %v3082 = vmul.f32 %v1366, %v2858
      %v3083 = vmul.f32 %v1368, %v2859
      %v3084 = vmul.f32 %v1370, %v2860
      %v3085 = vmul.f32 %v1372, %v2861
      %v3086 = vmul.f32 %v1374, %v2862
      %v3087 = vmul.f32 %v1376, %v2863
      %v3088 = vmul.f32 %v1378, %v2864
      %v3089 = vmul.f32 %v1380, %v2865
      %v3090 = vmul.f32 %v1382, %v2866
      %v3091 = vmul.f32 %v1384, %v2867
      %v3092 = vmul.f32 %v1386, %v2868
      %v3093 = vmul.f32 %v1388, %v2869
      %v3094 = vmul.f32 %v1390, %v2870
      %v3095 = vmul.f32 %v1392, %v2871
      %v3096 = vmul.f32 %v1394, %v2872
      %v3097 = vmul.f32 %v1396, %v2873
      %v3098 = vmul.f32 %v1398, %v2874
      %v3099 = vmul.f32 %v1400, %v2875
      %v3100 = vmul.f32 %v1402, %v2876
      %v3101 = vmul.f32 %v1404, %v2877
      %v3102 = vmul.f32 %v1406, %v2878
      %v3103 = vmul.f32 %v1408, %v2879
      %v3104 = vmul.f32 %v1410, %v2880
      %v3105 = vmul.f32 %v1412, %v2881
      %v3106 = vmul.f32 %v1414, %v2882
      %v3107 = vmul.f32 %v1416, %v2883
      %v3108 = vmul.f32 %v1418, %v2884
      %v3109 = vmul.f32 %v1420, %v2885
      %v3110 = vmul.f32 %v1422, %v2886
      %v3111 = vmul.f32 %v1424, %v2887
      %v3112 = vmul.f32 %v1426, %v2888
      %v3113 = vmul.f32 %v1428, %v2889
      %v3114 = vmul.f32 %v1430, %v2890
      %v3115 = vmul.f32 %v1432, %v2891
      %v3116 = vmul.f32 %v1434, %v2892
      %v3117 = vmul.f32 %v1436, %v2893
      %v3118 = vmul.f32 %v1438, %v2894
      %v3119 = vsel %vm2895, %v2783, %v3007
      %v3120 = vsel %vm2896, %v2784, %v3008
      %v3121 = vsel %vm2897, %v2785, %v3009
      %v3122 = vsel %vm2898, %v2786, %v3010
      %v3123 = vsel %vm2899, %v2787, %v3011
      %v3124 = vsel %vm2900, %v2788, %v3012
      %v3125 = vsel %vm2901, %v2789, %v3013
      %v3126 = vsel %vm2902, %v2790, %v3014
      %v3127 = vsel %vm2903, %v2791, %v3015
      %v3128 = vsel %vm2904, %v2792, %v3016
      %v3129 = vsel %vm2905, %v2793, %v3017
      %v3130 = vsel %vm2906, %v2794, %v3018
      %v3131 = vsel %vm2907, %v2795, %v3019
      %v3132 = vsel %vm2908, %v2796, %v3020
      %v3133 = vsel %vm2909, %v2797, %v3021
      %v3134 = vsel %vm2910, %v2798, %v3022
      %v3135 = vsel %vm2911, %v2799, %v3023
      %v3136 = vsel %vm2912, %v2800, %v3024
      %v3137 = vsel %vm2913, %v2801, %v3025
      %v3138 = vsel %vm2914, %v2802, %v3026
      %v3139 = vsel %vm2915, %v2803, %v3027
      %v3140 = vsel %vm2916, %v2804, %v3028
      %v3141 = vsel %vm2917, %v2805, %v3029
      %v3142 = vsel %vm2918, %v2806, %v3030
      %v3143 = vsel %vm2919, %v2807, %v3031
      %v3144 = vsel %vm2920, %v2808, %v3032
      %v3145 = vsel %vm2921, %v2809, %v3033
      %v3146 = vsel %vm2922, %v2810, %v3034
      %v3147 = vsel %vm2923, %v2811, %v3035
      %v3148 = vsel %vm2924, %v2812, %v3036
      %v3149 = vsel %vm2925, %v2813, %v3037
      %v3150 = vsel %vm2926, %v2814, %v3038
      %v3151 = vsel %vm2927, %v2815, %v3039
      %v3152 = vsel %vm2928, %v2816, %v3040
      %v3153 = vsel %vm2929, %v2817, %v3041
      %v3154 = vsel %vm2930, %v2818, %v3042
      %v3155 = vsel %vm2931, %v2819, %v3043
      %v3156 = vsel %vm2932, %v2820, %v3044
      %v3157 = vsel %vm2933, %v2821, %v3045
      %v3158 = vsel %vm2934, %v2822, %v3046
      %v3159 = vsel %vm2935, %v2823, %v3047
      %v3160 = vsel %vm2936, %v2824, %v3048
      %v3161 = vsel %vm2937, %v2825, %v3049
      %v3162 = vsel %vm2938, %v2826, %v3050
      %v3163 = vsel %vm2939, %v2827, %v3051
      %v3164 = vsel %vm2940, %v2828, %v3052
      %v3165 = vsel %vm2941, %v2829, %v3053
      %v3166 = vsel %vm2942, %v2830, %v3054
      %v3167 = vsel %vm2943, %v2831, %v3055
      %v3168 = vsel %vm2944, %v2832, %v3056
      %v3169 = vsel %vm2945, %v2833, %v3057
      %v3170 = vsel %vm2946, %v2834, %v3058
      %v3171 = vsel %vm2947, %v2835, %v3059
      %v3172 = vsel %vm2948, %v2836, %v3060
      %v3173 = vsel %vm2949, %v2837, %v3061
      %v3174 = vsel %vm2950, %v2838, %v3062
      %v3175 = vsel %vm2951, %v2839, %v3063
      %v3176 = vsel %vm2952, %v2840, %v3064
      %v3177 = vsel %vm2953, %v2841, %v3065
      %v3178 = vsel %vm2954, %v2842, %v3066
      %v3179 = vsel %vm2955, %v2843, %v3067
      %v3180 = vsel %vm2956, %v2844, %v3068
      %v3181 = vsel %vm2957, %v2845, %v3069
      %v3182 = vsel %vm2958, %v2846, %v3070
      %v3183 = vsel %vm2959, %v2847, %v3071
      %v3184 = vsel %vm2960, %v2848, %v3072
      %v3185 = vsel %vm2961, %v2849, %v3073
      %v3186 = vsel %vm2962, %v2850, %v3074
      %v3187 = vsel %vm2963, %v2851, %v3075
      %v3188 = vsel %vm2964, %v2852, %v3076
      %v3189 = vsel %vm2965, %v2853, %v3077
      %v3190 = vsel %vm2966, %v2854, %v3078
      %v3191 = vsel %vm2967, %v2855, %v3079
      %v3192 = vsel %vm2968, %v2856, %v3080
      %v3193 = vsel %vm2969, %v2857, %v3081
      %v3194 = vsel %vm2970, %v2858, %v3082
      %v3195 = vsel %vm2971, %v2859, %v3083
      %v3196 = vsel %vm2972, %v2860, %v3084
      %v3197 = vsel %vm2973, %v2861, %v3085
      %v3198 = vsel %vm2974, %v2862, %v3086
      %v3199 = vsel %vm2975, %v2863, %v3087
      %v3200 = vsel %vm2976, %v2864, %v3088
      %v3201 = vsel %vm2977, %v2865, %v3089
      %v3202 = vsel %vm2978, %v2866, %v3090
      %v3203 = vsel %vm2979, %v2867, %v3091
      %v3204 = vsel %vm2980, %v2868, %v3092
      %v3205 = vsel %vm2981, %v2869, %v3093
      %v3206 = vsel %vm2982, %v2870, %v3094
      %v3207 = vsel %vm2983, %v2871, %v3095
      %v3208 = vsel %vm2984, %v2872, %v3096
      %v3209 = vsel %vm2985, %v2873, %v3097
      %v3210 = vsel %vm2986, %v2874, %v3098
      %v3211 = vsel %vm2987, %v2875, %v3099
      %v3212 = vsel %vm2988, %v2876, %v3100
      %v3213 = vsel %vm2989, %v2877, %v3101
      %v3214 = vsel %vm2990, %v2878, %v3102
      %v3215 = vsel %vm2991, %v2879, %v3103
      %v3216 = vsel %vm2992, %v2880, %v3104
      %v3217 = vsel %vm2993, %v2881, %v3105
      %v3218 = vsel %vm2994, %v2882, %v3106
      %v3219 = vsel %vm2995, %v2883, %v3107
      %v3220 = vsel %vm2996, %v2884, %v3108
      %v3221 = vsel %vm2997, %v2885, %v3109
      %v3222 = vsel %vm2998, %v2886, %v3110
      %v3223 = vsel %vm2999, %v2887, %v3111
      %v3224 = vsel %vm3000, %v2888, %v3112
      %v3225 = vsel %vm3001, %v2889, %v3113
      %v3226 = vsel %vm3002, %v2890, %v3114
      %v3227 = vsel %vm3003, %v2891, %v3115
      %v3228 = vsel %vm3004, %v2892, %v3116
      %v3229 = vsel %vm3005, %v2893, %v3117
      %v3230 = vsel %vm3006, %v2894, %v3118
      %v3231 = vpack.c.bf16 %v3126, %v3119
      %v3232 = vpack.c.bf16 %v3127, %v3120
      %v3233 = vpack.c.bf16 %v3128, %v3121
      %v3234 = vpack.c.bf16 %v3129, %v3122
      %v3235 = vpack.c.bf16 %v3130, %v3123
      %v3236 = vpack.c.bf16 %v3131, %v3124
      %v3237 = vpack.c.bf16 %v3132, %v3125
      %v3238 = vpack.c.bf16 %v3140, %v3133
      %v3239 = vpack.c.bf16 %v3141, %v3134
      %v3240 = vpack.c.bf16 %v3142, %v3135
      %v3241 = vpack.c.bf16 %v3143, %v3136
      %v3242 = vpack.c.bf16 %v3144, %v3137
      %v3243 = vpack.c.bf16 %v3145, %v3138
      %v3244 = vpack.c.bf16 %v3146, %v3139
      %v3245 = vpack.c.bf16 %v3154, %v3147
      %v3246 = vpack.c.bf16 %v3155, %v3148
      %v3247 = vpack.c.bf16 %v3156, %v3149
      %v3248 = vpack.c.bf16 %v3157, %v3150
      %v3249 = vpack.c.bf16 %v3158, %v3151
      %v3250 = vpack.c.bf16 %v3159, %v3152
      %v3251 = vpack.c.bf16 %v3160, %v3153
      %v3252 = vpack.c.bf16 %v3168, %v3161
      %v3253 = vpack.c.bf16 %v3169, %v3162
      %v3254 = vpack.c.bf16 %v3170, %v3163
      %v3255 = vpack.c.bf16 %v3171, %v3164
      %v3256 = vpack.c.bf16 %v3172, %v3165
      %v3257 = vpack.c.bf16 %v3173, %v3166
      %v3258 = vpack.c.bf16 %v3174, %v3167
      %v3259 = vpack.c.bf16 %v3182, %v3175
      %v3260 = vpack.c.bf16 %v3183, %v3176
      %v3261 = vpack.c.bf16 %v3184, %v3177
      %v3262 = vpack.c.bf16 %v3185, %v3178
      %v3263 = vpack.c.bf16 %v3186, %v3179
      %v3264 = vpack.c.bf16 %v3187, %v3180
      %v3265 = vpack.c.bf16 %v3188, %v3181
      %v3266 = vpack.c.bf16 %v3196, %v3189
      %v3267 = vpack.c.bf16 %v3197, %v3190
      %v3268 = vpack.c.bf16 %v3198, %v3191
      %v3269 = vpack.c.bf16 %v3199, %v3192
      %v3270 = vpack.c.bf16 %v3200, %v3193
      %v3271 = vpack.c.bf16 %v3201, %v3194
      %v3272 = vpack.c.bf16 %v3202, %v3195
      %v3273 = vpack.c.bf16 %v3210, %v3203
      %v3274 = vpack.c.bf16 %v3211, %v3204
      %v3275 = vpack.c.bf16 %v3212, %v3205
      %v3276 = vpack.c.bf16 %v3213, %v3206
      %v3277 = vpack.c.bf16 %v3214, %v3207
      %v3278 = vpack.c.bf16 %v3215, %v3208
      %v3279 = vpack.c.bf16 %v3216, %v3209
      %v3280 = vpack.c.bf16 %v3224, %v3217
      %v3281 = vpack.c.bf16 %v3225, %v3218
      %v3282 = vpack.c.bf16 %v3226, %v3219
      %v3283 = vpack.c.bf16 %v3227, %v3220
      %v3284 = vpack.c.bf16 %v3228, %v3221
      %v3285 = vpack.c.bf16 %v3229, %v3222
      %v3286 = vpack.c.bf16 %v3230, %v3223
      %v3343 = vunpack.c.l.b16 %v3231
      %v3344 = vunpack.c.l.b16 %v3232
      %v3345 = vunpack.c.l.b16 %v3233
      %v3346 = vunpack.c.l.b16 %v3234
      %v3347 = vunpack.c.l.b16 %v3235
      %v3348 = vunpack.c.l.b16 %v3236
      %v3349 = vunpack.c.l.b16 %v3237
      %v3350 = vunpack.c.h.b16 %v3231
      %v3351 = vunpack.c.h.b16 %v3232
      %v3352 = vunpack.c.h.b16 %v3233
      %v3353 = vunpack.c.h.b16 %v3234
      %v3354 = vunpack.c.h.b16 %v3235
      %v3355 = vunpack.c.h.b16 %v3236
      %v3356 = vunpack.c.h.b16 %v3237
      %v3357 = vunpack.c.l.b16 %v3238
      %v3358 = vunpack.c.l.b16 %v3239
      %v3359 = vunpack.c.l.b16 %v3240
      %v3360 = vunpack.c.l.b16 %v3241
      %v3361 = vunpack.c.l.b16 %v3242
      %v3362 = vunpack.c.l.b16 %v3243
      %v3363 = vunpack.c.l.b16 %v3244
      %v3364 = vunpack.c.h.b16 %v3238
      %v3365 = vunpack.c.h.b16 %v3239
      %v3366 = vunpack.c.h.b16 %v3240
      %v3367 = vunpack.c.h.b16 %v3241
      %v3368 = vunpack.c.h.b16 %v3242
      %v3369 = vunpack.c.h.b16 %v3243
      %v3370 = vunpack.c.h.b16 %v3244
      %v3371 = vunpack.c.l.b16 %v3245
      %v3372 = vunpack.c.l.b16 %v3246
      %v3373 = vunpack.c.l.b16 %v3247
      %v3374 = vunpack.c.l.b16 %v3248
      %v3375 = vunpack.c.l.b16 %v3249
      %v3376 = vunpack.c.l.b16 %v3250
      %v3377 = vunpack.c.l.b16 %v3251
      %v3378 = vunpack.c.h.b16 %v3245
      %v3379 = vunpack.c.h.b16 %v3246
      %v3380 = vunpack.c.h.b16 %v3247
      %v3381 = vunpack.c.h.b16 %v3248
      %v3382 = vunpack.c.h.b16 %v3249
      %v3383 = vunpack.c.h.b16 %v3250
      %v3384 = vunpack.c.h.b16 %v3251
      %v3385 = vunpack.c.l.b16 %v3252
      %v3386 = vunpack.c.l.b16 %v3253
      %v3387 = vunpack.c.l.b16 %v3254
      %v3388 = vunpack.c.l.b16 %v3255
      %v3389 = vunpack.c.l.b16 %v3256
      %v3390 = vunpack.c.l.b16 %v3257
      %v3391 = vunpack.c.l.b16 %v3258
      %v3392 = vunpack.c.h.b16 %v3252
      %v3393 = vunpack.c.h.b16 %v3253
      %v3394 = vunpack.c.h.b16 %v3254
      %v3395 = vunpack.c.h.b16 %v3255
      %v3396 = vunpack.c.h.b16 %v3256
      %v3397 = vunpack.c.h.b16 %v3257
      %v3398 = vunpack.c.h.b16 %v3258
      %v3399 = vunpack.c.l.b16 %v3259
      %v3400 = vunpack.c.l.b16 %v3260
      %v3401 = vunpack.c.l.b16 %v3261
      %v3402 = vunpack.c.l.b16 %v3262
      %v3403 = vunpack.c.l.b16 %v3263
      %v3404 = vunpack.c.l.b16 %v3264
      %v3405 = vunpack.c.l.b16 %v3265
      %v3406 = vunpack.c.h.b16 %v3259
      %v3407 = vunpack.c.h.b16 %v3260
      %v3408 = vunpack.c.h.b16 %v3261
      %v3409 = vunpack.c.h.b16 %v3262
      %v3410 = vunpack.c.h.b16 %v3263
      %v3411 = vunpack.c.h.b16 %v3264
      %v3412 = vunpack.c.h.b16 %v3265
      %v3413 = vunpack.c.l.b16 %v3266
      %v3414 = vunpack.c.l.b16 %v3267
      %v3415 = vunpack.c.l.b16 %v3268
      %v3416 = vunpack.c.l.b16 %v3269
      %v3417 = vunpack.c.l.b16 %v3270
      %v3418 = vunpack.c.l.b16 %v3271
      %v3419 = vunpack.c.l.b16 %v3272
      %v3420 = vunpack.c.h.b16 %v3266
      %v3421 = vunpack.c.h.b16 %v3267
      %v3422 = vunpack.c.h.b16 %v3268
      %v3423 = vunpack.c.h.b16 %v3269
      %v3424 = vunpack.c.h.b16 %v3270
      %v3425 = vunpack.c.h.b16 %v3271
      %v3426 = vunpack.c.h.b16 %v3272
      %v3427 = vunpack.c.l.b16 %v3273
      %v3428 = vunpack.c.l.b16 %v3274
      %v3429 = vunpack.c.l.b16 %v3275
      %v3430 = vunpack.c.l.b16 %v3276
      %v3431 = vunpack.c.l.b16 %v3277
      %v3432 = vunpack.c.l.b16 %v3278
      %v3433 = vunpack.c.l.b16 %v3279
      %v3434 = vunpack.c.h.b16 %v3273
      %v3435 = vunpack.c.h.b16 %v3274
      %v3436 = vunpack.c.h.b16 %v3275
      %v3437 = vunpack.c.h.b16 %v3276
      %v3438 = vunpack.c.h.b16 %v3277
      %v3439 = vunpack.c.h.b16 %v3278
      %v3440 = vunpack.c.h.b16 %v3279
      %v3441 = vunpack.c.l.b16 %v3280
      %v3442 = vunpack.c.l.b16 %v3281
      %v3443 = vunpack.c.l.b16 %v3282
      %v3444 = vunpack.c.l.b16 %v3283
      %v3445 = vunpack.c.l.b16 %v3284
      %v3446 = vunpack.c.l.b16 %v3285
      %v3447 = vunpack.c.l.b16 %v3286
      %v3448 = vunpack.c.h.b16 %v3280
      %v3449 = vunpack.c.h.b16 %v3281
      %v3450 = vunpack.c.h.b16 %v3282
      %v3451 = vunpack.c.h.b16 %v3283
      %v3452 = vunpack.c.h.b16 %v3284
      %v3453 = vunpack.c.h.b16 %v3285
      %v3454 = vunpack.c.h.b16 %v3286
      %v3455 = vpack.c.b16 %v3344, %v3343
      %v3456 = vpack.c.b16 %v3346, %v3345
      %v3457 = vpack.c.b16 %v3348, %v3347
      %v3458 = vpack.c.b16 %v3349, %v3349
      %v3459 = vpack.c.b16 %v3351, %v3350
      %v3460 = vpack.c.b16 %v3353, %v3352
      %v3461 = vpack.c.b16 %v3355, %v3354
      %v3462 = vpack.c.b16 %v3356, %v3356
      %v3463 = vpack.c.b16 %v3358, %v3357
      %v3464 = vpack.c.b16 %v3360, %v3359
      %v3465 = vpack.c.b16 %v3362, %v3361
      %v3466 = vpack.c.b16 %v3363, %v3363
      %v3467 = vpack.c.b16 %v3365, %v3364
      %v3468 = vpack.c.b16 %v3367, %v3366
      %v3469 = vpack.c.b16 %v3369, %v3368
      %v3470 = vpack.c.b16 %v3370, %v3370
      %v3471 = vpack.c.b16 %v3372, %v3371
      %v3472 = vpack.c.b16 %v3374, %v3373
      %v3473 = vpack.c.b16 %v3376, %v3375
      %v3474 = vpack.c.b16 %v3377, %v3377
      %v3475 = vpack.c.b16 %v3379, %v3378
      %v3476 = vpack.c.b16 %v3381, %v3380
      %v3477 = vpack.c.b16 %v3383, %v3382
      %v3478 = vpack.c.b16 %v3384, %v3384
      %v3479 = vpack.c.b16 %v3386, %v3385
      %v3480 = vpack.c.b16 %v3388, %v3387
      %v3481 = vpack.c.b16 %v3390, %v3389
      %v3482 = vpack.c.b16 %v3391, %v3391
      %v3483 = vpack.c.b16 %v3393, %v3392
      %v3484 = vpack.c.b16 %v3395, %v3394
      %v3485 = vpack.c.b16 %v3397, %v3396
      %v3486 = vpack.c.b16 %v3398, %v3398
      %v3487 = vpack.c.b16 %v3400, %v3399
      %v3488 = vpack.c.b16 %v3402, %v3401
      %v3489 = vpack.c.b16 %v3404, %v3403
      %v3490 = vpack.c.b16 %v3405, %v3405
      %v3491 = vpack.c.b16 %v3407, %v3406
      %v3492 = vpack.c.b16 %v3409, %v3408
      %v3493 = vpack.c.b16 %v3411, %v3410
      %v3494 = vpack.c.b16 %v3412, %v3412
      %v3495 = vpack.c.b16 %v3414, %v3413
      %v3496 = vpack.c.b16 %v3416, %v3415
      %v3497 = vpack.c.b16 %v3418, %v3417
      %v3498 = vpack.c.b16 %v3419, %v3419
      %v3499 = vpack.c.b16 %v3421, %v3420
      %v3500 = vpack.c.b16 %v3423, %v3422
      %v3501 = vpack.c.b16 %v3425, %v3424
      %v3502 = vpack.c.b16 %v3426, %v3426
      %v3503 = vpack.c.b16 %v3428, %v3427
      %v3504 = vpack.c.b16 %v3430, %v3429
      %v3505 = vpack.c.b16 %v3432, %v3431
      %v3506 = vpack.c.b16 %v3433, %v3433
      %v3507 = vpack.c.b16 %v3435, %v3434
      %v3508 = vpack.c.b16 %v3437, %v3436
      %v3509 = vpack.c.b16 %v3439, %v3438
      %v3510 = vpack.c.b16 %v3440, %v3440
      %v3511 = vpack.c.b16 %v3442, %v3441
      %v3512 = vpack.c.b16 %v3444, %v3443
      %v3513 = vpack.c.b16 %v3446, %v3445
      %v3514 = vpack.c.b16 %v3447, %v3447
      %v3515 = vpack.c.b16 %v3449, %v3448
      %v3516 = vpack.c.b16 %v3451, %v3450
      %v3517 = vpack.c.b16 %v3453, %v3452
      %v3518 = vpack.c.b16 %v3454, %v3454
      %3583 = vst [vmem:[%s234] sm:$0xff] %v3455
      %3584 = vst [vmem:[%s234 + $0x8] sm:$0xff] %v3456
      %3585 = vst [vmem:[%s234 + $0x10] sm:$0xff] %v3457
      %vm3586 = vcmask 125952
      %3587 = vst.msk [vmem:[%s234 + $0x18] sm:$0xf] %vm3586, %v3458
      %3588 = vst [vmem:[%s234 + $0x1c] sm:$0xff] %v3459
      %3589 = vst [vmem:[%s234 + $0x24] sm:$0xff] %v3460
      %3590 = vst [vmem:[%s234 + $0x2c] sm:$0xff] %v3461
      %3591 = vst.msk [vmem:[%s234 + $0x34] sm:$0xf] %vm3586, %v3462
      %3592 = vst [vmem:[%s234 + $0x38] sm:$0xff] %v3463
      %3593 = vst [vmem:[%s234 + $0x40] sm:$0xff] %v3464
      %3594 = vst [vmem:[%s234 + $0x48] sm:$0xff] %v3465
      %3595 = vst.msk [vmem:[%s234 + $0x50] sm:$0xf] %vm3586, %v3466
      %3596 = vst [vmem:[%s234 + $0x54] sm:$0xff] %v3467
      %3597 = vst [vmem:[%s234 + $0x5c] sm:$0xff] %v3468
      %3598 = vst [vmem:[%s234 + $0x64] sm:$0xff] %v3469
      %3599 = vst.msk [vmem:[%s234 + $0x6c] sm:$0xf] %vm3586, %v3470
      %3600 = vst [vmem:[%s234 + $0x70] sm:$0xff] %v3471
      %3601 = vst [vmem:[%s234 + $0x78] sm:$0xff] %v3472
      %3602 = vst [vmem:[%s234 + $0x80] sm:$0xff] %v3473
      %3603 = vst.msk [vmem:[%s234 + $0x88] sm:$0xf] %vm3586, %v3474
      %3604 = vst [vmem:[%s234 + $0x8c] sm:$0xff] %v3475
      %3605 = vst [vmem:[%s234 + $0x94] sm:$0xff] %v3476
      %3606 = vst [vmem:[%s234 + $0x9c] sm:$0xff] %v3477
      %3607 = vst.msk [vmem:[%s234 + $0xa4] sm:$0xf] %vm3586, %v3478
      %3608 = vst [vmem:[%s234 + $0xa8] sm:$0xff] %v3479
      %3609 = vst [vmem:[%s234 + $0xb0] sm:$0xff] %v3480
      %3610 = vst [vmem:[%s234 + $0xb8] sm:$0xff] %v3481
      %3611 = vst.msk [vmem:[%s234 + $0xc0] sm:$0xf] %vm3586, %v3482
      %3612 = vst [vmem:[%s234 + $0xc4] sm:$0xff] %v3483
      %3613 = vst [vmem:[%s234 + $0xcc] sm:$0xff] %v3484
      %3614 = vst [vmem:[%s234 + $0xd4] sm:$0xff] %v3485
      %3615 = vst.msk [vmem:[%s234 + $0xdc] sm:$0xf] %vm3586, %v3486
      %3616 = vst [vmem:[%s234 + $0xe0] sm:$0xff] %v3487
      %3617 = vst [vmem:[%s234 + $0xe8] sm:$0xff] %v3488
      %3618 = vst [vmem:[%s234 + $0xf0] sm:$0xff] %v3489
      %3619 = vst.msk [vmem:[%s234 + $0xf8] sm:$0xf] %vm3586, %v3490
      %3620 = vst [vmem:[%s234 + $0xfc] sm:$0xff] %v3491
      %3621 = vst [vmem:[%s234 + $0x104] sm:$0xff] %v3492
      %3622 = vst [vmem:[%s234 + $0x10c] sm:$0xff] %v3493
      %3623 = vst.msk [vmem:[%s234 + $0x114] sm:$0xf] %vm3586, %v3494
      %3624 = vst [vmem:[%s234 + $0x118] sm:$0xff] %v3495
      %3625 = vst [vmem:[%s234 + $0x120] sm:$0xff] %v3496
      %3626 = vst [vmem:[%s234 + $0x128] sm:$0xff] %v3497
      %3627 = vst.msk [vmem:[%s234 + $0x130] sm:$0xf] %vm3586, %v3498
      %3628 = vst [vmem:[%s234 + $0x134] sm:$0xff] %v3499
      %3629 = vst [vmem:[%s234 + $0x13c] sm:$0xff] %v3500
      %3630 = vst [vmem:[%s234 + $0x144] sm:$0xff] %v3501
      %3631 = vst.msk [vmem:[%s234 + $0x14c] sm:$0xf] %vm3586, %v3502
      %3632 = vst [vmem:[%s234 + $0x150] sm:$0xff] %v3503
      %3633 = vst [vmem:[%s234 + $0x158] sm:$0xff] %v3504
      %3634 = vst [vmem:[%s234 + $0x160] sm:$0xff] %v3505
      %3635 = vst.msk [vmem:[%s234 + $0x168] sm:$0xf] %vm3586, %v3506
      %3636 = vst [vmem:[%s234 + $0x16c] sm:$0xff] %v3507
      %3637 = vst [vmem:[%s234 + $0x174] sm:$0xff] %v3508
      %3638 = vst [vmem:[%s234 + $0x17c] sm:$0xff] %v3509
      %3639 = vst.msk [vmem:[%s234 + $0x184] sm:$0xf] %vm3586, %v3510
      %3640 = vst [vmem:[%s234 + $0x188] sm:$0xff] %v3511
      %3641 = vst [vmem:[%s234 + $0x190] sm:$0xff] %v3512
      %3642 = vst [vmem:[%s234 + $0x198] sm:$0xff] %v3513
      %3643 = vst.msk [vmem:[%s234 + $0x1a0] sm:$0xf] %vm3586, %v3514
      %3644 = vst [vmem:[%s234 + $0x1a4] sm:$0xff] %v3515
      %3645 = vst [vmem:[%s234 + $0x1ac] sm:$0xff] %v3516
      %3646 = vst [vmem:[%s234 + $0x1b4] sm:$0xff] %v3517
      %3647 = vst.msk [vmem:[%s234 + $0x1bc] sm:$0xf] %vm3586, %v3518
      %v3648 = vld [vmem:[%s221] sm:$0xff]
      %v3649 = vld [vmem:[%s221 + $0x8] sm:$0xff]
      %v3650 = vld [vmem:[%s221 + $0x10] sm:$0xff]
      %v3651 = vld [vmem:[%s221 + $0x18] sm:$0xff]
      %v3652 = vld [vmem:[%s221 + $0x20] sm:$0xff]
      %v3653 = vld [vmem:[%s221 + $0x28] sm:$0xff]
      %v3654 = vld [vmem:[%s221 + $0x30] sm:$0xff]
      %v3655 = vld [vmem:[%s221 + $0x38] sm:$0xff]
      %v3656 = vld [vmem:[%s221 + $0x40] sm:$0xff]
      %v3657 = vld [vmem:[%s221 + $0x48] sm:$0xff]
      %v3658 = vld [vmem:[%s221 + $0x50] sm:$0xff]
      %v3659 = vld [vmem:[%s221 + $0x58] sm:$0xff]
      %v3660 = vld [vmem:[%s221 + $0x60] sm:$0xff]
      %v3661 = vld [vmem:[%s221 + $0x68] sm:$0xff]
      %v3662 = vld [vmem:[%s221 + $0x70] sm:$0xff]
      %v3663 = vld [vmem:[%s221 + $0x78] sm:$0xff]
      %v3664 = vld [vmem:[%s221 + $0x80] sm:$0xff]
      %v3665 = vld [vmem:[%s221 + $0x88] sm:$0xff]
      %v3666 = vld [vmem:[%s221 + $0x90] sm:$0xff]
      %v3667 = vld [vmem:[%s221 + $0x98] sm:$0xff]
      %v3668 = vld [vmem:[%s221 + $0xa0] sm:$0xff]
      %v3669 = vld [vmem:[%s221 + $0xa8] sm:$0xff]
      %v3670 = vld [vmem:[%s221 + $0xb0] sm:$0xff]
      %v3671 = vld [vmem:[%s221 + $0xb8] sm:$0xff]
      %v3672 = vld [vmem:[%s221 + $0xc0] sm:$0xff]
      %v3673 = vld [vmem:[%s221 + $0xc8] sm:$0xff]
      %v3674 = vld [vmem:[%s221 + $0xd0] sm:$0xff]
      %v3675 = vld [vmem:[%s221 + $0xd8] sm:$0xff]
      %v3676 = vunpack.c.0.s8 %v3648
      %v3677 = vunpack.c.0.s8 %v3649
      %v3678 = vunpack.c.0.s8 %v3650
      %v3679 = vunpack.c.0.s8 %v3651
      %v3680 = vunpack.c.0.s8 %v3652
      %v3681 = vunpack.c.0.s8 %v3653
      %v3682 = vunpack.c.0.s8 %v3654
      %v3683 = vunpack.c.1.s8 %v3648
      %v3684 = vunpack.c.1.s8 %v3649
      %v3685 = vunpack.c.1.s8 %v3650
      %v3686 = vunpack.c.1.s8 %v3651
      %v3687 = vunpack.c.1.s8 %v3652
      %v3688 = vunpack.c.1.s8 %v3653
      %v3689 = vunpack.c.1.s8 %v3654
      %v3690 = vunpack.c.2.s8 %v3648
      %v3691 = vunpack.c.2.s8 %v3649
      %v3692 = vunpack.c.2.s8 %v3650
      %v3693 = vunpack.c.2.s8 %v3651
      %v3694 = vunpack.c.2.s8 %v3652
      %v3695 = vunpack.c.2.s8 %v3653
      %v3696 = vunpack.c.2.s8 %v3654
      %v3697 = vunpack.c.3.s8 %v3648
      %v3698 = vunpack.c.3.s8 %v3649
      %v3699 = vunpack.c.3.s8 %v3650
      %v3700 = vunpack.c.3.s8 %v3651
      %v3701 = vunpack.c.3.s8 %v3652
      %v3702 = vunpack.c.3.s8 %v3653
      %v3703 = vunpack.c.3.s8 %v3654
      %v3704 = vunpack.c.0.s8 %v3655
      %v3705 = vunpack.c.0.s8 %v3656
      %v3706 = vunpack.c.0.s8 %v3657
      %v3707 = vunpack.c.0.s8 %v3658
      %v3708 = vunpack.c.0.s8 %v3659
      %v3709 = vunpack.c.0.s8 %v3660
      %v3710 = vunpack.c.0.s8 %v3661
      %v3711 = vunpack.c.1.s8 %v3655
      %v3712 = vunpack.c.1.s8 %v3656
      %v3713 = vunpack.c.1.s8 %v3657
      %v3714 = vunpack.c.1.s8 %v3658
      %v3715 = vunpack.c.1.s8 %v3659
      %v3716 = vunpack.c.1.s8 %v3660
      %v3717 = vunpack.c.1.s8 %v3661
      %v3718 = vunpack.c.2.s8 %v3655
      %v3719 = vunpack.c.2.s8 %v3656
      %v3720 = vunpack.c.2.s8 %v3657
      %v3721 = vunpack.c.2.s8 %v3658
      %v3722 = vunpack.c.2.s8 %v3659
      %v3723 = vunpack.c.2.s8 %v3660
      %v3724 = vunpack.c.2.s8 %v3661
      %v3725 = vunpack.c.3.s8 %v3655
      %v3726 = vunpack.c.3.s8 %v3656
      %v3727 = vunpack.c.3.s8 %v3657
      %v3728 = vunpack.c.3.s8 %v3658
      %v3729 = vunpack.c.3.s8 %v3659
      %v3730 = vunpack.c.3.s8 %v3660
      %v3731 = vunpack.c.3.s8 %v3661
      %v3732 = vunpack.c.0.s8 %v3662
      %v3733 = vunpack.c.0.s8 %v3663
      %v3734 = vunpack.c.0.s8 %v3664
      %v3735 = vunpack.c.0.s8 %v3665
      %v3736 = vunpack.c.0.s8 %v3666
      %v3737 = vunpack.c.0.s8 %v3667
      %v3738 = vunpack.c.0.s8 %v3668
      %v3739 = vunpack.c.1.s8 %v3662
      %v3740 = vunpack.c.1.s8 %v3663
      %v3741 = vunpack.c.1.s8 %v3664
      %v3742 = vunpack.c.1.s8 %v3665
      %v3743 = vunpack.c.1.s8 %v3666
      %v3744 = vunpack.c.1.s8 %v3667
      %v3745 = vunpack.c.1.s8 %v3668
      %v3746 = vunpack.c.2.s8 %v3662
      %v3747 = vunpack.c.2.s8 %v3663
      %v3748 = vunpack.c.2.s8 %v3664
      %v3749 = vunpack.c.2.s8 %v3665
      %v3750 = vunpack.c.2.s8 %v3666
      %v3751 = vunpack.c.2.s8 %v3667
      %v3752 = vunpack.c.2.s8 %v3668
      %v3753 = vunpack.c.3.s8 %v3662
      %v3754 = vunpack.c.3.s8 %v3663
      %v3755 = vunpack.c.3.s8 %v3664
      %v3756 = vunpack.c.3.s8 %v3665
      %v3757 = vunpack.c.3.s8 %v3666
      %v3758 = vunpack.c.3.s8 %v3667
      %v3759 = vunpack.c.3.s8 %v3668
      %v3760 = vunpack.c.0.s8 %v3669
      %v3761 = vunpack.c.0.s8 %v3670
      %v3762 = vunpack.c.0.s8 %v3671
      %v3763 = vunpack.c.0.s8 %v3672
      %v3764 = vunpack.c.0.s8 %v3673
      %v3765 = vunpack.c.0.s8 %v3674
      %v3766 = vunpack.c.0.s8 %v3675
      %v3767 = vunpack.c.1.s8 %v3669
      %v3768 = vunpack.c.1.s8 %v3670
      %v3769 = vunpack.c.1.s8 %v3671
      %v3770 = vunpack.c.1.s8 %v3672
      %v3771 = vunpack.c.1.s8 %v3673
      %v3772 = vunpack.c.1.s8 %v3674
      %v3773 = vunpack.c.1.s8 %v3675
      %v3774 = vunpack.c.2.s8 %v3669
      %v3775 = vunpack.c.2.s8 %v3670
      %v3776 = vunpack.c.2.s8 %v3671
      %v3777 = vunpack.c.2.s8 %v3672
      %v3778 = vunpack.c.2.s8 %v3673
      %v3779 = vunpack.c.2.s8 %v3674
      %v3780 = vunpack.c.2.s8 %v3675
      %v3781 = vunpack.c.3.s8 %v3669
      %v3782 = vunpack.c.3.s8 %v3670
      %v3783 = vunpack.c.3.s8 %v3671
      %v3784 = vunpack.c.3.s8 %v3672
      %v3785 = vunpack.c.3.s8 %v3673
      %v3786 = vunpack.c.3.s8 %v3674
      %v3787 = vunpack.c.3.s8 %v3675
      %v3788 = vcvt.s32.f32 %v3676
      %v3789 = vcvt.s32.f32 %v3677
      %v3790 = vcvt.s32.f32 %v3678
      %v3791 = vcvt.s32.f32 %v3679
      %v3792 = vcvt.s32.f32 %v3680
      %v3793 = vcvt.s32.f32 %v3681
      %v3794 = vcvt.s32.f32 %v3682
      %v3795 = vcvt.s32.f32 %v3683
      %v3796 = vcvt.s32.f32 %v3684
      %v3797 = vcvt.s32.f32 %v3685
      %v3798 = vcvt.s32.f32 %v3686
      %v3799 = vcvt.s32.f32 %v3687
      %v3800 = vcvt.s32.f32 %v3688
      %v3801 = vcvt.s32.f32 %v3689
      %v3802 = vcvt.s32.f32 %v3690
      %v3803 = vcvt.s32.f32 %v3691
      %v3804 = vcvt.s32.f32 %v3692
      %v3805 = vcvt.s32.f32 %v3693
      %v3806 = vcvt.s32.f32 %v3694
      %v3807 = vcvt.s32.f32 %v3695
      %v3808 = vcvt.s32.f32 %v3696
      %v3809 = vcvt.s32.f32 %v3697
      %v3810 = vcvt.s32.f32 %v3698
      %v3811 = vcvt.s32.f32 %v3699
      %v3812 = vcvt.s32.f32 %v3700
      %v3813 = vcvt.s32.f32 %v3701
      %v3814 = vcvt.s32.f32 %v3702
      %v3815 = vcvt.s32.f32 %v3703
      %v3816 = vcvt.s32.f32 %v3704
      %v3817 = vcvt.s32.f32 %v3705
      %v3818 = vcvt.s32.f32 %v3706
      %v3819 = vcvt.s32.f32 %v3707
      %v3820 = vcvt.s32.f32 %v3708
      %v3821 = vcvt.s32.f32 %v3709
      %v3822 = vcvt.s32.f32 %v3710
      %v3823 = vcvt.s32.f32 %v3711
      %v3824 = vcvt.s32.f32 %v3712
      %v3825 = vcvt.s32.f32 %v3713
      %v3826 = vcvt.s32.f32 %v3714
      %v3827 = vcvt.s32.f32 %v3715
      %v3828 = vcvt.s32.f32 %v3716
      %v3829 = vcvt.s32.f32 %v3717
      %v3830 = vcvt.s32.f32 %v3718
      %v3831 = vcvt.s32.f32 %v3719
      %v3832 = vcvt.s32.f32 %v3720
      %v3833 = vcvt.s32.f32 %v3721
      %v3834 = vcvt.s32.f32 %v3722
      %v3835 = vcvt.s32.f32 %v3723
      %v3836 = vcvt.s32.f32 %v3724
      %v3837 = vcvt.s32.f32 %v3725
      %v3838 = vcvt.s32.f32 %v3726
      %v3839 = vcvt.s32.f32 %v3727
      %v3840 = vcvt.s32.f32 %v3728
      %v3841 = vcvt.s32.f32 %v3729
      %v3842 = vcvt.s32.f32 %v3730
      %v3843 = vcvt.s32.f32 %v3731
      %v3844 = vcvt.s32.f32 %v3732
      %v3845 = vcvt.s32.f32 %v3733
      %v3846 = vcvt.s32.f32 %v3734
      %v3847 = vcvt.s32.f32 %v3735
      %v3848 = vcvt.s32.f32 %v3736
      %v3849 = vcvt.s32.f32 %v3737
      %v3850 = vcvt.s32.f32 %v3738
      %v3851 = vcvt.s32.f32 %v3739
      %v3852 = vcvt.s32.f32 %v3740
      %v3853 = vcvt.s32.f32 %v3741
      %v3854 = vcvt.s32.f32 %v3742
      %v3855 = vcvt.s32.f32 %v3743
      %v3856 = vcvt.s32.f32 %v3744
      %v3857 = vcvt.s32.f32 %v3745
      %v3858 = vcvt.s32.f32 %v3746
      %v3859 = vcvt.s32.f32 %v3747
      %v3860 = vcvt.s32.f32 %v3748
      %v3861 = vcvt.s32.f32 %v3749
      %v3862 = vcvt.s32.f32 %v3750
      %v3863 = vcvt.s32.f32 %v3751
      %v3864 = vcvt.s32.f32 %v3752
      %v3865 = vcvt.s32.f32 %v3753
      %v3866 = vcvt.s32.f32 %v3754
      %v3867 = vcvt.s32.f32 %v3755
      %v3868 = vcvt.s32.f32 %v3756
      %v3869 = vcvt.s32.f32 %v3757
      %v3870 = vcvt.s32.f32 %v3758
      %v3871 = vcvt.s32.f32 %v3759
      %v3872 = vcvt.s32.f32 %v3760
      %v3873 = vcvt.s32.f32 %v3761
      %v3874 = vcvt.s32.f32 %v3762
      %v3875 = vcvt.s32.f32 %v3763
      %v3876 = vcvt.s32.f32 %v3764
      %v3877 = vcvt.s32.f32 %v3765
      %v3878 = vcvt.s32.f32 %v3766
      %v3879 = vcvt.s32.f32 %v3767
      %v3880 = vcvt.s32.f32 %v3768
      %v3881 = vcvt.s32.f32 %v3769
      %v3882 = vcvt.s32.f32 %v3770
      %v3883 = vcvt.s32.f32 %v3771
      %v3884 = vcvt.s32.f32 %v3772
      %v3885 = vcvt.s32.f32 %v3773
      %v3886 = vcvt.s32.f32 %v3774
      %v3887 = vcvt.s32.f32 %v3775
      %v3888 = vcvt.s32.f32 %v3776
      %v3889 = vcvt.s32.f32 %v3777
      %v3890 = vcvt.s32.f32 %v3778
      %v3891 = vcvt.s32.f32 %v3779
      %v3892 = vcvt.s32.f32 %v3780
      %v3893 = vcvt.s32.f32 %v3781
      %v3894 = vcvt.s32.f32 %v3782
      %v3895 = vcvt.s32.f32 %v3783
      %v3896 = vcvt.s32.f32 %v3784
      %v3897 = vcvt.s32.f32 %v3785
      %v3898 = vcvt.s32.f32 %v3786
      %v3899 = vcvt.s32.f32 %v3787
      %v3900 = vmul.f32 %v3788, %v430
      %v3901 = vmul.f32 %v3789, %v432
      %v3902 = vmul.f32 %v3790, %v591
      %v3903 = vmul.f32 %v3791, %v593
      %v3904 = vmul.f32 %v3792, %v752
      %v3905 = vmul.f32 %v3793, %v754
      %v3906 = vmul.f32 %v3794, %v913
      %v3907 = vmul.f32 %v3795, %v436
      %v3908 = vmul.f32 %v3796, %v438
      %v3909 = vmul.f32 %v3797, %v597
      %v3910 = vmul.f32 %v3798, %v599
      %v3911 = vmul.f32 %v3799, %v758
      %v3912 = vmul.f32 %v3800, %v760
      %v3913 = vmul.f32 %v3801, %v918
      %v3914 = vmul.f32 %v3802, %v442
      %v3915 = vmul.f32 %v3803, %v444
      %v3916 = vmul.f32 %v3804, %v603
      %v3917 = vmul.f32 %v3805, %v605
      %v3918 = vmul.f32 %v3806, %v764
      %v3919 = vmul.f32 %v3807, %v766
      %v3920 = vmul.f32 %v3808, %v923
      %v3921 = vmul.f32 %v3809, %v448
      %v3922 = vmul.f32 %v3810, %v450
      %v3923 = vmul.f32 %v3811, %v609
      %v3924 = vmul.f32 %v3812, %v611
      %v3925 = vmul.f32 %v3813, %v770
      %v3926 = vmul.f32 %v3814, %v772
      %v3927 = vmul.f32 %v3815, %v928
      %v3928 = vmul.f32 %v3816, %v454
      %v3929 = vmul.f32 %v3817, %v456
      %v3930 = vmul.f32 %v3818, %v615
      %v3931 = vmul.f32 %v3819, %v617
      %v3932 = vmul.f32 %v3820, %v776
      %v3933 = vmul.f32 %v3821, %v778
      %v3934 = vmul.f32 %v3822, %v933
      %v3935 = vmul.f32 %v3823, %v460
      %v3936 = vmul.f32 %v3824, %v462
      %v3937 = vmul.f32 %v3825, %v621
      %v3938 = vmul.f32 %v3826, %v623
      %v3939 = vmul.f32 %v3827, %v782
      %v3940 = vmul.f32 %v3828, %v784
      %v3941 = vmul.f32 %v3829, %v938
      %v3942 = vmul.f32 %v3830, %v466
      %v3943 = vmul.f32 %v3831, %v468
      %v3944 = vmul.f32 %v3832, %v627
      %v3945 = vmul.f32 %v3833, %v629
      %v3946 = vmul.f32 %v3834, %v788
      %v3947 = vmul.f32 %v3835, %v790
      %v3948 = vmul.f32 %v3836, %v943
      %v3949 = vmul.f32 %v3837, %v472
      %v3950 = vmul.f32 %v3838, %v474
      %v3951 = vmul.f32 %v3839, %v633
      %v3952 = vmul.f32 %v3840, %v635
      %v3953 = vmul.f32 %v3841, %v794
      %v3954 = vmul.f32 %v3842, %v796
      %v3955 = vmul.f32 %v3843, %v948
      %v3956 = vmul.f32 %v3844, %v478
      %v3957 = vmul.f32 %v3845, %v480
      %v3958 = vmul.f32 %v3846, %v639
      %v3959 = vmul.f32 %v3847, %v641
      %v3960 = vmul.f32 %v3848, %v800
      %v3961 = vmul.f32 %v3849, %v802
      %v3962 = vmul.f32 %v3850, %v953
      %v3963 = vmul.f32 %v3851, %v484
      %v3964 = vmul.f32 %v3852, %v486
      %v3965 = vmul.f32 %v3853, %v645
      %v3966 = vmul.f32 %v3854, %v647
      %v3967 = vmul.f32 %v3855, %v806
      %v3968 = vmul.f32 %v3856, %v808
      %v3969 = vmul.f32 %v3857, %v958
      %v3970 = vmul.f32 %v3858, %v490
      %v3971 = vmul.f32 %v3859, %v492
      %v3972 = vmul.f32 %v3860, %v651
      %v3973 = vmul.f32 %v3861, %v653
      %v3974 = vmul.f32 %v3862, %v812
      %v3975 = vmul.f32 %v3863, %v814
      %v3976 = vmul.f32 %v3864, %v963
      %v3977 = vmul.f32 %v3865, %v496
      %v3978 = vmul.f32 %v3866, %v498
      %v3979 = vmul.f32 %v3867, %v657
      %v3980 = vmul.f32 %v3868, %v659
      %v3981 = vmul.f32 %v3869, %v818
      %v3982 = vmul.f32 %v3870, %v820
      %v3983 = vmul.f32 %v3871, %v968
      %v3984 = vmul.f32 %v3872, %v502
      %v3985 = vmul.f32 %v3873, %v504
      %v3986 = vmul.f32 %v3874, %v663
      %v3987 = vmul.f32 %v3875, %v665
      %v3988 = vmul.f32 %v3876, %v824
      %v3989 = vmul.f32 %v3877, %v826
      %v3990 = vmul.f32 %v3878, %v973
      %v3991 = vmul.f32 %v3879, %v508
      %v3992 = vmul.f32 %v3880, %v510
      %v3993 = vmul.f32 %v3881, %v669
      %v3994 = vmul.f32 %v3882, %v671
      %v3995 = vmul.f32 %v3883, %v830
      %v3996 = vmul.f32 %v3884, %v832
      %v3997 = vmul.f32 %v3885, %v978
      %v3998 = vmul.f32 %v3886, %v514
      %v3999 = vmul.f32 %v3887, %v516
      %v4000 = vmul.f32 %v3888, %v675
      %v4001 = vmul.f32 %v3889, %v677
      %v4002 = vmul.f32 %v3890, %v836
      %v4003 = vmul.f32 %v3891, %v838
      %v4004 = vmul.f32 %v3892, %v983
      %v4005 = vmul.f32 %v3893, %v520
      %v4006 = vmul.f32 %v3894, %v522
      %v4007 = vmul.f32 %v3895, %v681
      %v4008 = vmul.f32 %v3896, %v683
      %v4009 = vmul.f32 %v3897, %v842
      %v4010 = vmul.f32 %v3898, %v844
      %v4011 = vmul.f32 %v3899, %v988
      %v4012 = vsub.f32 %v3900, %v2559
      %v4013 = vsub.f32 %v3901, %v2560
      %v4014 = vsub.f32 %v3902, %v2561
      %v4015 = vsub.f32 %v3903, %v2562
      %v4016 = vsub.f32 %v3904, %v2563
      %v4017 = vsub.f32 %v3905, %v2564
      %v4018 = vsub.f32 %v3906, %v2565
      %v4019 = vsub.f32 %v3907, %v2566
      %v4020 = vsub.f32 %v3908, %v2567
      %v4021 = vsub.f32 %v3909, %v2568
      %v4022 = vsub.f32 %v3910, %v2569
      %v4023 = vsub.f32 %v3911, %v2570
      %v4024 = vsub.f32 %v3912, %v2571
      %v4025 = vsub.f32 %v3913, %v2572
      %v4026 = vsub.f32 %v3914, %v2573
      %v4027 = vsub.f32 %v3915, %v2574
      %v4028 = vsub.f32 %v3916, %v2575
      %v4029 = vsub.f32 %v3917, %v2576
      %v4030 = vsub.f32 %v3918, %v2577
      %v4031 = vsub.f32 %v3919, %v2578
      %v4032 = vsub.f32 %v3920, %v2579
      %v4033 = vsub.f32 %v3921, %v2580
      %v4034 = vsub.f32 %v3922, %v2581
      %v4035 = vsub.f32 %v3923, %v2582
      %v4036 = vsub.f32 %v3924, %v2583
      %v4037 = vsub.f32 %v3925, %v2584
      %v4038 = vsub.f32 %v3926, %v2585
      %v4039 = vsub.f32 %v3927, %v2586
      %v4040 = vsub.f32 %v3928, %v2587
      %v4041 = vsub.f32 %v3929, %v2588
      %v4042 = vsub.f32 %v3930, %v2589
      %v4043 = vsub.f32 %v3931, %v2590
      %v4044 = vsub.f32 %v3932, %v2591
      %v4045 = vsub.f32 %v3933, %v2592
      %v4046 = vsub.f32 %v3934, %v2593
      %v4047 = vsub.f32 %v3935, %v2594
      %v4048 = vsub.f32 %v3936, %v2595
      %v4049 = vsub.f32 %v3937, %v2596
      %v4050 = vsub.f32 %v3938, %v2597
      %v4051 = vsub.f32 %v3939, %v2598
      %v4052 = vsub.f32 %v3940, %v2599
      %v4053 = vsub.f32 %v3941, %v2600
      %v4054 = vsub.f32 %v3942, %v2601
      %v4055 = vsub.f32 %v3943, %v2602
      %v4056 = vsub.f32 %v3944, %v2603
      %v4057 = vsub.f32 %v3945, %v2604
      %v4058 = vsub.f32 %v3946, %v2605
      %v4059 = vsub.f32 %v3947, %v2606
      %v4060 = vsub.f32 %v3948, %v2607
      %v4061 = vsub.f32 %v3949, %v2608
      %v4062 = vsub.f32 %v3950, %v2609
      %v4063 = vsub.f32 %v3951, %v2610
      %v4064 = vsub.f32 %v3952, %v2611
      %v4065 = vsub.f32 %v3953, %v2612
      %v4066 = vsub.f32 %v3954, %v2613
      %v4067 = vsub.f32 %v3955, %v2614
      %v4068 = vsub.f32 %v3956, %v2615
      %v4069 = vsub.f32 %v3957, %v2616
      %v4070 = vsub.f32 %v3958, %v2617
      %v4071 = vsub.f32 %v3959, %v2618
      %v4072 = vsub.f32 %v3960, %v2619
      %v4073 = vsub.f32 %v3961, %v2620
      %v4074 = vsub.f32 %v3962, %v2621
      %v4075 = vsub.f32 %v3963, %v2622
      %v4076 = vsub.f32 %v3964, %v2623
      %v4077 = vsub.f32 %v3965, %v2624
      %v4078 = vsub.f32 %v3966, %v2625
      %v4079 = vsub.f32 %v3967, %v2626
      %v4080 = vsub.f32 %v3968, %v2627
      %v4081 = vsub.f32 %v3969, %v2628
      %v4082 = vsub.f32 %v3970, %v2629
      %v4083 = vsub.f32 %v3971, %v2630
      %v4084 = vsub.f32 %v3972, %v2631
      %v4085 = vsub.f32 %v3973, %v2632
      %v4086 = vsub.f32 %v3974, %v2633
      %v4087 = vsub.f32 %v3975, %v2634
      %v4088 = vsub.f32 %v3976, %v2635
      %v4089 = vsub.f32 %v3977, %v2636
      %v4090 = vsub.f32 %v3978, %v2637
      %v4091 = vsub.f32 %v3979, %v2638
      %v4092 = vsub.f32 %v3980, %v2639
      %v4093 = vsub.f32 %v3981, %v2640
      %v4094 = vsub.f32 %v3982, %v2641
      %v4095 = vsub.f32 %v3983, %v2642
      %v4096 = vsub.f32 %v3984, %v2643
      %v4097 = vsub.f32 %v3985, %v2644
      %v4098 = vsub.f32 %v3986, %v2645
      %v4099 = vsub.f32 %v3987, %v2646
      %v4100 = vsub.f32 %v3988, %v2647
      %v4101 = vsub.f32 %v3989, %v2648
      %v4102 = vsub.f32 %v3990, %v2649
      %v4103 = vsub.f32 %v3991, %v2650
      %v4104 = vsub.f32 %v3992, %v2651
      %v4105 = vsub.f32 %v3993, %v2652
      %v4106 = vsub.f32 %v3994, %v2653
      %v4107 = vsub.f32 %v3995, %v2654
      %v4108 = vsub.f32 %v3996, %v2655
      %v4109 = vsub.f32 %v3997, %v2656
      %v4110 = vsub.f32 %v3998, %v2657
      %v4111 = vsub.f32 %v3999, %v2658
      %v4112 = vsub.f32 %v4000, %v2659
      %v4113 = vsub.f32 %v4001, %v2660
      %v4114 = vsub.f32 %v4002, %v2661
      %v4115 = vsub.f32 %v4003, %v2662
      %v4116 = vsub.f32 %v4004, %v2663
      %v4117 = vsub.f32 %v4005, %v2664
      %v4118 = vsub.f32 %v4006, %v2665
      %v4119 = vsub.f32 %v4007, %v2666
      %v4120 = vsub.f32 %v4008, %v2667
      %v4121 = vsub.f32 %v4009, %v2668
      %v4122 = vsub.f32 %v4010, %v2669
      %v4123 = vsub.f32 %v4011, %v2670
      %v4124 = vadd.f32 %v4012, %v4013
      %v4125 = vadd.f32 %v4124, %v4014
      %v4126 = vadd.f32 %v4125, %v4015
      %v4127 = vadd.f32 %v4126, %v4016
      %v4128 = vadd.f32 %v4127, %v4017
      %vm4129 = vcmask 130048
      %v4130 = vsel %vm4129, %v4018, 0.0
      %v4131 = vadd.f32 %v4128, %v4130
      %4132 = vadd.xlane.f32.xlu0 %v4131
      %v4133 = vpop.xlane.xlu0 %4132
      %v4134 = vadd.f32 %v4019, %v4020
      %v4135 = vadd.f32 %v4134, %v4021
      %v4136 = vadd.f32 %v4135, %v4022
      %v4137 = vadd.f32 %v4136, %v4023
      %v4138 = vadd.f32 %v4137, %v4024
      %v4139 = vsel %vm4129, %v4025, 0.0
      %v4140 = vadd.f32 %v4138, %v4139
      %4141 = vadd.xlane.f32.xlu0 %v4140
      %v4142 = vpop.xlane.xlu0 %4141
      %v4143 = vadd.f32 %v4026, %v4027
      %v4144 = vadd.f32 %v4143, %v4028
      %v4145 = vadd.f32 %v4144, %v4029
      %v4146 = vadd.f32 %v4145, %v4030
      %v4147 = vadd.f32 %v4146, %v4031
      %v4148 = vsel %vm4129, %v4032, 0.0
      %v4149 = vadd.f32 %v4147, %v4148
      %4150 = vadd.xlane.f32.xlu0 %v4149
      %v4151 = vpop.xlane.xlu0 %4150
      %v4152 = vadd.f32 %v4033, %v4034
      %v4153 = vadd.f32 %v4152, %v4035
      %v4154 = vadd.f32 %v4153, %v4036
      %v4155 = vadd.f32 %v4154, %v4037
      %v4156 = vadd.f32 %v4155, %v4038
      %v4157 = vsel %vm4129, %v4039, 0.0
      %v4158 = vadd.f32 %v4156, %v4157
      %4159 = vadd.xlane.f32.xlu0 %v4158
      %v4160 = vpop.xlane.xlu0 %4159
      %v4161 = vadd.f32 %v4040, %v4041
      %v4162 = vadd.f32 %v4161, %v4042
      %v4163 = vadd.f32 %v4162, %v4043
      %v4164 = vadd.f32 %v4163, %v4044
      %v4165 = vadd.f32 %v4164, %v4045
      %v4166 = vsel %vm4129, %v4046, 0.0
      %v4167 = vadd.f32 %v4165, %v4166
      %4168 = vadd.xlane.f32.xlu0 %v4167
      %v4169 = vpop.xlane.xlu0 %4168
      %v4170 = vadd.f32 %v4047, %v4048
      %v4171 = vadd.f32 %v4170, %v4049
      %v4172 = vadd.f32 %v4171, %v4050
      %v4173 = vadd.f32 %v4172, %v4051
      %v4174 = vadd.f32 %v4173, %v4052
      %v4175 = vsel %vm4129, %v4053, 0.0
      %v4176 = vadd.f32 %v4174, %v4175
      %4177 = vadd.xlane.f32.xlu0 %v4176
      %v4178 = vpop.xlane.xlu0 %4177
      %v4179 = vadd.f32 %v4054, %v4055
      %v4180 = vadd.f32 %v4179, %v4056
      %v4181 = vadd.f32 %v4180, %v4057
      %v4182 = vadd.f32 %v4181, %v4058
      %v4183 = vadd.f32 %v4182, %v4059
      %v4184 = vsel %vm4129, %v4060, 0.0
      %v4185 = vadd.f32 %v4183, %v4184
      %4186 = vadd.xlane.f32.xlu0 %v4185
      %v4187 = vpop.xlane.xlu0 %4186
      %v4188 = vadd.f32 %v4061, %v4062
      %v4189 = vadd.f32 %v4188, %v4063
      %v4190 = vadd.f32 %v4189, %v4064
      %v4191 = vadd.f32 %v4190, %v4065
      %v4192 = vadd.f32 %v4191, %v4066
      %v4193 = vsel %vm4129, %v4067, 0.0
      %v4194 = vadd.f32 %v4192, %v4193
      %4195 = vadd.xlane.f32.xlu0 %v4194
      %v4196 = vpop.xlane.xlu0 %4195
      %v4197 = vadd.f32 %v4068, %v4069
      %v4198 = vadd.f32 %v4197, %v4070
      %v4199 = vadd.f32 %v4198, %v4071
      %v4200 = vadd.f32 %v4199, %v4072
      %v4201 = vadd.f32 %v4200, %v4073
      %v4202 = vsel %vm4129, %v4074, 0.0
      %v4203 = vadd.f32 %v4201, %v4202
      %4204 = vadd.xlane.f32.xlu0 %v4203
      %v4205 = vpop.xlane.xlu0 %4204
      %v4206 = vadd.f32 %v4075, %v4076
      %v4207 = vadd.f32 %v4206, %v4077
      %v4208 = vadd.f32 %v4207, %v4078
      %v4209 = vadd.f32 %v4208, %v4079
      %v4210 = vadd.f32 %v4209, %v4080
      %v4211 = vsel %vm4129, %v4081, 0.0
      %v4212 = vadd.f32 %v4210, %v4211
      %4213 = vadd.xlane.f32.xlu0 %v4212
      %v4214 = vpop.xlane.xlu0 %4213
      %v4215 = vadd.f32 %v4082, %v4083
      %v4216 = vadd.f32 %v4215, %v4084
      %v4217 = vadd.f32 %v4216, %v4085
      %v4218 = vadd.f32 %v4217, %v4086
      %v4219 = vadd.f32 %v4218, %v4087
      %v4220 = vsel %vm4129, %v4088, 0.0
      %v4221 = vadd.f32 %v4219, %v4220
      %4222 = vadd.xlane.f32.xlu0 %v4221
      %v4223 = vpop.xlane.xlu0 %4222
      %v4224 = vadd.f32 %v4089, %v4090
      %v4225 = vadd.f32 %v4224, %v4091
      %v4226 = vadd.f32 %v4225, %v4092
      %v4227 = vadd.f32 %v4226, %v4093
      %v4228 = vadd.f32 %v4227, %v4094
      %v4229 = vsel %vm4129, %v4095, 0.0
      %v4230 = vadd.f32 %v4228, %v4229
      %4231 = vadd.xlane.f32.xlu0 %v4230
      %v4232 = vpop.xlane.xlu0 %4231
      %v4233 = vadd.f32 %v4096, %v4097
      %v4234 = vadd.f32 %v4233, %v4098
      %v4235 = vadd.f32 %v4234, %v4099
      %v4236 = vadd.f32 %v4235, %v4100
      %v4237 = vadd.f32 %v4236, %v4101
      %v4238 = vsel %vm4129, %v4102, 0.0
      %v4239 = vadd.f32 %v4237, %v4238
      %4240 = vadd.xlane.f32.xlu0 %v4239
      %v4241 = vpop.xlane.xlu0 %4240
      %v4242 = vadd.f32 %v4103, %v4104
      %v4243 = vadd.f32 %v4242, %v4105
      %v4244 = vadd.f32 %v4243, %v4106
      %v4245 = vadd.f32 %v4244, %v4107
      %v4246 = vadd.f32 %v4245, %v4108
      %v4247 = vsel %vm4129, %v4109, 0.0
      %v4248 = vadd.f32 %v4246, %v4247
      %4249 = vadd.xlane.f32.xlu0 %v4248
      %v4250 = vpop.xlane.xlu0 %4249
      %v4251 = vadd.f32 %v4110, %v4111
      %v4252 = vadd.f32 %v4251, %v4112
      %v4253 = vadd.f32 %v4252, %v4113
      %v4254 = vadd.f32 %v4253, %v4114
      %v4255 = vadd.f32 %v4254, %v4115
      %v4256 = vsel %vm4129, %v4116, 0.0
      %v4257 = vadd.f32 %v4255, %v4256
      %4258 = vadd.xlane.f32.xlu0 %v4257
      %v4259 = vpop.xlane.xlu0 %4258
      %v4260 = vadd.f32 %v4117, %v4118
      %v4261 = vadd.f32 %v4260, %v4119
      %v4262 = vadd.f32 %v4261, %v4120
      %v4263 = vadd.f32 %v4262, %v4121
      %v4264 = vadd.f32 %v4263, %v4122
      %v4265 = vsel %vm4129, %v4123, 0.0
      %v4266 = vadd.f32 %v4264, %v4265
      %4267 = vadd.xlane.f32.xlu0 %v4266
      %v4268 = vpop.xlane.xlu0 %4267
      %vm4269 = vcmask 7168
      %4270 = vst.msk [vmem:[%s240] sm:$0xff] %vm4269, %v4133
      %4271 = vst.msk [vmem:[%s240 + $0x8] sm:$0xff] %vm4269, %v4142
      %4272 = vst.msk [vmem:[%s240 + $0x10] sm:$0xff] %vm4269, %v4151
      %4273 = vst.msk [vmem:[%s240 + $0x18] sm:$0xff] %vm4269, %v4160
      %4274 = vst.msk [vmem:[%s240 + $0x20] sm:$0xff] %vm4269, %v4169
      %4275 = vst.msk [vmem:[%s240 + $0x28] sm:$0xff] %vm4269, %v4178
      %4276 = vst.msk [vmem:[%s240 + $0x30] sm:$0xff] %vm4269, %v4187
      %4277 = vst.msk [vmem:[%s240 + $0x38] sm:$0xff] %vm4269, %v4196
      %4278 = vst.msk [vmem:[%s240 + $0x40] sm:$0xff] %vm4269, %v4205
      %4279 = vst.msk [vmem:[%s240 + $0x48] sm:$0xff] %vm4269, %v4214
      %4280 = vst.msk [vmem:[%s240 + $0x50] sm:$0xff] %vm4269, %v4223
      %4281 = vst.msk [vmem:[%s240 + $0x58] sm:$0xff] %vm4269, %v4232
      %4282 = vst.msk [vmem:[%s240 + $0x60] sm:$0xff] %vm4269, %v4241
      %4283 = vst.msk [vmem:[%s240 + $0x68] sm:$0xff] %vm4269, %v4250
      %4284 = vst.msk [vmem:[%s240 + $0x70] sm:$0xff] %vm4269, %v4259
      %4285 = vst.msk [vmem:[%s240 + $0x78] sm:$0xff] %vm4269, %v4268
      %s4286 = smul.u32 16, %s16
      %p4287 = scmp.lt.s32.totalorder %s4286, 31
      %s4288 = scalar_select %p4287, %s4286, 31
      %s4289 = smul.addr %s4288, 7
      %s4290 = smul.addr %s4289, 4
      %s4291 = scalar_lea.vmem %s3, %s4290
      %s4292 = smul.u32 16, %s16
      %p4293 = scmp.lt.s32.totalorder %s4292, 31
      %s4294 = scalar_select %p4293, %s4292, 31
      %s4295 = smul.addr %s4294, 8
      %s4296 = scalar_lea.vmem %s4, %s4295
      // Predicated region
      $region33: #{tpu_custom_call.1} parent=31 // pred_check
        %p4297 = pneg %p107
      $region34: #{tpu_custom_call.1} parent=31 // pred_check_branch
        %4299 = sbr.rel (%p4297) target = $region36
      $region35: #{tpu_custom_call.1} parent=31 // pred_region
        %s4300 = smul.u32 16, %s16
      $region36: #{tpu_custom_call.1} parent=31 // pred_fallthru
        _
      // Predicated region
      $region37: #{tpu_custom_call.1} parent=31 // pred_check
        %p4301 = pneg %p133
      $region38: #{tpu_custom_call.1} parent=31 // pred_check_branch
        %4303 = sbr.rel (%p4301) target = $region40
      $region39: #{tpu_custom_call.1} parent=31 // pred_region
        %s4304 = smul.u32 16, %s16
      $region40: #{tpu_custom_call.1} parent=31 // pred_fallthru
        _
    $region32: #{tpu_custom_call.1} parent=5 // pred_fallthru
      _
    %p4305 = scmp.le.s32.totalorder 2, %s11
    // Predicated region
    $region41: #{tpu_custom_call.1} parent=5 // pred_check
      %p4306 = pneg %p4305
    $region42: #{tpu_custom_call.1} parent=5 // pred_check_branch
      %4308 = sbr.rel (%p4306) target = $region44
    $region43: #{tpu_custom_call.1} parent=5 // pred_region
      %s4309 = ssub.s32 %s11, 2
      // Predicated region
      $region45: #{tpu_custom_call.1} parent=43 // pred_check
        %p4310 = pneg %p113
      $region46: #{tpu_custom_call.1} parent=43 // pred_check_branch
        %4312 = sbr.rel (%p4310) target = $region48
      $region47: #{tpu_custom_call.1} parent=43 // pred_region
        %s4313 = smul.u32 16, %s17
        %p4314 = scmp.lt.s32.totalorder %s4313, 31
        %s4315 = scalar_select %p4314, %s4313, 31
        %s4316 = smul.addr %s4315, 7
        %s4317 = smul.addr %s4316, 4
        %s4318 = scalar_lea.vmem %s3, %s4317
      $region48: #{tpu_custom_call.1} parent=43 // pred_fallthru
        _
      // Predicated region
      $region49: #{tpu_custom_call.1} parent=43 // pred_check
        %p4319 = pneg %p139
      $region50: #{tpu_custom_call.1} parent=43 // pred_check_branch
        %4321 = sbr.rel (%p4319) target = $region52
      $region51: #{tpu_custom_call.1} parent=43 // pred_region
        %s4322 = smul.u32 16, %s17
        %p4323 = scmp.lt.s32.totalorder %s4322, 31
        %s4324 = scalar_select %p4323, %s4322, 31
        %s4325 = smul.addr %s4324, 8
        %s4326 = scalar_lea.vmem %s4, %s4325
      $region52: #{tpu_custom_call.1} parent=43 // pred_fallthru
        _
    $region44: #{tpu_custom_call.1} parent=5 // pred_fallthru
      _
  $region6: #{tpu_custom_call.1} parent=0 // loop_footer
    %s15 = sadd.s32 1, %s11
  $region7: #{tpu_custom_call.1} parent=0 // loop_footer_branch
    %10 = sbr.rel target = $region3
  $region8: #{tpu_custom_call.1} parent=0 // loop_exit
    _

</llo_original>
